<compile_context>
chip_gen: v7x
topology: tpu7x:2x2x1
jax: 0.10.0
libtpu: 0.0.40
codegen_flags: <defaults>
</compile_context>

<pallas_src>
import functools
from typing import NamedTuple

import jax
import jax.numpy as jnp
from jax import lax
from jax.experimental import pallas as pl
from jax.experimental.pallas import tpu as pltpu


LANE = 128  # TPU lane width


class RNNParams(NamedTuple):
    embed_w: jax.Array   # (V, E)       f32 embedding table
    wcat: jax.Array      # (L, 2P, G)   [W_ih^T ; W_hh^T], tight gates, pre-scaled
    b: jax.Array         # (L, 1, G)    f32, b_ih + b_hh, sigmoid entries pre-scaled
    fcw: jax.Array       # (P, Vp)      pre-transposed, padded
    fcb: jax.Array       # (1, Vp)      f32


def _pack_layer_w(w, p, g_pad, scale):
    """torch (4H, d_in) -> (p, g_pad): transpose, 0.5-scale sigmoid cols, zero-pad."""
    w_t = jnp.transpose(w) * scale[None, :]          # (d_in, 4H)
    return jnp.pad(w_t, ((0, p - w_t.shape[0]), (0, g_pad - w_t.shape[1])))


def pack_params(embed_w, lstm_params, fc_w, fc_b, *, compute_dtype=jnp.bfloat16):
    """One-time parameter prep: transpose, fold biases, tight gate pad, bf16 cast."""
    hidden = lstm_params[0][1].shape[1]          # w_hh: (4H, H)
    embed_dim = lstm_params[0][0].shape[1]       # w_ih_l0: (4H, E)
    p = LANE * pl.cdiv(max(embed_dim, hidden), LANE)     # feature pad width
    g_pad = LANE * pl.cdiv(4 * hidden, LANE)             # tight 4H gate pad
    assert g_pad >= p, "TODO(synk): generalize packing for embed_dim >> 4*hidden"

    # 0.5 on sigmoid gates (i, f, o), 1.0 on the tanh gate (g).  Zero padding is
    # applied AFTER scaling (and scaling/cast keep zeros zero), preserving the
    # inert-padding invariant.
    scale = jnp.where(jnp.arange(4 * hidden) // hidden == 2, 1.0, 0.5
                      ).astype(jnp.float32)

    wcat_l, b_l = [], []
    for (w_ih, w_hh, b_ih, b_hh) in lstm_params:
        wih = _pack_layer_w(w_ih, p, g_pad, scale)       # rows 0:P   = W_ih^T
        whh = _pack_layer_w(w_hh, p, g_pad, scale)       # rows P:2P  = W_hh^T
        wcat_l.append(jnp.concatenate([wih, whh], axis=0))
        b = (b_ih + b_hh) * scale
        b_l.append(jnp.pad(b, (0, g_pad - 4 * hidden)).reshape(1, g_pad))

    vocab, hidden_fc = fc_w.shape
    v_pad = LANE * pl.cdiv(vocab, LANE)
    fcw = jnp.pad(jnp.transpose(fc_w), ((0, p - hidden_fc), (0, v_pad - vocab)))
    fcb = jnp.pad(fc_b, (0, v_pad - vocab)).reshape(1, v_pad)

    return RNNParams(
        embed_w=embed_w,
        wcat=jnp.stack(wcat_l).astype(compute_dtype),
        b=jnp.stack(b_l).astype(jnp.float32),
        fcw=fcw.astype(compute_dtype),
        fcb=fcb.astype(jnp.float32))


# ---------------------------------------------------------------------------
# Fused kernel: x (T_pad, P) -> logits (T_pad, V_pad)
# PyTorch gate order i, f, g, o, packed tightly in g_pad lanes.
# ---------------------------------------------------------------------------
def _make_fused_kernel(t_real, t_pad, num_layers, hidden, p, g_pad):
    f32 = jnp.float32

    def kernel(x_ref, wcat_ref, b_ref, fcw_ref, fcb_ref, o_ref,
               seq_scr, xproj_scr):
        w_dtype = wcat_ref.dtype

        # Constant select vectors for the single-tanh gate trick:
        #   sigma(x) = 0.5 * tanh(x/2) + 0.5  on i/f/o lanes (weights pre-scaled
        #   by 0.5), plain tanh on g lanes.  Computed once, loop-invariant.
        lane = lax.broadcasted_iota(jnp.int32, (1, g_pad), 1)
        is_g = (lane >= 2 * hidden) & (lane < 3 * hidden)
        act_a = jnp.where(is_g, 1.0, 0.5)
        act_b = jnp.where(is_g, 0.0, 0.5)

        # Pad rows of the resident sequence buffer must be deterministic (they
        # feed the final matmul and are sliced off by the wrapper).
        seq_scr[...] = jnp.zeros_like(seq_scr)

        # Hoisted layer-0 input projection for ALL timesteps: one MXU matmul.
        xproj_scr[...] = (
            jnp.dot(x_ref[...], wcat_ref[0, pl.ds(0, p), :],
                    preferred_element_type=f32)
            + b_ref[0])

        def cell(gates, c):
            # gates: (1, g_pad) pre-scaled pre-activations (f32).
            s = jnp.tanh(gates)                       # ONE EUP call for all gates
            act = act_a * s + act_b                   # i,f,o -> sigmoid; g -> tanh
            # Realign 32-lane gate chunks to lanes 0:hidden with XLU rolls.
            i_g = act[:, :p]
            f_g = pltpu.roll(act, g_pad - 1 * hidden, axis=1)[:, :p]
            g_g = pltpu.roll(act, g_pad - 2 * hidden, axis=1)[:, :p]
            o_g = pltpu.roll(act, g_pad - 3 * hidden, axis=1)[:, :p]
            c_new = f_g * c + i_g * g_g               # lanes >= hidden: bounded,
            h_new = o_g * jnp.tanh(c_new)             # inert garbage (zero W rows)
            return h_new, c_new

        h = [jnp.zeros((1, p), f32) for _ in range(num_layers)]
        c = [jnp.zeros((1, p), f32) for _ in range(num_layers)]

        # Layer wavefront over wave steps s: layer l handles time t = s - l.
        # Within a wave step every active layer reads only PREVIOUS-step values
        # (h_prev), so the bodies are independent and can overlap on the MXU.
        for s in range(t_real + num_layers - 1):
            h_prev = list(h)
            for l in range(num_layers):
                t = s - l
                if not (0 <= t < t_real):
                    continue
                if l == 0:
                    gates = (xproj_scr[pl.ds(t, 1), :]
                             + jnp.dot(h_prev[0].astype(w_dtype),
                                       wcat_ref[0, pl.ds(p, p), :],
                                       preferred_element_type=f32))
                else:
                    # Fold [x_t ; h_{t-1}] @ [W_ih ; W_hh] into one matmul.
                    lhs = jnp.concatenate(
                        [h_prev[l - 1].astype(w_dtype),
                         h_prev[l].astype(w_dtype)], axis=1)        # (1, 2P)
                    gates = (jnp.dot(lhs, wcat_ref[l],
                                     preferred_element_type=f32)
                             + b_ref[l])
                h[l], c[l] = cell(gates, c[l])
                if l == num_layers - 1:
                    seq_scr[pl.ds(t, 1), :] = h[l]

        # Final Linear over the whole (padded) sequence in one matmul.
        o_ref[...] = (jnp.dot(seq_scr[...].astype(w_dtype), fcw_ref[...],
                              preferred_element_type=f32)
                      + fcb_ref[...])

    return kernel


# ---------------------------------------------------------------------------
# Full forward, matching RNN.forward(features, captions)
# ---------------------------------------------------------------------------
def rnn_forward(features, captions, params: RNNParams, *, vocab_size, hidden_size):
    del captions  # unused in the reference forward
    # Dropout(0.5): eval-mode identity.
    # TODO(synk): train-mode dropout mask would need an explicit PRNG seed.
    num_layers = params.wcat.shape[0]
    p = params.wcat.shape[1] // 2
    g_pad = params.wcat.shape[2]
    v_pad = params.fcw.shape[1]
    embed_dim = params.embed_w.shape[1]
    w_dtype = params.wcat.dtype
    seq = features.shape[0]
    t_real = seq + 1
    t_pad = 8 * pl.cdiv(t_real, 8)

    emb = jnp.take(params.embed_w, features, axis=0)                 # (S, E)
    # torch.cat type-promotes the integer index row to float.
    x = jnp.concatenate(
        [features[None, :].astype(jnp.float32), emb], axis=0)        # (S+1, E)
    x = jnp.pad(x, ((0, t_pad - t_real), (0, p - embed_dim)))        # lane pad
    x = x.astype(w_dtype)

    out = pl.pallas_call(
        _make_fused_kernel(t_real, t_pad, num_layers, hidden_size, p, g_pad),
        out_shape=jax.ShapeDtypeStruct((t_pad, v_pad), jnp.float32),
        grid=(1,),
        in_specs=[
            pl.BlockSpec((t_pad, p), lambda i: (0, 0)),
            pl.BlockSpec(params.wcat.shape, lambda i: (0, 0, 0)),
            pl.BlockSpec(params.b.shape, lambda i: (0, 0, 0)),
            pl.BlockSpec((p, v_pad), lambda i: (0, 0)),
            pl.BlockSpec((1, v_pad), lambda i: (0, 0)),
        ],
        out_specs=pl.BlockSpec((t_pad, v_pad), lambda i: (0, 0)),
        scratch_shapes=[
            pltpu.VMEM((t_pad, p), jnp.float32),        # final-layer hidden seq
            pltpu.VMEM((t_pad, g_pad), jnp.float32),    # layer-0 input proj
        ],
        compiler_params=pltpu.CompilerParams(
            dimension_semantics=("arbitrary",)),
    )(x, params.wcat, params.b, params.fcw, params.fcb)
    return out[:t_real, :vocab_size]


# ---------------------------------------------------------------------------
# Pure-JAX reference (for numerical validation)
# ---------------------------------------------------------------------------
def rnn_reference(features, embed_w, lstm_params, fc_w, fc_b):
    emb = jnp.take(embed_w, features, axis=0)
    h_seq = jnp.concatenate(
        [features[None, :].astype(jnp.float32), emb], axis=0)
    for (w_ih, w_hh, b_ih, b_hh) in lstm_params:
        hidden = w_hh.shape[1]

        def step(carry, x_t):
            h, c = carry
            gates = x_t @ w_ih.T + h @ w_hh.T + b_ih + b_hh
            i = jax.nn.sigmoid(gates[0 * hidden:1 * hidden])
            f = jax.nn.sigmoid(gates[1 * hidden:2 * hidden])
            g = jnp.tanh(gates[2 * hidden:3 * hidden])
            o = jax.nn.sigmoid(gates[3 * hidden:4 * hidden])
            c = f * c + i * g
            h = o * jnp.tanh(c)
            return (h, c), h

        (_, _), h_seq = lax.scan(
            step, (jnp.zeros(hidden), jnp.zeros(hidden)), h_seq)
    return h_seq @ fc_w.T + fc_b


if __name__ == "__main__":
    EMBED, HIDDEN, VOCAB, NUM_LAYERS = 16, 32, 64, 2
    SEQ = EMBED          # required by the cat() in the reference forward
    CAP_LEN = 8

    key = jax.random.PRNGKey(0)
    keys = jax.random.split(key, 4 * NUM_LAYERS + 5)

    # Embedding ~ N(0, 1) (PyTorch default)
    embed_w = jax.random.normal(keys[0], (VOCAB, EMBED), jnp.float32)

    # LSTM params, PyTorch layout: w_ih (4H, D_in), w_hh (4H, H), biases (4H,)
    bound = 1.0 / (HIDDEN ** 0.5)
    lstm_params = []
    k = 1
    for layer in range(NUM_LAYERS):
        d_in = EMBED if layer == 0 else HIDDEN
        w_ih = jax.random.uniform(keys[k], (4 * HIDDEN, d_in), jnp.float32,
                                  -bound, bound); k += 1
        w_hh = jax.random.uniform(keys[k], (4 * HIDDEN, HIDDEN), jnp.float32,
                                  -bound, bound); k += 1
        b_ih = jax.random.uniform(keys[k], (4 * HIDDEN,), jnp.float32,
                                  -bound, bound); k += 1
        b_hh = jax.random.uniform(keys[k], (4 * HIDDEN,), jnp.float32,
                                  -bound, bound); k += 1
        lstm_params.append((w_ih, w_hh, b_ih, b_hh))

    fc_bound = 1.0 / (HIDDEN ** 0.5)
    fc_w = jax.random.uniform(keys[k], (VOCAB, HIDDEN), jnp.float32,
                              -fc_bound, fc_bound); k += 1
    fc_b = jax.random.uniform(keys[k], (VOCAB,), jnp.float32,
                              -fc_bound, fc_bound); k += 1

    features = jax.random.randint(keys[k], (SEQ,), 0, VOCAB, jnp.int32); k += 1
    captions = jax.random.randint(keys[k], (CAP_LEN,), 0, VOCAB, jnp.int32)

    # One-time parameter packing (transpose / pad / scale / fold out of hot path).
    packed_f32 = pack_params(embed_w, lstm_params, fc_w, fc_b,
                             compute_dtype=jnp.float32)
    packed_bf16 = pack_params(embed_w, lstm_params, fc_w, fc_b,
                              compute_dtype=jnp.bfloat16)

    fwd = jax.jit(functools.partial(rnn_forward, vocab_size=VOCAB,
                                    hidden_size=HIDDEN))

    ref = rnn_reference(features, embed_w, lstm_params, fc_w, fc_b)

    # Strict-precision variant (f32 weights): validates exact module semantics.
    out_f32 = jax.block_until_ready(fwd(features, captions, packed_f32))
    assert out_f32.shape == (SEQ + 1, VOCAB), out_f32.shape
    assert out_f32.dtype == jnp.float32
    err_f32 = float(jnp.max(jnp.abs(out_f32 - ref)))
    assert jnp.allclose(out_f32, ref, rtol=1e-3, atol=1e-3), \
        f"f32 max abs err {err_f32}"

    # Fast variant (bf16 weights / matmul operands, f32 accumulation): the
    # T-step recurrence amplifies bf16 rounding, so validate at a loose
    # tolerance that still catches structural bugs (gate order, rolls, ...).
    out_bf16 = jax.block_until_ready(fwd(features, captions, packed_bf16))
    assert out_bf16.shape == (SEQ + 1, VOCAB), out_bf16.shape
    assert out_bf16.dtype == jnp.float32
    err_bf16 = float(jnp.max(jnp.abs(out_bf16 - ref)))
    assert jnp.allclose(out_bf16, ref, rtol=1e-1, atol=1e-1), \
        f"bf16 max abs err {err_bf16}"

    print("KERNEL_OK")
</pallas_src>

<mosaic_0001>
module attributes {stable_mosaic.version = 11 : i64} {
  func.func @kernel(%arg0: i32, %arg1: memref<24x128xf32, #tpu.memory_space<vmem>>, %arg2: memref<2x256x128xf32, #tpu.memory_space<vmem>>, %arg3: memref<2x1x128xf32, #tpu.memory_space<vmem>>, %arg4: memref<128x128xf32, #tpu.memory_space<vmem>>, %arg5: memref<1x128xf32, #tpu.memory_space<vmem>>, %arg6: memref<24x128xf32, #tpu.memory_space<vmem>>, %arg7: memref<24x128xf32, #tpu.memory_space<vmem>>, %arg8: memref<24x128xf32, #tpu.memory_space<vmem>>) attributes {dimension_semantics = [#tpu.dimension_semantics<arbitrary>], iteration_bounds = array<i64: 1>, scalar_prefetch = 0 : i64, scratch_operands = 2 : i64, tpu.core_type = #tpu.core_type<tc>, window_params = [{pipeline_mode = #tpu.pipeline_mode<synchronous>, transform_indices = @transform_0, window_bounds = array<i64: 24, 128>}, {pipeline_mode = #tpu.pipeline_mode<synchronous>, transform_indices = @transform_1, window_bounds = array<i64: 2, 256, 128>}, {pipeline_mode = #tpu.pipeline_mode<synchronous>, transform_indices = @transform_2, window_bounds = array<i64: 2, 1, 128>}, {pipeline_mode = #tpu.pipeline_mode<synchronous>, transform_indices = @transform_3, window_bounds = array<i64: 128, 128>}, {pipeline_mode = #tpu.pipeline_mode<synchronous>, transform_indices = @transform_4, window_bounds = array<i64: 1, 128>}, {pipeline_mode = #tpu.pipeline_mode<synchronous>, transform_indices = @transform_5, window_bounds = array<i64: 24, 128>}]} {
    %0 = tpu.iota {dimensions = array<i32: 1>} : vector<1x128xi32>
    %c64_i32 = arith.constant 64 : i32
    %1 = vector.broadcast %c64_i32 : i32 to vector<1x128xi32>
    %2 = arith.cmpi sge, %0, %1 : vector<1x128xi32>
    %c96_i32 = arith.constant 96 : i32
    %3 = vector.broadcast %c96_i32 : i32 to vector<1x128xi32>
    %4 = arith.cmpi slt, %0, %3 : vector<1x128xi32>
    %5 = arith.andi %2, %4 : vector<1x128xi1>
    %cst = arith.constant 1.000000e+00 : f32
    %cst_0 = arith.constant 5.000000e-01 : f32
    %6 = vector.broadcast %cst : f32 to vector<1x128xf32>
    %7 = vector.broadcast %cst_0 : f32 to vector<1x128xf32>
    %8 = arith.select %5, %6, %7 : vector<1x128xi1>, vector<1x128xf32>
    %cst_1 = arith.constant 0.000000e+00 : f32
    %cst_2 = arith.constant 5.000000e-01 : f32
    %9 = vector.broadcast %cst_1 : f32 to vector<1x128xf32>
    %10 = vector.broadcast %cst_2 : f32 to vector<1x128xf32>
    %11 = arith.select %5, %9, %10 : vector<1x128xi1>, vector<1x128xf32>
    %cst_3 = arith.constant 0.000000e+00 : f32
    %12 = vector.broadcast %cst_3 : f32 to vector<24x128xf32>
    %c0 = arith.constant 0 : index
    %c0_4 = arith.constant 0 : index
    %13 = vector.load %arg7[%c0, %c0_4] : memref<24x128xf32, #tpu.memory_space<vmem>>, vector<24x128xf32>
    tpu.vector_store %arg7[%c0, %c0_4], %12 {strides = array<i32>} : memref<24x128xf32, #tpu.memory_space<vmem>>, vector<24x128xf32>,
    %c0_5 = arith.constant 0 : index
    %c0_6 = arith.constant 0 : index
    %14 = vector.load %arg1[%c0_5, %c0_6] : memref<24x128xf32, #tpu.memory_space<vmem>>, vector<24x128xf32>
    %c0_7 = arith.constant 0 : index
    %c0_8 = arith.constant 0 : index
    %c0_9 = arith.constant 0 : index
    %15 = vector.load %arg2[%c0_7, %c0_8, %c0_9] : memref<2x256x128xf32, #tpu.memory_space<vmem>>, vector<1x128x128xf32>
    %16 = vector.shape_cast %15 : vector<1x128x128xf32> to vector<128x128xf32>
    %cst_10 = arith.constant dense<0.000000e+00> : vector<24x128xf32>
    %17 = tpu.matmul %14, %16, %cst_10 {dimension_numbers = #tpu.dot_dimension_numbers<[1], [0], [0], [1], [0, 0, 1, 1], [], []>} : vector<24x128xf32>, vector<128x128xf32>, vector<24x128xf32> -> vector<24x128xf32>
    %c0_11 = arith.constant 0 : index
    %c0_12 = arith.constant 0 : index
    %c0_13 = arith.constant 0 : index
    %18 = vector.load %arg3[%c0_11, %c0_12, %c0_13] : memref<2x1x128xf32, #tpu.memory_space<vmem>>, vector<1x1x128xf32>
    %19 = vector.shape_cast %18 : vector<1x1x128xf32> to vector<1x128xf32>
    %20 = vector.broadcast %19 : vector<1x128xf32> to vector<24x128xf32>
    %21 = arith.addf %17, %20 : vector<24x128xf32>
    %c0_14 = arith.constant 0 : index
    %c0_15 = arith.constant 0 : index
    %22 = vector.load %arg8[%c0_14, %c0_15] : memref<24x128xf32, #tpu.memory_space<vmem>>, vector<24x128xf32>
    tpu.vector_store %arg8[%c0_14, %c0_15], %21 {strides = array<i32>} : memref<24x128xf32, #tpu.memory_space<vmem>>, vector<24x128xf32>,
    %cst_16 = arith.constant 0.000000e+00 : f32
    %23 = vector.broadcast %cst_16 : f32 to vector<1x128xf32>
    %cst_17 = arith.constant 0.000000e+00 : f32
    %24 = vector.broadcast %cst_17 : f32 to vector<1x128xf32>
    %cst_18 = arith.constant 0.000000e+00 : f32
    %25 = vector.broadcast %cst_18 : f32 to vector<1x128xf32>
    %cst_19 = arith.constant 0.000000e+00 : f32
    %26 = vector.broadcast %cst_19 : f32 to vector<1x128xf32>
    %c0_20 = arith.constant 0 : index
    %c0_21 = arith.constant 0 : index
    %27 = vector.load %arg8[%c0_20, %c0_21] : memref<24x128xf32, #tpu.memory_space<vmem>>, vector<1x128xf32>
    %c0_22 = arith.constant 0 : index
    %c128 = arith.constant 128 : index
    %c0_23 = arith.constant 0 : index
    %28 = vector.load %arg2[%c0_22, %c128, %c0_23] : memref<2x256x128xf32, #tpu.memory_space<vmem>>, vector<1x128x128xf32>
    %29 = vector.shape_cast %28 : vector<1x128x128xf32> to vector<128x128xf32>
    %cst_24 = arith.constant dense<0.000000e+00> : vector<1x128xf32>
    %30 = tpu.matmul %23, %29, %cst_24 {dimension_numbers = #tpu.dot_dimension_numbers<[1], [0], [0], [1], [0, 0, 1, 1], [], []>} : vector<1x128xf32>, vector<128x128xf32>, vector<1x128xf32> -> vector<1x128xf32>
    %31 = arith.addf %27, %30 : vector<1x128xf32>
    %32 = math.tanh %31 : vector<1x128xf32>
    %33 = arith.mulf %8, %32 : vector<1x128xf32>
    %34 = arith.addf %33, %11 : vector<1x128xf32>
    %c96_i32_25 = arith.constant 96 : i32
    %35 = tpu.dynamic_rotate %34 by %c96_i32_25 dim 1 : vector<1x128xf32>, i32 -> vector<1x128xf32>
    %c64_i32_26 = arith.constant 64 : i32
    %36 = tpu.dynamic_rotate %34 by %c64_i32_26 dim 1 : vector<1x128xf32>, i32 -> vector<1x128xf32>
    %c32_i32 = arith.constant 32 : i32
    %37 = tpu.dynamic_rotate %34 by %c32_i32 dim 1 : vector<1x128xf32>, i32 -> vector<1x128xf32>
    %38 = arith.mulf %35, %25 : vector<1x128xf32>
    %39 = arith.mulf %34, %36 : vector<1x128xf32>
    %40 = arith.addf %38, %39 : vector<1x128xf32>
    %41 = math.tanh %40 : vector<1x128xf32>
    %42 = arith.mulf %37, %41 : vector<1x128xf32>
    %c1 = arith.constant 1 : index
    %c0_27 = arith.constant 0 : index
    %43 = vector.load %arg8[%c1, %c0_27] : memref<24x128xf32, #tpu.memory_space<vmem>>, vector<1x128xf32>
    %c0_28 = arith.constant 0 : index
    %c128_29 = arith.constant 128 : index
    %c0_30 = arith.constant 0 : index
    %44 = vector.load %arg2[%c0_28, %c128_29, %c0_30] : memref<2x256x128xf32, #tpu.memory_space<vmem>>, vector<1x128x128xf32>
    %45 = vector.shape_cast %44 : vector<1x128x128xf32> to vector<128x128xf32>
    %cst_31 = arith.constant dense<0.000000e+00> : vector<1x128xf32>
    %46 = tpu.matmul %42, %45, %cst_31 {dimension_numbers = #tpu.dot_dimension_numbers<[1], [0], [0], [1], [0, 0, 1, 1], [], []>} : vector<1x128xf32>, vector<128x128xf32>, vector<1x128xf32> -> vector<1x128xf32>
    %47 = arith.addf %43, %46 : vector<1x128xf32>
    %48 = math.tanh %47 : vector<1x128xf32>
    %49 = arith.mulf %8, %48 : vector<1x128xf32>
    %50 = arith.addf %49, %11 : vector<1x128xf32>
    %c96_i32_32 = arith.constant 96 : i32
    %51 = tpu.dynamic_rotate %50 by %c96_i32_32 dim 1 : vector<1x128xf32>, i32 -> vector<1x128xf32>
    %c64_i32_33 = arith.constant 64 : i32
    %52 = tpu.dynamic_rotate %50 by %c64_i32_33 dim 1 : vector<1x128xf32>, i32 -> vector<1x128xf32>
    %c32_i32_34 = arith.constant 32 : i32
    %53 = tpu.dynamic_rotate %50 by %c32_i32_34 dim 1 : vector<1x128xf32>, i32 -> vector<1x128xf32>
    %54 = arith.mulf %51, %40 : vector<1x128xf32>
    %55 = arith.mulf %50, %52 : vector<1x128xf32>
    %56 = arith.addf %54, %55 : vector<1x128xf32>
    %57 = math.tanh %56 : vector<1x128xf32>
    %58 = arith.mulf %53, %57 : vector<1x128xf32>
    %59 = tpu.concatenate %42, %24 in 1 : vector<1x128xf32>, vector<1x128xf32> -> vector<1x256xf32>
    %c1_35 = arith.constant 1 : index
    %c0_36 = arith.constant 0 : index
    %c0_37 = arith.constant 0 : index
    %60 = vector.load %arg2[%c1_35, %c0_36, %c0_37] : memref<2x256x128xf32, #tpu.memory_space<vmem>>, vector<1x256x128xf32>
    %61 = vector.shape_cast %60 : vector<1x256x128xf32> to vector<256x128xf32>
    %cst_38 = arith.constant dense<0.000000e+00> : vector<1x128xf32>
    %62 = tpu.matmul %59, %61, %cst_38 {dimension_numbers = #tpu.dot_dimension_numbers<[1], [0], [0], [1], [0, 0, 1, 1], [], []>} : vector<1x256xf32>, vector<256x128xf32>, vector<1x128xf32> -> vector<1x128xf32>
    %c1_39 = arith.constant 1 : index
    %c0_40 = arith.constant 0 : index
    %c0_41 = arith.constant 0 : index
    %63 = vector.load %arg3[%c1_39, %c0_40, %c0_41] : memref<2x1x128xf32, #tpu.memory_space<vmem>>, vector<1x1x128xf32>
    %64 = vector.shape_cast %63 : vector<1x1x128xf32> to vector<1x128xf32>
    %65 = arith.addf %62, %64 : vector<1x128xf32>
    %66 = math.tanh %65 : vector<1x128xf32>
    %67 = arith.mulf %8, %66 : vector<1x128xf32>
    %68 = arith.addf %67, %11 : vector<1x128xf32>
    %c96_i32_42 = arith.constant 96 : i32
    %69 = tpu.dynamic_rotate %68 by %c96_i32_42 dim 1 : vector<1x128xf32>, i32 -> vector<1x128xf32>
    %c64_i32_43 = arith.constant 64 : i32
    %70 = tpu.dynamic_rotate %68 by %c64_i32_43 dim 1 : vector<1x128xf32>, i32 -> vector<1x128xf32>
    %c32_i32_44 = arith.constant 32 : i32
    %71 = tpu.dynamic_rotate %68 by %c32_i32_44 dim 1 : vector<1x128xf32>, i32 -> vector<1x128xf32>
    %72 = arith.mulf %69, %26 : vector<1x128xf32>
    %73 = arith.mulf %68, %70 : vector<1x128xf32>
    %74 = arith.addf %72, %73 : vector<1x128xf32>
    %75 = math.tanh %74 : vector<1x128xf32>
    %76 = arith.mulf %71, %75 : vector<1x128xf32>
    %c0_45 = arith.constant 0 : index
    %c0_46 = arith.constant 0 : index
    %77 = vector.load %arg7[%c0_45, %c0_46] : memref<24x128xf32, #tpu.memory_space<vmem>>, vector<1x128xf32>
    tpu.vector_store %arg7[%c0_45, %c0_46], %76 {strides = array<i32>} : memref<24x128xf32, #tpu.memory_space<vmem>>, vector<1x128xf32>,
    %c2 = arith.constant 2 : index
    %c0_47 = arith.constant 0 : index
    %78 = vector.load %arg8[%c2, %c0_47] : memref<24x128xf32, #tpu.memory_space<vmem>>, vector<1x128xf32>
    %c0_48 = arith.constant 0 : index
    %c128_49 = arith.constant 128 : index
    %c0_50 = arith.constant 0 : index
    %79 = vector.load %arg2[%c0_48, %c128_49, %c0_50] : memref<2x256x128xf32, #tpu.memory_space<vmem>>, vector<1x128x128xf32>
    %80 = vector.shape_cast %79 : vector<1x128x128xf32> to vector<128x128xf32>
    %cst_51 = arith.constant dense<0.000000e+00> : vector<1x128xf32>
    %81 = tpu.matmul %58, %80, %cst_51 {dimension_numbers = #tpu.dot_dimension_numbers<[1], [0], [0], [1], [0, 0, 1, 1], [], []>} : vector<1x128xf32>, vector<128x128xf32>, vector<1x128xf32> -> vector<1x128xf32>
    %82 = arith.addf %78, %81 : vector<1x128xf32>
    %83 = math.tanh %82 : vector<1x128xf32>
    %84 = arith.mulf %8, %83 : vector<1x128xf32>
    %85 = arith.addf %84, %11 : vector<1x128xf32>
    %c96_i32_52 = arith.constant 96 : i32
    %86 = tpu.dynamic_rotate %85 by %c96_i32_52 dim 1 : vector<1x128xf32>, i32 -> vector<1x128xf32>
    %c64_i32_53 = arith.constant 64 : i32
    %87 = tpu.dynamic_rotate %85 by %c64_i32_53 dim 1 : vector<1x128xf32>, i32 -> vector<1x128xf32>
    %c32_i32_54 = arith.constant 32 : i32
    %88 = tpu.dynamic_rotate %85 by %c32_i32_54 dim 1 : vector<1x128xf32>, i32 -> vector<1x128xf32>
    %89 = arith.mulf %86, %56 : vector<1x128xf32>
    %90 = arith.mulf %85, %87 : vector<1x128xf32>
    %91 = arith.addf %89, %90 : vector<1x128xf32>
    %92 = math.tanh %91 : vector<1x128xf32>
    %93 = arith.mulf %88, %92 : vector<1x128xf32>
    %94 = tpu.concatenate %58, %76 in 1 : vector<1x128xf32>, vector<1x128xf32> -> vector<1x256xf32>
    %c1_55 = arith.constant 1 : index
    %c0_56 = arith.constant 0 : index
    %c0_57 = arith.constant 0 : index
    %95 = vector.load %arg2[%c1_55, %c0_56, %c0_57] : memref<2x256x128xf32, #tpu.memory_space<vmem>>, vector<1x256x128xf32>
    %96 = vector.shape_cast %95 : vector<1x256x128xf32> to vector<256x128xf32>
    %cst_58 = arith.constant dense<0.000000e+00> : vector<1x128xf32>
    %97 = tpu.matmul %94, %96, %cst_58 {dimension_numbers = #tpu.dot_dimension_numbers<[1], [0], [0], [1], [0, 0, 1, 1], [], []>} : vector<1x256xf32>, vector<256x128xf32>, vector<1x128xf32> -> vector<1x128xf32>
    %c1_59 = arith.constant 1 : index
    %c0_60 = arith.constant 0 : index
    %c0_61 = arith.constant 0 : index
    %98 = vector.load %arg3[%c1_59, %c0_60, %c0_61] : memref<2x1x128xf32, #tpu.memory_space<vmem>>, vector<1x1x128xf32>
    %99 = vector.shape_cast %98 : vector<1x1x128xf32> to vector<1x128xf32>
    %100 = arith.addf %97, %99 : vector<1x128xf32>
    %101 = math.tanh %100 : vector<1x128xf32>
    %102 = arith.mulf %8, %101 : vector<1x128xf32>
    %103 = arith.addf %102, %11 : vector<1x128xf32>
    %c96_i32_62 = arith.constant 96 : i32
    %104 = tpu.dynamic_rotate %103 by %c96_i32_62 dim 1 : vector<1x128xf32>, i32 -> vector<1x128xf32>
    %c64_i32_63 = arith.constant 64 : i32
    %105 = tpu.dynamic_rotate %103 by %c64_i32_63 dim 1 : vector<1x128xf32>, i32 -> vector<1x128xf32>
    %c32_i32_64 = arith.constant 32 : i32
    %106 = tpu.dynamic_rotate %103 by %c32_i32_64 dim 1 : vector<1x128xf32>, i32 -> vector<1x128xf32>
    %107 = arith.mulf %104, %74 : vector<1x128xf32>
    %108 = arith.mulf %103, %105 : vector<1x128xf32>
    %109 = arith.addf %107, %108 : vector<1x128xf32>
    %110 = math.tanh %109 : vector<1x128xf32>
    %111 = arith.mulf %106, %110 : vector<1x128xf32>
    %c1_65 = arith.constant 1 : index
    %c0_66 = arith.constant 0 : index
    %112 = vector.load %arg7[%c1_65, %c0_66] : memref<24x128xf32, #tpu.memory_space<vmem>>, vector<1x128xf32>
    tpu.vector_store %arg7[%c1_65, %c0_66], %111 {strides = array<i32>} : memref<24x128xf32, #tpu.memory_space<vmem>>, vector<1x128xf32>,
    %c3 = arith.constant 3 : index
    %c0_67 = arith.constant 0 : index
    %113 = vector.load %arg8[%c3, %c0_67] : memref<24x128xf32, #tpu.memory_space<vmem>>, vector<1x128xf32>
    %c0_68 = arith.constant 0 : index
    %c128_69 = arith.constant 128 : index
    %c0_70 = arith.constant 0 : index
    %114 = vector.load %arg2[%c0_68, %c128_69, %c0_70] : memref<2x256x128xf32, #tpu.memory_space<vmem>>, vector<1x128x128xf32>
    %115 = vector.shape_cast %114 : vector<1x128x128xf32> to vector<128x128xf32>
    %cst_71 = arith.constant dense<0.000000e+00> : vector<1x128xf32>
    %116 = tpu.matmul %93, %115, %cst_71 {dimension_numbers = #tpu.dot_dimension_numbers<[1], [0], [0], [1], [0, 0, 1, 1], [], []>} : vector<1x128xf32>, vector<128x128xf32>, vector<1x128xf32> -> vector<1x128xf32>
    %117 = arith.addf %113, %116 : vector<1x128xf32>
    %118 = math.tanh %117 : vector<1x128xf32>
    %119 = arith.mulf %8, %118 : vector<1x128xf32>
    %120 = arith.addf %119, %11 : vector<1x128xf32>
    %c96_i32_72 = arith.constant 96 : i32
    %121 = tpu.dynamic_rotate %120 by %c96_i32_72 dim 1 : vector<1x128xf32>, i32 -> vector<1x128xf32>
    %c64_i32_73 = arith.constant 64 : i32
    %122 = tpu.dynamic_rotate %120 by %c64_i32_73 dim 1 : vector<1x128xf32>, i32 -> vector<1x128xf32>
    %c32_i32_74 = arith.constant 32 : i32
    %123 = tpu.dynamic_rotate %120 by %c32_i32_74 dim 1 : vector<1x128xf32>, i32 -> vector<1x128xf32>
    %124 = arith.mulf %121, %91 : vector<1x128xf32>
    %125 = arith.mulf %120, %122 : vector<1x128xf32>
    %126 = arith.addf %124, %125 : vector<1x128xf32>
    %127 = math.tanh %126 : vector<1x128xf32>
    %128 = arith.mulf %123, %127 : vector<1x128xf32>
    %129 = tpu.concatenate %93, %111 in 1 : vector<1x128xf32>, vector<1x128xf32> -> vector<1x256xf32>
    %c1_75 = arith.constant 1 : index
    %c0_76 = arith.constant 0 : index
    %c0_77 = arith.constant 0 : index
    %130 = vector.load %arg2[%c1_75, %c0_76, %c0_77] : memref<2x256x128xf32, #tpu.memory_space<vmem>>, vector<1x256x128xf32>
    %131 = vector.shape_cast %130 : vector<1x256x128xf32> to vector<256x128xf32>
    %cst_78 = arith.constant dense<0.000000e+00> : vector<1x128xf32>
    %132 = tpu.matmul %129, %131, %cst_78 {dimension_numbers = #tpu.dot_dimension_numbers<[1], [0], [0], [1], [0, 0, 1, 1], [], []>} : vector<1x256xf32>, vector<256x128xf32>, vector<1x128xf32> -> vector<1x128xf32>
    %c1_79 = arith.constant 1 : index
    %c0_80 = arith.constant 0 : index
    %c0_81 = arith.constant 0 : index
    %133 = vector.load %arg3[%c1_79, %c0_80, %c0_81] : memref<2x1x128xf32, #tpu.memory_space<vmem>>, vector<1x1x128xf32>
    %134 = vector.shape_cast %133 : vector<1x1x128xf32> to vector<1x128xf32>
    %135 = arith.addf %132, %134 : vector<1x128xf32>
    %136 = math.tanh %135 : vector<1x128xf32>
    %137 = arith.mulf %8, %136 : vector<1x128xf32>
    %138 = arith.addf %137, %11 : vector<1x128xf32>
    %c96_i32_82 = arith.constant 96 : i32
    %139 = tpu.dynamic_rotate %138 by %c96_i32_82 dim 1 : vector<1x128xf32>, i32 -> vector<1x128xf32>
    %c64_i32_83 = arith.constant 64 : i32
    %140 = tpu.dynamic_rotate %138 by %c64_i32_83 dim 1 : vector<1x128xf32>, i32 -> vector<1x128xf32>
    %c32_i32_84 = arith.constant 32 : i32
    %141 = tpu.dynamic_rotate %138 by %c32_i32_84 dim 1 : vector<1x128xf32>, i32 -> vector<1x128xf32>
    %142 = arith.mulf %139, %109 : vector<1x128xf32>
    %143 = arith.mulf %138, %140 : vector<1x128xf32>
    %144 = arith.addf %142, %143 : vector<1x128xf32>
    %145 = math.tanh %144 : vector<1x128xf32>
    %146 = arith.mulf %141, %145 : vector<1x128xf32>
    %c2_85 = arith.constant 2 : index
    %c0_86 = arith.constant 0 : index
    %147 = vector.load %arg7[%c2_85, %c0_86] : memref<24x128xf32, #tpu.memory_space<vmem>>, vector<1x128xf32>
    tpu.vector_store %arg7[%c2_85, %c0_86], %146 {strides = array<i32>} : memref<24x128xf32, #tpu.memory_space<vmem>>, vector<1x128xf32>,
    %c4 = arith.constant 4 : index
    %c0_87 = arith.constant 0 : index
    %148 = vector.load %arg8[%c4, %c0_87] : memref<24x128xf32, #tpu.memory_space<vmem>>, vector<1x128xf32>
    %c0_88 = arith.constant 0 : index
    %c128_89 = arith.constant 128 : index
    %c0_90 = arith.constant 0 : index
    %149 = vector.load %arg2[%c0_88, %c128_89, %c0_90] : memref<2x256x128xf32, #tpu.memory_space<vmem>>, vector<1x128x128xf32>
    %150 = vector.shape_cast %149 : vector<1x128x128xf32> to vector<128x128xf32>
    %cst_91 = arith.constant dense<0.000000e+00> : vector<1x128xf32>
    %151 = tpu.matmul %128, %150, %cst_91 {dimension_numbers = #tpu.dot_dimension_numbers<[1], [0], [0], [1], [0, 0, 1, 1], [], []>} : vector<1x128xf32>, vector<128x128xf32>, vector<1x128xf32> -> vector<1x128xf32>
    %152 = arith.addf %148, %151 : vector<1x128xf32>
    %153 = math.tanh %152 : vector<1x128xf32>
    %154 = arith.mulf %8, %153 : vector<1x128xf32>
    %155 = arith.addf %154, %11 : vector<1x128xf32>
    %c96_i32_92 = arith.constant 96 : i32
    %156 = tpu.dynamic_rotate %155 by %c96_i32_92 dim 1 : vector<1x128xf32>, i32 -> vector<1x128xf32>
    %c64_i32_93 = arith.constant 64 : i32
    %157 = tpu.dynamic_rotate %155 by %c64_i32_93 dim 1 : vector<1x128xf32>, i32 -> vector<1x128xf32>
    %c32_i32_94 = arith.constant 32 : i32
    %158 = tpu.dynamic_rotate %155 by %c32_i32_94 dim 1 : vector<1x128xf32>, i32 -> vector<1x128xf32>
    %159 = arith.mulf %156, %126 : vector<1x128xf32>
    %160 = arith.mulf %155, %157 : vector<1x128xf32>
    %161 = arith.addf %159, %160 : vector<1x128xf32>
    %162 = math.tanh %161 : vector<1x128xf32>
    %163 = arith.mulf %158, %162 : vector<1x128xf32>
    %164 = tpu.concatenate %128, %146 in 1 : vector<1x128xf32>, vector<1x128xf32> -> vector<1x256xf32>
    %c1_95 = arith.constant 1 : index
    %c0_96 = arith.constant 0 : index
    %c0_97 = arith.constant 0 : index
    %165 = vector.load %arg2[%c1_95, %c0_96, %c0_97] : memref<2x256x128xf32, #tpu.memory_space<vmem>>, vector<1x256x128xf32>
    %166 = vector.shape_cast %165 : vector<1x256x128xf32> to vector<256x128xf32>
    %cst_98 = arith.constant dense<0.000000e+00> : vector<1x128xf32>
    %167 = tpu.matmul %164, %166, %cst_98 {dimension_numbers = #tpu.dot_dimension_numbers<[1], [0], [0], [1], [0, 0, 1, 1], [], []>} : vector<1x256xf32>, vector<256x128xf32>, vector<1x128xf32> -> vector<1x128xf32>
    %c1_99 = arith.constant 1 : index
    %c0_100 = arith.constant 0 : index
    %c0_101 = arith.constant 0 : index
    %168 = vector.load %arg3[%c1_99, %c0_100, %c0_101] : memref<2x1x128xf32, #tpu.memory_space<vmem>>, vector<1x1x128xf32>
    %169 = vector.shape_cast %168 : vector<1x1x128xf32> to vector<1x128xf32>
    %170 = arith.addf %167, %169 : vector<1x128xf32>
    %171 = math.tanh %170 : vector<1x128xf32>
    %172 = arith.mulf %8, %171 : vector<1x128xf32>
    %173 = arith.addf %172, %11 : vector<1x128xf32>
    %c96_i32_102 = arith.constant 96 : i32
    %174 = tpu.dynamic_rotate %173 by %c96_i32_102 dim 1 : vector<1x128xf32>, i32 -> vector<1x128xf32>
    %c64_i32_103 = arith.constant 64 : i32
    %175 = tpu.dynamic_rotate %173 by %c64_i32_103 dim 1 : vector<1x128xf32>, i32 -> vector<1x128xf32>
    %c32_i32_104 = arith.constant 32 : i32
    %176 = tpu.dynamic_rotate %173 by %c32_i32_104 dim 1 : vector<1x128xf32>, i32 -> vector<1x128xf32>
    %177 = arith.mulf %174, %144 : vector<1x128xf32>
    %178 = arith.mulf %173, %175 : vector<1x128xf32>
    %179 = arith.addf %177, %178 : vector<1x128xf32>
    %180 = math.tanh %179 : vector<1x128xf32>
    %181 = arith.mulf %176, %180 : vector<1x128xf32>
    %c3_105 = arith.constant 3 : index
    %c0_106 = arith.constant 0 : index
    %182 = vector.load %arg7[%c3_105, %c0_106] : memref<24x128xf32, #tpu.memory_space<vmem>>, vector<1x128xf32>
    tpu.vector_store %arg7[%c3_105, %c0_106], %181 {strides = array<i32>} : memref<24x128xf32, #tpu.memory_space<vmem>>, vector<1x128xf32>,
    %c5 = arith.constant 5 : index
    %c0_107 = arith.constant 0 : index
    %183 = vector.load %arg8[%c5, %c0_107] : memref<24x128xf32, #tpu.memory_space<vmem>>, vector<1x128xf32>
    %c0_108 = arith.constant 0 : index
    %c128_109 = arith.constant 128 : index
    %c0_110 = arith.constant 0 : index
    %184 = vector.load %arg2[%c0_108, %c128_109, %c0_110] : memref<2x256x128xf32, #tpu.memory_space<vmem>>, vector<1x128x128xf32>
    %185 = vector.shape_cast %184 : vector<1x128x128xf32> to vector<128x128xf32>
    %cst_111 = arith.constant dense<0.000000e+00> : vector<1x128xf32>
    %186 = tpu.matmul %163, %185, %cst_111 {dimension_numbers = #tpu.dot_dimension_numbers<[1], [0], [0], [1], [0, 0, 1, 1], [], []>} : vector<1x128xf32>, vector<128x128xf32>, vector<1x128xf32> -> vector<1x128xf32>
    %187 = arith.addf %183, %186 : vector<1x128xf32>
    %188 = math.tanh %187 : vector<1x128xf32>
    %189 = arith.mulf %8, %188 : vector<1x128xf32>
    %190 = arith.addf %189, %11 : vector<1x128xf32>
    %c96_i32_112 = arith.constant 96 : i32
    %191 = tpu.dynamic_rotate %190 by %c96_i32_112 dim 1 : vector<1x128xf32>, i32 -> vector<1x128xf32>
    %c64_i32_113 = arith.constant 64 : i32
    %192 = tpu.dynamic_rotate %190 by %c64_i32_113 dim 1 : vector<1x128xf32>, i32 -> vector<1x128xf32>
    %c32_i32_114 = arith.constant 32 : i32
    %193 = tpu.dynamic_rotate %190 by %c32_i32_114 dim 1 : vector<1x128xf32>, i32 -> vector<1x128xf32>
    %194 = arith.mulf %191, %161 : vector<1x128xf32>
    %195 = arith.mulf %190, %192 : vector<1x128xf32>
    %196 = arith.addf %194, %195 : vector<1x128xf32>
    %197 = math.tanh %196 : vector<1x128xf32>
    %198 = arith.mulf %193, %197 : vector<1x128xf32>
    %199 = tpu.concatenate %163, %181 in 1 : vector<1x128xf32>, vector<1x128xf32> -> vector<1x256xf32>
    %c1_115 = arith.constant 1 : index
    %c0_116 = arith.constant 0 : index
    %c0_117 = arith.constant 0 : index
    %200 = vector.load %arg2[%c1_115, %c0_116, %c0_117] : memref<2x256x128xf32, #tpu.memory_space<vmem>>, vector<1x256x128xf32>
    %201 = vector.shape_cast %200 : vector<1x256x128xf32> to vector<256x128xf32>
    %cst_118 = arith.constant dense<0.000000e+00> : vector<1x128xf32>
    %202 = tpu.matmul %199, %201, %cst_118 {dimension_numbers = #tpu.dot_dimension_numbers<[1], [0], [0], [1], [0, 0, 1, 1], [], []>} : vector<1x256xf32>, vector<256x128xf32>, vector<1x128xf32> -> vector<1x128xf32>
    %c1_119 = arith.constant 1 : index
    %c0_120 = arith.constant 0 : index
    %c0_121 = arith.constant 0 : index
    %203 = vector.load %arg3[%c1_119, %c0_120, %c0_121] : memref<2x1x128xf32, #tpu.memory_space<vmem>>, vector<1x1x128xf32>
    %204 = vector.shape_cast %203 : vector<1x1x128xf32> to vector<1x128xf32>
    %205 = arith.addf %202, %204 : vector<1x128xf32>
    %206 = math.tanh %205 : vector<1x128xf32>
    %207 = arith.mulf %8, %206 : vector<1x128xf32>
    %208 = arith.addf %207, %11 : vector<1x128xf32>
    %c96_i32_122 = arith.constant 96 : i32
    %209 = tpu.dynamic_rotate %208 by %c96_i32_122 dim 1 : vector<1x128xf32>, i32 -> vector<1x128xf32>
    %c64_i32_123 = arith.constant 64 : i32
    %210 = tpu.dynamic_rotate %208 by %c64_i32_123 dim 1 : vector<1x128xf32>, i32 -> vector<1x128xf32>
    %c32_i32_124 = arith.constant 32 : i32
    %211 = tpu.dynamic_rotate %208 by %c32_i32_124 dim 1 : vector<1x128xf32>, i32 -> vector<1x128xf32>
    %212 = arith.mulf %209, %179 : vector<1x128xf32>
    %213 = arith.mulf %208, %210 : vector<1x128xf32>
    %214 = arith.addf %212, %213 : vector<1x128xf32>
    %215 = math.tanh %214 : vector<1x128xf32>
    %216 = arith.mulf %211, %215 : vector<1x128xf32>
    %c4_125 = arith.constant 4 : index
    %c0_126 = arith.constant 0 : index
    %217 = vector.load %arg7[%c4_125, %c0_126] : memref<24x128xf32, #tpu.memory_space<vmem>>, vector<1x128xf32>
    tpu.vector_store %arg7[%c4_125, %c0_126], %216 {strides = array<i32>} : memref<24x128xf32, #tpu.memory_space<vmem>>, vector<1x128xf32>,
    %c6 = arith.constant 6 : index
    %c0_127 = arith.constant 0 : index
    %218 = vector.load %arg8[%c6, %c0_127] : memref<24x128xf32, #tpu.memory_space<vmem>>, vector<1x128xf32>
    %c0_128 = arith.constant 0 : index
    %c128_129 = arith.constant 128 : index
    %c0_130 = arith.constant 0 : index
    %219 = vector.load %arg2[%c0_128, %c128_129, %c0_130] : memref<2x256x128xf32, #tpu.memory_space<vmem>>, vector<1x128x128xf32>
    %220 = vector.shape_cast %219 : vector<1x128x128xf32> to vector<128x128xf32>
    %cst_131 = arith.constant dense<0.000000e+00> : vector<1x128xf32>
    %221 = tpu.matmul %198, %220, %cst_131 {dimension_numbers = #tpu.dot_dimension_numbers<[1], [0], [0], [1], [0, 0, 1, 1], [], []>} : vector<1x128xf32>, vector<128x128xf32>, vector<1x128xf32> -> vector<1x128xf32>
    %222 = arith.addf %218, %221 : vector<1x128xf32>
    %223 = math.tanh %222 : vector<1x128xf32>
    %224 = arith.mulf %8, %223 : vector<1x128xf32>
    %225 = arith.addf %224, %11 : vector<1x128xf32>
    %c96_i32_132 = arith.constant 96 : i32
    %226 = tpu.dynamic_rotate %225 by %c96_i32_132 dim 1 : vector<1x128xf32>, i32 -> vector<1x128xf32>
    %c64_i32_133 = arith.constant 64 : i32
    %227 = tpu.dynamic_rotate %225 by %c64_i32_133 dim 1 : vector<1x128xf32>, i32 -> vector<1x128xf32>
    %c32_i32_134 = arith.constant 32 : i32
    %228 = tpu.dynamic_rotate %225 by %c32_i32_134 dim 1 : vector<1x128xf32>, i32 -> vector<1x128xf32>
    %229 = arith.mulf %226, %196 : vector<1x128xf32>
    %230 = arith.mulf %225, %227 : vector<1x128xf32>
    %231 = arith.addf %229, %230 : vector<1x128xf32>
    %232 = math.tanh %231 : vector<1x128xf32>
    %233 = arith.mulf %228, %232 : vector<1x128xf32>
    %234 = tpu.concatenate %198, %216 in 1 : vector<1x128xf32>, vector<1x128xf32> -> vector<1x256xf32>
    %c1_135 = arith.constant 1 : index
    %c0_136 = arith.constant 0 : index
    %c0_137 = arith.constant 0 : index
    %235 = vector.load %arg2[%c1_135, %c0_136, %c0_137] : memref<2x256x128xf32, #tpu.memory_space<vmem>>, vector<1x256x128xf32>
    %236 = vector.shape_cast %235 : vector<1x256x128xf32> to vector<256x128xf32>
    %cst_138 = arith.constant dense<0.000000e+00> : vector<1x128xf32>
    %237 = tpu.matmul %234, %236, %cst_138 {dimension_numbers = #tpu.dot_dimension_numbers<[1], [0], [0], [1], [0, 0, 1, 1], [], []>} : vector<1x256xf32>, vector<256x128xf32>, vector<1x128xf32> -> vector<1x128xf32>
    %c1_139 = arith.constant 1 : index
    %c0_140 = arith.constant 0 : index
    %c0_141 = arith.constant 0 : index
    %238 = vector.load %arg3[%c1_139, %c0_140, %c0_141] : memref<2x1x128xf32, #tpu.memory_space<vmem>>, vector<1x1x128xf32>
    %239 = vector.shape_cast %238 : vector<1x1x128xf32> to vector<1x128xf32>
    %240 = arith.addf %237, %239 : vector<1x128xf32>
    %241 = math.tanh %240 : vector<1x128xf32>
    %242 = arith.mulf %8, %241 : vector<1x128xf32>
    %243 = arith.addf %242, %11 : vector<1x128xf32>
    %c96_i32_142 = arith.constant 96 : i32
    %244 = tpu.dynamic_rotate %243 by %c96_i32_142 dim 1 : vector<1x128xf32>, i32 -> vector<1x128xf32>
    %c64_i32_143 = arith.constant 64 : i32
    %245 = tpu.dynamic_rotate %243 by %c64_i32_143 dim 1 : vector<1x128xf32>, i32 -> vector<1x128xf32>
    %c32_i32_144 = arith.constant 32 : i32
    %246 = tpu.dynamic_rotate %243 by %c32_i32_144 dim 1 : vector<1x128xf32>, i32 -> vector<1x128xf32>
    %247 = arith.mulf %244, %214 : vector<1x128xf32>
    %248 = arith.mulf %243, %245 : vector<1x128xf32>
    %249 = arith.addf %247, %248 : vector<1x128xf32>
    %250 = math.tanh %249 : vector<1x128xf32>
    %251 = arith.mulf %246, %250 : vector<1x128xf32>
    %c5_145 = arith.constant 5 : index
    %c0_146 = arith.constant 0 : index
    %252 = vector.load %arg7[%c5_145, %c0_146] : memref<24x128xf32, #tpu.memory_space<vmem>>, vector<1x128xf32>
    tpu.vector_store %arg7[%c5_145, %c0_146], %251 {strides = array<i32>} : memref<24x128xf32, #tpu.memory_space<vmem>>, vector<1x128xf32>,
    %c7 = arith.constant 7 : index
    %c0_147 = arith.constant 0 : index
    %253 = vector.load %arg8[%c7, %c0_147] : memref<24x128xf32, #tpu.memory_space<vmem>>, vector<1x128xf32>
    %c0_148 = arith.constant 0 : index
    %c128_149 = arith.constant 128 : index
    %c0_150 = arith.constant 0 : index
    %254 = vector.load %arg2[%c0_148, %c128_149, %c0_150] : memref<2x256x128xf32, #tpu.memory_space<vmem>>, vector<1x128x128xf32>
    %255 = vector.shape_cast %254 : vector<1x128x128xf32> to vector<128x128xf32>
    %cst_151 = arith.constant dense<0.000000e+00> : vector<1x128xf32>
    %256 = tpu.matmul %233, %255, %cst_151 {dimension_numbers = #tpu.dot_dimension_numbers<[1], [0], [0], [1], [0, 0, 1, 1], [], []>} : vector<1x128xf32>, vector<128x128xf32>, vector<1x128xf32> -> vector<1x128xf32>
    %257 = arith.addf %253, %256 : vector<1x128xf32>
    %258 = math.tanh %257 : vector<1x128xf32>
    %259 = arith.mulf %8, %258 : vector<1x128xf32>
    %260 = arith.addf %259, %11 : vector<1x128xf32>
    %c96_i32_152 = arith.constant 96 : i32
    %261 = tpu.dynamic_rotate %260 by %c96_i32_152 dim 1 : vector<1x128xf32>, i32 -> vector<1x128xf32>
    %c64_i32_153 = arith.constant 64 : i32
    %262 = tpu.dynamic_rotate %260 by %c64_i32_153 dim 1 : vector<1x128xf32>, i32 -> vector<1x128xf32>
    %c32_i32_154 = arith.constant 32 : i32
    %263 = tpu.dynamic_rotate %260 by %c32_i32_154 dim 1 : vector<1x128xf32>, i32 -> vector<1x128xf32>
    %264 = arith.mulf %261, %231 : vector<1x128xf32>
    %265 = arith.mulf %260, %262 : vector<1x128xf32>
    %266 = arith.addf %264, %265 : vector<1x128xf32>
    %267 = math.tanh %266 : vector<1x128xf32>
    %268 = arith.mulf %263, %267 : vector<1x128xf32>
    %269 = tpu.concatenate %233, %251 in 1 : vector<1x128xf32>, vector<1x128xf32> -> vector<1x256xf32>
    %c1_155 = arith.constant 1 : index
    %c0_156 = arith.constant 0 : index
    %c0_157 = arith.constant 0 : index
    %270 = vector.load %arg2[%c1_155, %c0_156, %c0_157] : memref<2x256x128xf32, #tpu.memory_space<vmem>>, vector<1x256x128xf32>
    %271 = vector.shape_cast %270 : vector<1x256x128xf32> to vector<256x128xf32>
    %cst_158 = arith.constant dense<0.000000e+00> : vector<1x128xf32>
    %272 = tpu.matmul %269, %271, %cst_158 {dimension_numbers = #tpu.dot_dimension_numbers<[1], [0], [0], [1], [0, 0, 1, 1], [], []>} : vector<1x256xf32>, vector<256x128xf32>, vector<1x128xf32> -> vector<1x128xf32>
    %c1_159 = arith.constant 1 : index
    %c0_160 = arith.constant 0 : index
    %c0_161 = arith.constant 0 : index
    %273 = vector.load %arg3[%c1_159, %c0_160, %c0_161] : memref<2x1x128xf32, #tpu.memory_space<vmem>>, vector<1x1x128xf32>
    %274 = vector.shape_cast %273 : vector<1x1x128xf32> to vector<1x128xf32>
    %275 = arith.addf %272, %274 : vector<1x128xf32>
    %276 = math.tanh %275 : vector<1x128xf32>
    %277 = arith.mulf %8, %276 : vector<1x128xf32>
    %278 = arith.addf %277, %11 : vector<1x128xf32>
    %c96_i32_162 = arith.constant 96 : i32
    %279 = tpu.dynamic_rotate %278 by %c96_i32_162 dim 1 : vector<1x128xf32>, i32 -> vector<1x128xf32>
    %c64_i32_163 = arith.constant 64 : i32
    %280 = tpu.dynamic_rotate %278 by %c64_i32_163 dim 1 : vector<1x128xf32>, i32 -> vector<1x128xf32>
    %c32_i32_164 = arith.constant 32 : i32
    %281 = tpu.dynamic_rotate %278 by %c32_i32_164 dim 1 : vector<1x128xf32>, i32 -> vector<1x128xf32>
    %282 = arith.mulf %279, %249 : vector<1x128xf32>
    %283 = arith.mulf %278, %280 : vector<1x128xf32>
    %284 = arith.addf %282, %283 : vector<1x128xf32>
    %285 = math.tanh %284 : vector<1x128xf32>
    %286 = arith.mulf %281, %285 : vector<1x128xf32>
    %c6_165 = arith.constant 6 : index
    %c0_166 = arith.constant 0 : index
    %287 = vector.load %arg7[%c6_165, %c0_166] : memref<24x128xf32, #tpu.memory_space<vmem>>, vector<1x128xf32>
    tpu.vector_store %arg7[%c6_165, %c0_166], %286 {strides = array<i32>} : memref<24x128xf32, #tpu.memory_space<vmem>>, vector<1x128xf32>,
    %c8 = arith.constant 8 : index
    %c0_167 = arith.constant 0 : index
    %288 = vector.load %arg8[%c8, %c0_167] : memref<24x128xf32, #tpu.memory_space<vmem>>, vector<1x128xf32>
    %c0_168 = arith.constant 0 : index
    %c128_169 = arith.constant 128 : index
    %c0_170 = arith.constant 0 : index
    %289 = vector.load %arg2[%c0_168, %c128_169, %c0_170] : memref<2x256x128xf32, #tpu.memory_space<vmem>>, vector<1x128x128xf32>
    %290 = vector.shape_cast %289 : vector<1x128x128xf32> to vector<128x128xf32>
    %cst_171 = arith.constant dense<0.000000e+00> : vector<1x128xf32>
    %291 = tpu.matmul %268, %290, %cst_171 {dimension_numbers = #tpu.dot_dimension_numbers<[1], [0], [0], [1], [0, 0, 1, 1], [], []>} : vector<1x128xf32>, vector<128x128xf32>, vector<1x128xf32> -> vector<1x128xf32>
    %292 = arith.addf %288, %291 : vector<1x128xf32>
    %293 = math.tanh %292 : vector<1x128xf32>
    %294 = arith.mulf %8, %293 : vector<1x128xf32>
    %295 = arith.addf %294, %11 : vector<1x128xf32>
    %c96_i32_172 = arith.constant 96 : i32
    %296 = tpu.dynamic_rotate %295 by %c96_i32_172 dim 1 : vector<1x128xf32>, i32 -> vector<1x128xf32>
    %c64_i32_173 = arith.constant 64 : i32
    %297 = tpu.dynamic_rotate %295 by %c64_i32_173 dim 1 : vector<1x128xf32>, i32 -> vector<1x128xf32>
    %c32_i32_174 = arith.constant 32 : i32
    %298 = tpu.dynamic_rotate %295 by %c32_i32_174 dim 1 : vector<1x128xf32>, i32 -> vector<1x128xf32>
    %299 = arith.mulf %296, %266 : vector<1x128xf32>
    %300 = arith.mulf %295, %297 : vector<1x128xf32>
    %301 = arith.addf %299, %300 : vector<1x128xf32>
    %302 = math.tanh %301 : vector<1x128xf32>
    %303 = arith.mulf %298, %302 : vector<1x128xf32>
    %304 = tpu.concatenate %268, %286 in 1 : vector<1x128xf32>, vector<1x128xf32> -> vector<1x256xf32>
    %c1_175 = arith.constant 1 : index
    %c0_176 = arith.constant 0 : index
    %c0_177 = arith.constant 0 : index
    %305 = vector.load %arg2[%c1_175, %c0_176, %c0_177] : memref<2x256x128xf32, #tpu.memory_space<vmem>>, vector<1x256x128xf32>
    %306 = vector.shape_cast %305 : vector<1x256x128xf32> to vector<256x128xf32>
    %cst_178 = arith.constant dense<0.000000e+00> : vector<1x128xf32>
    %307 = tpu.matmul %304, %306, %cst_178 {dimension_numbers = #tpu.dot_dimension_numbers<[1], [0], [0], [1], [0, 0, 1, 1], [], []>} : vector<1x256xf32>, vector<256x128xf32>, vector<1x128xf32> -> vector<1x128xf32>
    %c1_179 = arith.constant 1 : index
    %c0_180 = arith.constant 0 : index
    %c0_181 = arith.constant 0 : index
    %308 = vector.load %arg3[%c1_179, %c0_180, %c0_181] : memref<2x1x128xf32, #tpu.memory_space<vmem>>, vector<1x1x128xf32>
    %309 = vector.shape_cast %308 : vector<1x1x128xf32> to vector<1x128xf32>
    %310 = arith.addf %307, %309 : vector<1x128xf32>
    %311 = math.tanh %310 : vector<1x128xf32>
    %312 = arith.mulf %8, %311 : vector<1x128xf32>
    %313 = arith.addf %312, %11 : vector<1x128xf32>
    %c96_i32_182 = arith.constant 96 : i32
    %314 = tpu.dynamic_rotate %313 by %c96_i32_182 dim 1 : vector<1x128xf32>, i32 -> vector<1x128xf32>
    %c64_i32_183 = arith.constant 64 : i32
    %315 = tpu.dynamic_rotate %313 by %c64_i32_183 dim 1 : vector<1x128xf32>, i32 -> vector<1x128xf32>
    %c32_i32_184 = arith.constant 32 : i32
    %316 = tpu.dynamic_rotate %313 by %c32_i32_184 dim 1 : vector<1x128xf32>, i32 -> vector<1x128xf32>
    %317 = arith.mulf %314, %284 : vector<1x128xf32>
    %318 = arith.mulf %313, %315 : vector<1x128xf32>
    %319 = arith.addf %317, %318 : vector<1x128xf32>
    %320 = math.tanh %319 : vector<1x128xf32>
    %321 = arith.mulf %316, %320 : vector<1x128xf32>
    %c7_185 = arith.constant 7 : index
    %c0_186 = arith.constant 0 : index
    %322 = vector.load %arg7[%c7_185, %c0_186] : memref<24x128xf32, #tpu.memory_space<vmem>>, vector<1x128xf32>
    tpu.vector_store %arg7[%c7_185, %c0_186], %321 {strides = array<i32>} : memref<24x128xf32, #tpu.memory_space<vmem>>, vector<1x128xf32>,
    %c9 = arith.constant 9 : index
    %c0_187 = arith.constant 0 : index
    %323 = vector.load %arg8[%c9, %c0_187] : memref<24x128xf32, #tpu.memory_space<vmem>>, vector<1x128xf32>
    %c0_188 = arith.constant 0 : index
    %c128_189 = arith.constant 128 : index
    %c0_190 = arith.constant 0 : index
    %324 = vector.load %arg2[%c0_188, %c128_189, %c0_190] : memref<2x256x128xf32, #tpu.memory_space<vmem>>, vector<1x128x128xf32>
    %325 = vector.shape_cast %324 : vector<1x128x128xf32> to vector<128x128xf32>
    %cst_191 = arith.constant dense<0.000000e+00> : vector<1x128xf32>
    %326 = tpu.matmul %303, %325, %cst_191 {dimension_numbers = #tpu.dot_dimension_numbers<[1], [0], [0], [1], [0, 0, 1, 1], [], []>} : vector<1x128xf32>, vector<128x128xf32>, vector<1x128xf32> -> vector<1x128xf32>
    %327 = arith.addf %323, %326 : vector<1x128xf32>
    %328 = math.tanh %327 : vector<1x128xf32>
    %329 = arith.mulf %8, %328 : vector<1x128xf32>
    %330 = arith.addf %329, %11 : vector<1x128xf32>
    %c96_i32_192 = arith.constant 96 : i32
    %331 = tpu.dynamic_rotate %330 by %c96_i32_192 dim 1 : vector<1x128xf32>, i32 -> vector<1x128xf32>
    %c64_i32_193 = arith.constant 64 : i32
    %332 = tpu.dynamic_rotate %330 by %c64_i32_193 dim 1 : vector<1x128xf32>, i32 -> vector<1x128xf32>
    %c32_i32_194 = arith.constant 32 : i32
    %333 = tpu.dynamic_rotate %330 by %c32_i32_194 dim 1 : vector<1x128xf32>, i32 -> vector<1x128xf32>
    %334 = arith.mulf %331, %301 : vector<1x128xf32>
    %335 = arith.mulf %330, %332 : vector<1x128xf32>
    %336 = arith.addf %334, %335 : vector<1x128xf32>
    %337 = math.tanh %336 : vector<1x128xf32>
    %338 = arith.mulf %333, %337 : vector<1x128xf32>
    %339 = tpu.concatenate %303, %321 in 1 : vector<1x128xf32>, vector<1x128xf32> -> vector<1x256xf32>
    %c1_195 = arith.constant 1 : index
    %c0_196 = arith.constant 0 : index
    %c0_197 = arith.constant 0 : index
    %340 = vector.load %arg2[%c1_195, %c0_196, %c0_197] : memref<2x256x128xf32, #tpu.memory_space<vmem>>, vector<1x256x128xf32>
    %341 = vector.shape_cast %340 : vector<1x256x128xf32> to vector<256x128xf32>
    %cst_198 = arith.constant dense<0.000000e+00> : vector<1x128xf32>
    %342 = tpu.matmul %339, %341, %cst_198 {dimension_numbers = #tpu.dot_dimension_numbers<[1], [0], [0], [1], [0, 0, 1, 1], [], []>} : vector<1x256xf32>, vector<256x128xf32>, vector<1x128xf32> -> vector<1x128xf32>
    %c1_199 = arith.constant 1 : index
    %c0_200 = arith.constant 0 : index
    %c0_201 = arith.constant 0 : index
    %343 = vector.load %arg3[%c1_199, %c0_200, %c0_201] : memref<2x1x128xf32, #tpu.memory_space<vmem>>, vector<1x1x128xf32>
    %344 = vector.shape_cast %343 : vector<1x1x128xf32> to vector<1x128xf32>
    %345 = arith.addf %342, %344 : vector<1x128xf32>
    %346 = math.tanh %345 : vector<1x128xf32>
    %347 = arith.mulf %8, %346 : vector<1x128xf32>
    %348 = arith.addf %347, %11 : vector<1x128xf32>
    %c96_i32_202 = arith.constant 96 : i32
    %349 = tpu.dynamic_rotate %348 by %c96_i32_202 dim 1 : vector<1x128xf32>, i32 -> vector<1x128xf32>
    %c64_i32_203 = arith.constant 64 : i32
    %350 = tpu.dynamic_rotate %348 by %c64_i32_203 dim 1 : vector<1x128xf32>, i32 -> vector<1x128xf32>
    %c32_i32_204 = arith.constant 32 : i32
    %351 = tpu.dynamic_rotate %348 by %c32_i32_204 dim 1 : vector<1x128xf32>, i32 -> vector<1x128xf32>
    %352 = arith.mulf %349, %319 : vector<1x128xf32>
    %353 = arith.mulf %348, %350 : vector<1x128xf32>
    %354 = arith.addf %352, %353 : vector<1x128xf32>
    %355 = math.tanh %354 : vector<1x128xf32>
    %356 = arith.mulf %351, %355 : vector<1x128xf32>
    %c8_205 = arith.constant 8 : index
    %c0_206 = arith.constant 0 : index
    %357 = vector.load %arg7[%c8_205, %c0_206] : memref<24x128xf32, #tpu.memory_space<vmem>>, vector<1x128xf32>
    tpu.vector_store %arg7[%c8_205, %c0_206], %356 {strides = array<i32>} : memref<24x128xf32, #tpu.memory_space<vmem>>, vector<1x128xf32>,
    %c10 = arith.constant 10 : index
    %c0_207 = arith.constant 0 : index
    %358 = vector.load %arg8[%c10, %c0_207] : memref<24x128xf32, #tpu.memory_space<vmem>>, vector<1x128xf32>
    %c0_208 = arith.constant 0 : index
    %c128_209 = arith.constant 128 : index
    %c0_210 = arith.constant 0 : index
    %359 = vector.load %arg2[%c0_208, %c128_209, %c0_210] : memref<2x256x128xf32, #tpu.memory_space<vmem>>, vector<1x128x128xf32>
    %360 = vector.shape_cast %359 : vector<1x128x128xf32> to vector<128x128xf32>
    %cst_211 = arith.constant dense<0.000000e+00> : vector<1x128xf32>
    %361 = tpu.matmul %338, %360, %cst_211 {dimension_numbers = #tpu.dot_dimension_numbers<[1], [0], [0], [1], [0, 0, 1, 1], [], []>} : vector<1x128xf32>, vector<128x128xf32>, vector<1x128xf32> -> vector<1x128xf32>
    %362 = arith.addf %358, %361 : vector<1x128xf32>
    %363 = math.tanh %362 : vector<1x128xf32>
    %364 = arith.mulf %8, %363 : vector<1x128xf32>
    %365 = arith.addf %364, %11 : vector<1x128xf32>
    %c96_i32_212 = arith.constant 96 : i32
    %366 = tpu.dynamic_rotate %365 by %c96_i32_212 dim 1 : vector<1x128xf32>, i32 -> vector<1x128xf32>
    %c64_i32_213 = arith.constant 64 : i32
    %367 = tpu.dynamic_rotate %365 by %c64_i32_213 dim 1 : vector<1x128xf32>, i32 -> vector<1x128xf32>
    %c32_i32_214 = arith.constant 32 : i32
    %368 = tpu.dynamic_rotate %365 by %c32_i32_214 dim 1 : vector<1x128xf32>, i32 -> vector<1x128xf32>
    %369 = arith.mulf %366, %336 : vector<1x128xf32>
    %370 = arith.mulf %365, %367 : vector<1x128xf32>
    %371 = arith.addf %369, %370 : vector<1x128xf32>
    %372 = math.tanh %371 : vector<1x128xf32>
    %373 = arith.mulf %368, %372 : vector<1x128xf32>
    %374 = tpu.concatenate %338, %356 in 1 : vector<1x128xf32>, vector<1x128xf32> -> vector<1x256xf32>
    %c1_215 = arith.constant 1 : index
    %c0_216 = arith.constant 0 : index
    %c0_217 = arith.constant 0 : index
    %375 = vector.load %arg2[%c1_215, %c0_216, %c0_217] : memref<2x256x128xf32, #tpu.memory_space<vmem>>, vector<1x256x128xf32>
    %376 = vector.shape_cast %375 : vector<1x256x128xf32> to vector<256x128xf32>
    %cst_218 = arith.constant dense<0.000000e+00> : vector<1x128xf32>
    %377 = tpu.matmul %374, %376, %cst_218 {dimension_numbers = #tpu.dot_dimension_numbers<[1], [0], [0], [1], [0, 0, 1, 1], [], []>} : vector<1x256xf32>, vector<256x128xf32>, vector<1x128xf32> -> vector<1x128xf32>
    %c1_219 = arith.constant 1 : index
    %c0_220 = arith.constant 0 : index
    %c0_221 = arith.constant 0 : index
    %378 = vector.load %arg3[%c1_219, %c0_220, %c0_221] : memref<2x1x128xf32, #tpu.memory_space<vmem>>, vector<1x1x128xf32>
    %379 = vector.shape_cast %378 : vector<1x1x128xf32> to vector<1x128xf32>
    %380 = arith.addf %377, %379 : vector<1x128xf32>
    %381 = math.tanh %380 : vector<1x128xf32>
    %382 = arith.mulf %8, %381 : vector<1x128xf32>
    %383 = arith.addf %382, %11 : vector<1x128xf32>
    %c96_i32_222 = arith.constant 96 : i32
    %384 = tpu.dynamic_rotate %383 by %c96_i32_222 dim 1 : vector<1x128xf32>, i32 -> vector<1x128xf32>
    %c64_i32_223 = arith.constant 64 : i32
    %385 = tpu.dynamic_rotate %383 by %c64_i32_223 dim 1 : vector<1x128xf32>, i32 -> vector<1x128xf32>
    %c32_i32_224 = arith.constant 32 : i32
    %386 = tpu.dynamic_rotate %383 by %c32_i32_224 dim 1 : vector<1x128xf32>, i32 -> vector<1x128xf32>
    %387 = arith.mulf %384, %354 : vector<1x128xf32>
    %388 = arith.mulf %383, %385 : vector<1x128xf32>
    %389 = arith.addf %387, %388 : vector<1x128xf32>
    %390 = math.tanh %389 : vector<1x128xf32>
    %391 = arith.mulf %386, %390 : vector<1x128xf32>
    %c9_225 = arith.constant 9 : index
    %c0_226 = arith.constant 0 : index
    %392 = vector.load %arg7[%c9_225, %c0_226] : memref<24x128xf32, #tpu.memory_space<vmem>>, vector<1x128xf32>
    tpu.vector_store %arg7[%c9_225, %c0_226], %391 {strides = array<i32>} : memref<24x128xf32, #tpu.memory_space<vmem>>, vector<1x128xf32>,
    %c11 = arith.constant 11 : index
    %c0_227 = arith.constant 0 : index
    %393 = vector.load %arg8[%c11, %c0_227] : memref<24x128xf32, #tpu.memory_space<vmem>>, vector<1x128xf32>
    %c0_228 = arith.constant 0 : index
    %c128_229 = arith.constant 128 : index
    %c0_230 = arith.constant 0 : index
    %394 = vector.load %arg2[%c0_228, %c128_229, %c0_230] : memref<2x256x128xf32, #tpu.memory_space<vmem>>, vector<1x128x128xf32>
    %395 = vector.shape_cast %394 : vector<1x128x128xf32> to vector<128x128xf32>
    %cst_231 = arith.constant dense<0.000000e+00> : vector<1x128xf32>
    %396 = tpu.matmul %373, %395, %cst_231 {dimension_numbers = #tpu.dot_dimension_numbers<[1], [0], [0], [1], [0, 0, 1, 1], [], []>} : vector<1x128xf32>, vector<128x128xf32>, vector<1x128xf32> -> vector<1x128xf32>
    %397 = arith.addf %393, %396 : vector<1x128xf32>
    %398 = math.tanh %397 : vector<1x128xf32>
    %399 = arith.mulf %8, %398 : vector<1x128xf32>
    %400 = arith.addf %399, %11 : vector<1x128xf32>
    %c96_i32_232 = arith.constant 96 : i32
    %401 = tpu.dynamic_rotate %400 by %c96_i32_232 dim 1 : vector<1x128xf32>, i32 -> vector<1x128xf32>
    %c64_i32_233 = arith.constant 64 : i32
    %402 = tpu.dynamic_rotate %400 by %c64_i32_233 dim 1 : vector<1x128xf32>, i32 -> vector<1x128xf32>
    %c32_i32_234 = arith.constant 32 : i32
    %403 = tpu.dynamic_rotate %400 by %c32_i32_234 dim 1 : vector<1x128xf32>, i32 -> vector<1x128xf32>
    %404 = arith.mulf %401, %371 : vector<1x128xf32>
    %405 = arith.mulf %400, %402 : vector<1x128xf32>
    %406 = arith.addf %404, %405 : vector<1x128xf32>
    %407 = math.tanh %406 : vector<1x128xf32>
    %408 = arith.mulf %403, %407 : vector<1x128xf32>
    %409 = tpu.concatenate %373, %391 in 1 : vector<1x128xf32>, vector<1x128xf32> -> vector<1x256xf32>
    %c1_235 = arith.constant 1 : index
    %c0_236 = arith.constant 0 : index
    %c0_237 = arith.constant 0 : index
    %410 = vector.load %arg2[%c1_235, %c0_236, %c0_237] : memref<2x256x128xf32, #tpu.memory_space<vmem>>, vector<1x256x128xf32>
    %411 = vector.shape_cast %410 : vector<1x256x128xf32> to vector<256x128xf32>
    %cst_238 = arith.constant dense<0.000000e+00> : vector<1x128xf32>
    %412 = tpu.matmul %409, %411, %cst_238 {dimension_numbers = #tpu.dot_dimension_numbers<[1], [0], [0], [1], [0, 0, 1, 1], [], []>} : vector<1x256xf32>, vector<256x128xf32>, vector<1x128xf32> -> vector<1x128xf32>
    %c1_239 = arith.constant 1 : index
    %c0_240 = arith.constant 0 : index
    %c0_241 = arith.constant 0 : index
    %413 = vector.load %arg3[%c1_239, %c0_240, %c0_241] : memref<2x1x128xf32, #tpu.memory_space<vmem>>, vector<1x1x128xf32>
    %414 = vector.shape_cast %413 : vector<1x1x128xf32> to vector<1x128xf32>
    %415 = arith.addf %412, %414 : vector<1x128xf32>
    %416 = math.tanh %415 : vector<1x128xf32>
    %417 = arith.mulf %8, %416 : vector<1x128xf32>
    %418 = arith.addf %417, %11 : vector<1x128xf32>
    %c96_i32_242 = arith.constant 96 : i32
    %419 = tpu.dynamic_rotate %418 by %c96_i32_242 dim 1 : vector<1x128xf32>, i32 -> vector<1x128xf32>
    %c64_i32_243 = arith.constant 64 : i32
    %420 = tpu.dynamic_rotate %418 by %c64_i32_243 dim 1 : vector<1x128xf32>, i32 -> vector<1x128xf32>
    %c32_i32_244 = arith.constant 32 : i32
    %421 = tpu.dynamic_rotate %418 by %c32_i32_244 dim 1 : vector<1x128xf32>, i32 -> vector<1x128xf32>
    %422 = arith.mulf %419, %389 : vector<1x128xf32>
    %423 = arith.mulf %418, %420 : vector<1x128xf32>
    %424 = arith.addf %422, %423 : vector<1x128xf32>
    %425 = math.tanh %424 : vector<1x128xf32>
    %426 = arith.mulf %421, %425 : vector<1x128xf32>
    %c10_245 = arith.constant 10 : index
    %c0_246 = arith.constant 0 : index
    %427 = vector.load %arg7[%c10_245, %c0_246] : memref<24x128xf32, #tpu.memory_space<vmem>>, vector<1x128xf32>
    tpu.vector_store %arg7[%c10_245, %c0_246], %426 {strides = array<i32>} : memref<24x128xf32, #tpu.memory_space<vmem>>, vector<1x128xf32>,
    %c12 = arith.constant 12 : index
    %c0_247 = arith.constant 0 : index
    %428 = vector.load %arg8[%c12, %c0_247] : memref<24x128xf32, #tpu.memory_space<vmem>>, vector<1x128xf32>
    %c0_248 = arith.constant 0 : index
    %c128_249 = arith.constant 128 : index
    %c0_250 = arith.constant 0 : index
    %429 = vector.load %arg2[%c0_248, %c128_249, %c0_250] : memref<2x256x128xf32, #tpu.memory_space<vmem>>, vector<1x128x128xf32>
    %430 = vector.shape_cast %429 : vector<1x128x128xf32> to vector<128x128xf32>
    %cst_251 = arith.constant dense<0.000000e+00> : vector<1x128xf32>
    %431 = tpu.matmul %408, %430, %cst_251 {dimension_numbers = #tpu.dot_dimension_numbers<[1], [0], [0], [1], [0, 0, 1, 1], [], []>} : vector<1x128xf32>, vector<128x128xf32>, vector<1x128xf32> -> vector<1x128xf32>
    %432 = arith.addf %428, %431 : vector<1x128xf32>
    %433 = math.tanh %432 : vector<1x128xf32>
    %434 = arith.mulf %8, %433 : vector<1x128xf32>
    %435 = arith.addf %434, %11 : vector<1x128xf32>
    %c96_i32_252 = arith.constant 96 : i32
    %436 = tpu.dynamic_rotate %435 by %c96_i32_252 dim 1 : vector<1x128xf32>, i32 -> vector<1x128xf32>
    %c64_i32_253 = arith.constant 64 : i32
    %437 = tpu.dynamic_rotate %435 by %c64_i32_253 dim 1 : vector<1x128xf32>, i32 -> vector<1x128xf32>
    %c32_i32_254 = arith.constant 32 : i32
    %438 = tpu.dynamic_rotate %435 by %c32_i32_254 dim 1 : vector<1x128xf32>, i32 -> vector<1x128xf32>
    %439 = arith.mulf %436, %406 : vector<1x128xf32>
    %440 = arith.mulf %435, %437 : vector<1x128xf32>
    %441 = arith.addf %439, %440 : vector<1x128xf32>
    %442 = math.tanh %441 : vector<1x128xf32>
    %443 = arith.mulf %438, %442 : vector<1x128xf32>
    %444 = tpu.concatenate %408, %426 in 1 : vector<1x128xf32>, vector<1x128xf32> -> vector<1x256xf32>
    %c1_255 = arith.constant 1 : index
    %c0_256 = arith.constant 0 : index
    %c0_257 = arith.constant 0 : index
    %445 = vector.load %arg2[%c1_255, %c0_256, %c0_257] : memref<2x256x128xf32, #tpu.memory_space<vmem>>, vector<1x256x128xf32>
    %446 = vector.shape_cast %445 : vector<1x256x128xf32> to vector<256x128xf32>
    %cst_258 = arith.constant dense<0.000000e+00> : vector<1x128xf32>
    %447 = tpu.matmul %444, %446, %cst_258 {dimension_numbers = #tpu.dot_dimension_numbers<[1], [0], [0], [1], [0, 0, 1, 1], [], []>} : vector<1x256xf32>, vector<256x128xf32>, vector<1x128xf32> -> vector<1x128xf32>
    %c1_259 = arith.constant 1 : index
    %c0_260 = arith.constant 0 : index
    %c0_261 = arith.constant 0 : index
    %448 = vector.load %arg3[%c1_259, %c0_260, %c0_261] : memref<2x1x128xf32, #tpu.memory_space<vmem>>, vector<1x1x128xf32>
    %449 = vector.shape_cast %448 : vector<1x1x128xf32> to vector<1x128xf32>
    %450 = arith.addf %447, %449 : vector<1x128xf32>
    %451 = math.tanh %450 : vector<1x128xf32>
    %452 = arith.mulf %8, %451 : vector<1x128xf32>
    %453 = arith.addf %452, %11 : vector<1x128xf32>
    %c96_i32_262 = arith.constant 96 : i32
    %454 = tpu.dynamic_rotate %453 by %c96_i32_262 dim 1 : vector<1x128xf32>, i32 -> vector<1x128xf32>
    %c64_i32_263 = arith.constant 64 : i32
    %455 = tpu.dynamic_rotate %453 by %c64_i32_263 dim 1 : vector<1x128xf32>, i32 -> vector<1x128xf32>
    %c32_i32_264 = arith.constant 32 : i32
    %456 = tpu.dynamic_rotate %453 by %c32_i32_264 dim 1 : vector<1x128xf32>, i32 -> vector<1x128xf32>
    %457 = arith.mulf %454, %424 : vector<1x128xf32>
    %458 = arith.mulf %453, %455 : vector<1x128xf32>
    %459 = arith.addf %457, %458 : vector<1x128xf32>
    %460 = math.tanh %459 : vector<1x128xf32>
    %461 = arith.mulf %456, %460 : vector<1x128xf32>
    %c11_265 = arith.constant 11 : index
    %c0_266 = arith.constant 0 : index
    %462 = vector.load %arg7[%c11_265, %c0_266] : memref<24x128xf32, #tpu.memory_space<vmem>>, vector<1x128xf32>
    tpu.vector_store %arg7[%c11_265, %c0_266], %461 {strides = array<i32>} : memref<24x128xf32, #tpu.memory_space<vmem>>, vector<1x128xf32>,
    %c13 = arith.constant 13 : index
    %c0_267 = arith.constant 0 : index
    %463 = vector.load %arg8[%c13, %c0_267] : memref<24x128xf32, #tpu.memory_space<vmem>>, vector<1x128xf32>
    %c0_268 = arith.constant 0 : index
    %c128_269 = arith.constant 128 : index
    %c0_270 = arith.constant 0 : index
    %464 = vector.load %arg2[%c0_268, %c128_269, %c0_270] : memref<2x256x128xf32, #tpu.memory_space<vmem>>, vector<1x128x128xf32>
    %465 = vector.shape_cast %464 : vector<1x128x128xf32> to vector<128x128xf32>
    %cst_271 = arith.constant dense<0.000000e+00> : vector<1x128xf32>
    %466 = tpu.matmul %443, %465, %cst_271 {dimension_numbers = #tpu.dot_dimension_numbers<[1], [0], [0], [1], [0, 0, 1, 1], [], []>} : vector<1x128xf32>, vector<128x128xf32>, vector<1x128xf32> -> vector<1x128xf32>
    %467 = arith.addf %463, %466 : vector<1x128xf32>
    %468 = math.tanh %467 : vector<1x128xf32>
    %469 = arith.mulf %8, %468 : vector<1x128xf32>
    %470 = arith.addf %469, %11 : vector<1x128xf32>
    %c96_i32_272 = arith.constant 96 : i32
    %471 = tpu.dynamic_rotate %470 by %c96_i32_272 dim 1 : vector<1x128xf32>, i32 -> vector<1x128xf32>
    %c64_i32_273 = arith.constant 64 : i32
    %472 = tpu.dynamic_rotate %470 by %c64_i32_273 dim 1 : vector<1x128xf32>, i32 -> vector<1x128xf32>
    %c32_i32_274 = arith.constant 32 : i32
    %473 = tpu.dynamic_rotate %470 by %c32_i32_274 dim 1 : vector<1x128xf32>, i32 -> vector<1x128xf32>
    %474 = arith.mulf %471, %441 : vector<1x128xf32>
    %475 = arith.mulf %470, %472 : vector<1x128xf32>
    %476 = arith.addf %474, %475 : vector<1x128xf32>
    %477 = math.tanh %476 : vector<1x128xf32>
    %478 = arith.mulf %473, %477 : vector<1x128xf32>
    %479 = tpu.concatenate %443, %461 in 1 : vector<1x128xf32>, vector<1x128xf32> -> vector<1x256xf32>
    %c1_275 = arith.constant 1 : index
    %c0_276 = arith.constant 0 : index
    %c0_277 = arith.constant 0 : index
    %480 = vector.load %arg2[%c1_275, %c0_276, %c0_277] : memref<2x256x128xf32, #tpu.memory_space<vmem>>, vector<1x256x128xf32>
    %481 = vector.shape_cast %480 : vector<1x256x128xf32> to vector<256x128xf32>
    %cst_278 = arith.constant dense<0.000000e+00> : vector<1x128xf32>
    %482 = tpu.matmul %479, %481, %cst_278 {dimension_numbers = #tpu.dot_dimension_numbers<[1], [0], [0], [1], [0, 0, 1, 1], [], []>} : vector<1x256xf32>, vector<256x128xf32>, vector<1x128xf32> -> vector<1x128xf32>
    %c1_279 = arith.constant 1 : index
    %c0_280 = arith.constant 0 : index
    %c0_281 = arith.constant 0 : index
    %483 = vector.load %arg3[%c1_279, %c0_280, %c0_281] : memref<2x1x128xf32, #tpu.memory_space<vmem>>, vector<1x1x128xf32>
    %484 = vector.shape_cast %483 : vector<1x1x128xf32> to vector<1x128xf32>
    %485 = arith.addf %482, %484 : vector<1x128xf32>
    %486 = math.tanh %485 : vector<1x128xf32>
    %487 = arith.mulf %8, %486 : vector<1x128xf32>
    %488 = arith.addf %487, %11 : vector<1x128xf32>
    %c96_i32_282 = arith.constant 96 : i32
    %489 = tpu.dynamic_rotate %488 by %c96_i32_282 dim 1 : vector<1x128xf32>, i32 -> vector<1x128xf32>
    %c64_i32_283 = arith.constant 64 : i32
    %490 = tpu.dynamic_rotate %488 by %c64_i32_283 dim 1 : vector<1x128xf32>, i32 -> vector<1x128xf32>
    %c32_i32_284 = arith.constant 32 : i32
    %491 = tpu.dynamic_rotate %488 by %c32_i32_284 dim 1 : vector<1x128xf32>, i32 -> vector<1x128xf32>
    %492 = arith.mulf %489, %459 : vector<1x128xf32>
    %493 = arith.mulf %488, %490 : vector<1x128xf32>
    %494 = arith.addf %492, %493 : vector<1x128xf32>
    %495 = math.tanh %494 : vector<1x128xf32>
    %496 = arith.mulf %491, %495 : vector<1x128xf32>
    %c12_285 = arith.constant 12 : index
    %c0_286 = arith.constant 0 : index
    %497 = vector.load %arg7[%c12_285, %c0_286] : memref<24x128xf32, #tpu.memory_space<vmem>>, vector<1x128xf32>
    tpu.vector_store %arg7[%c12_285, %c0_286], %496 {strides = array<i32>} : memref<24x128xf32, #tpu.memory_space<vmem>>, vector<1x128xf32>,
    %c14 = arith.constant 14 : index
    %c0_287 = arith.constant 0 : index
    %498 = vector.load %arg8[%c14, %c0_287] : memref<24x128xf32, #tpu.memory_space<vmem>>, vector<1x128xf32>
    %c0_288 = arith.constant 0 : index
    %c128_289 = arith.constant 128 : index
    %c0_290 = arith.constant 0 : index
    %499 = vector.load %arg2[%c0_288, %c128_289, %c0_290] : memref<2x256x128xf32, #tpu.memory_space<vmem>>, vector<1x128x128xf32>
    %500 = vector.shape_cast %499 : vector<1x128x128xf32> to vector<128x128xf32>
    %cst_291 = arith.constant dense<0.000000e+00> : vector<1x128xf32>
    %501 = tpu.matmul %478, %500, %cst_291 {dimension_numbers = #tpu.dot_dimension_numbers<[1], [0], [0], [1], [0, 0, 1, 1], [], []>} : vector<1x128xf32>, vector<128x128xf32>, vector<1x128xf32> -> vector<1x128xf32>
    %502 = arith.addf %498, %501 : vector<1x128xf32>
    %503 = math.tanh %502 : vector<1x128xf32>
    %504 = arith.mulf %8, %503 : vector<1x128xf32>
    %505 = arith.addf %504, %11 : vector<1x128xf32>
    %c96_i32_292 = arith.constant 96 : i32
    %506 = tpu.dynamic_rotate %505 by %c96_i32_292 dim 1 : vector<1x128xf32>, i32 -> vector<1x128xf32>
    %c64_i32_293 = arith.constant 64 : i32
    %507 = tpu.dynamic_rotate %505 by %c64_i32_293 dim 1 : vector<1x128xf32>, i32 -> vector<1x128xf32>
    %c32_i32_294 = arith.constant 32 : i32
    %508 = tpu.dynamic_rotate %505 by %c32_i32_294 dim 1 : vector<1x128xf32>, i32 -> vector<1x128xf32>
    %509 = arith.mulf %506, %476 : vector<1x128xf32>
    %510 = arith.mulf %505, %507 : vector<1x128xf32>
    %511 = arith.addf %509, %510 : vector<1x128xf32>
    %512 = math.tanh %511 : vector<1x128xf32>
    %513 = arith.mulf %508, %512 : vector<1x128xf32>
    %514 = tpu.concatenate %478, %496 in 1 : vector<1x128xf32>, vector<1x128xf32> -> vector<1x256xf32>
    %c1_295 = arith.constant 1 : index
    %c0_296 = arith.constant 0 : index
    %c0_297 = arith.constant 0 : index
    %515 = vector.load %arg2[%c1_295, %c0_296, %c0_297] : memref<2x256x128xf32, #tpu.memory_space<vmem>>, vector<1x256x128xf32>
    %516 = vector.shape_cast %515 : vector<1x256x128xf32> to vector<256x128xf32>
    %cst_298 = arith.constant dense<0.000000e+00> : vector<1x128xf32>
    %517 = tpu.matmul %514, %516, %cst_298 {dimension_numbers = #tpu.dot_dimension_numbers<[1], [0], [0], [1], [0, 0, 1, 1], [], []>} : vector<1x256xf32>, vector<256x128xf32>, vector<1x128xf32> -> vector<1x128xf32>
    %c1_299 = arith.constant 1 : index
    %c0_300 = arith.constant 0 : index
    %c0_301 = arith.constant 0 : index
    %518 = vector.load %arg3[%c1_299, %c0_300, %c0_301] : memref<2x1x128xf32, #tpu.memory_space<vmem>>, vector<1x1x128xf32>
    %519 = vector.shape_cast %518 : vector<1x1x128xf32> to vector<1x128xf32>
    %520 = arith.addf %517, %519 : vector<1x128xf32>
    %521 = math.tanh %520 : vector<1x128xf32>
    %522 = arith.mulf %8, %521 : vector<1x128xf32>
    %523 = arith.addf %522, %11 : vector<1x128xf32>
    %c96_i32_302 = arith.constant 96 : i32
    %524 = tpu.dynamic_rotate %523 by %c96_i32_302 dim 1 : vector<1x128xf32>, i32 -> vector<1x128xf32>
    %c64_i32_303 = arith.constant 64 : i32
    %525 = tpu.dynamic_rotate %523 by %c64_i32_303 dim 1 : vector<1x128xf32>, i32 -> vector<1x128xf32>
    %c32_i32_304 = arith.constant 32 : i32
    %526 = tpu.dynamic_rotate %523 by %c32_i32_304 dim 1 : vector<1x128xf32>, i32 -> vector<1x128xf32>
    %527 = arith.mulf %524, %494 : vector<1x128xf32>
    %528 = arith.mulf %523, %525 : vector<1x128xf32>
    %529 = arith.addf %527, %528 : vector<1x128xf32>
    %530 = math.tanh %529 : vector<1x128xf32>
    %531 = arith.mulf %526, %530 : vector<1x128xf32>
    %c13_305 = arith.constant 13 : index
    %c0_306 = arith.constant 0 : index
    %532 = vector.load %arg7[%c13_305, %c0_306] : memref<24x128xf32, #tpu.memory_space<vmem>>, vector<1x128xf32>
    tpu.vector_store %arg7[%c13_305, %c0_306], %531 {strides = array<i32>} : memref<24x128xf32, #tpu.memory_space<vmem>>, vector<1x128xf32>,
    %c15 = arith.constant 15 : index
    %c0_307 = arith.constant 0 : index
    %533 = vector.load %arg8[%c15, %c0_307] : memref<24x128xf32, #tpu.memory_space<vmem>>, vector<1x128xf32>
    %c0_308 = arith.constant 0 : index
    %c128_309 = arith.constant 128 : index
    %c0_310 = arith.constant 0 : index
    %534 = vector.load %arg2[%c0_308, %c128_309, %c0_310] : memref<2x256x128xf32, #tpu.memory_space<vmem>>, vector<1x128x128xf32>
    %535 = vector.shape_cast %534 : vector<1x128x128xf32> to vector<128x128xf32>
    %cst_311 = arith.constant dense<0.000000e+00> : vector<1x128xf32>
    %536 = tpu.matmul %513, %535, %cst_311 {dimension_numbers = #tpu.dot_dimension_numbers<[1], [0], [0], [1], [0, 0, 1, 1], [], []>} : vector<1x128xf32>, vector<128x128xf32>, vector<1x128xf32> -> vector<1x128xf32>
    %537 = arith.addf %533, %536 : vector<1x128xf32>
    %538 = math.tanh %537 : vector<1x128xf32>
    %539 = arith.mulf %8, %538 : vector<1x128xf32>
    %540 = arith.addf %539, %11 : vector<1x128xf32>
    %c96_i32_312 = arith.constant 96 : i32
    %541 = tpu.dynamic_rotate %540 by %c96_i32_312 dim 1 : vector<1x128xf32>, i32 -> vector<1x128xf32>
    %c64_i32_313 = arith.constant 64 : i32
    %542 = tpu.dynamic_rotate %540 by %c64_i32_313 dim 1 : vector<1x128xf32>, i32 -> vector<1x128xf32>
    %c32_i32_314 = arith.constant 32 : i32
    %543 = tpu.dynamic_rotate %540 by %c32_i32_314 dim 1 : vector<1x128xf32>, i32 -> vector<1x128xf32>
    %544 = arith.mulf %541, %511 : vector<1x128xf32>
    %545 = arith.mulf %540, %542 : vector<1x128xf32>
    %546 = arith.addf %544, %545 : vector<1x128xf32>
    %547 = math.tanh %546 : vector<1x128xf32>
    %548 = arith.mulf %543, %547 : vector<1x128xf32>
    %549 = tpu.concatenate %513, %531 in 1 : vector<1x128xf32>, vector<1x128xf32> -> vector<1x256xf32>
    %c1_315 = arith.constant 1 : index
    %c0_316 = arith.constant 0 : index
    %c0_317 = arith.constant 0 : index
    %550 = vector.load %arg2[%c1_315, %c0_316, %c0_317] : memref<2x256x128xf32, #tpu.memory_space<vmem>>, vector<1x256x128xf32>
    %551 = vector.shape_cast %550 : vector<1x256x128xf32> to vector<256x128xf32>
    %cst_318 = arith.constant dense<0.000000e+00> : vector<1x128xf32>
    %552 = tpu.matmul %549, %551, %cst_318 {dimension_numbers = #tpu.dot_dimension_numbers<[1], [0], [0], [1], [0, 0, 1, 1], [], []>} : vector<1x256xf32>, vector<256x128xf32>, vector<1x128xf32> -> vector<1x128xf32>
    %c1_319 = arith.constant 1 : index
    %c0_320 = arith.constant 0 : index
    %c0_321 = arith.constant 0 : index
    %553 = vector.load %arg3[%c1_319, %c0_320, %c0_321] : memref<2x1x128xf32, #tpu.memory_space<vmem>>, vector<1x1x128xf32>
    %554 = vector.shape_cast %553 : vector<1x1x128xf32> to vector<1x128xf32>
    %555 = arith.addf %552, %554 : vector<1x128xf32>
    %556 = math.tanh %555 : vector<1x128xf32>
    %557 = arith.mulf %8, %556 : vector<1x128xf32>
    %558 = arith.addf %557, %11 : vector<1x128xf32>
    %c96_i32_322 = arith.constant 96 : i32
    %559 = tpu.dynamic_rotate %558 by %c96_i32_322 dim 1 : vector<1x128xf32>, i32 -> vector<1x128xf32>
    %c64_i32_323 = arith.constant 64 : i32
    %560 = tpu.dynamic_rotate %558 by %c64_i32_323 dim 1 : vector<1x128xf32>, i32 -> vector<1x128xf32>
    %c32_i32_324 = arith.constant 32 : i32
    %561 = tpu.dynamic_rotate %558 by %c32_i32_324 dim 1 : vector<1x128xf32>, i32 -> vector<1x128xf32>
    %562 = arith.mulf %559, %529 : vector<1x128xf32>
    %563 = arith.mulf %558, %560 : vector<1x128xf32>
    %564 = arith.addf %562, %563 : vector<1x128xf32>
    %565 = math.tanh %564 : vector<1x128xf32>
    %566 = arith.mulf %561, %565 : vector<1x128xf32>
    %c14_325 = arith.constant 14 : index
    %c0_326 = arith.constant 0 : index
    %567 = vector.load %arg7[%c14_325, %c0_326] : memref<24x128xf32, #tpu.memory_space<vmem>>, vector<1x128xf32>
    tpu.vector_store %arg7[%c14_325, %c0_326], %566 {strides = array<i32>} : memref<24x128xf32, #tpu.memory_space<vmem>>, vector<1x128xf32>,
    %c16 = arith.constant 16 : index
    %c0_327 = arith.constant 0 : index
    %568 = vector.load %arg8[%c16, %c0_327] : memref<24x128xf32, #tpu.memory_space<vmem>>, vector<1x128xf32>
    %c0_328 = arith.constant 0 : index
    %c128_329 = arith.constant 128 : index
    %c0_330 = arith.constant 0 : index
    %569 = vector.load %arg2[%c0_328, %c128_329, %c0_330] : memref<2x256x128xf32, #tpu.memory_space<vmem>>, vector<1x128x128xf32>
    %570 = vector.shape_cast %569 : vector<1x128x128xf32> to vector<128x128xf32>
    %cst_331 = arith.constant dense<0.000000e+00> : vector<1x128xf32>
    %571 = tpu.matmul %548, %570, %cst_331 {dimension_numbers = #tpu.dot_dimension_numbers<[1], [0], [0], [1], [0, 0, 1, 1], [], []>} : vector<1x128xf32>, vector<128x128xf32>, vector<1x128xf32> -> vector<1x128xf32>
    %572 = arith.addf %568, %571 : vector<1x128xf32>
    %573 = math.tanh %572 : vector<1x128xf32>
    %574 = arith.mulf %8, %573 : vector<1x128xf32>
    %575 = arith.addf %574, %11 : vector<1x128xf32>
    %c96_i32_332 = arith.constant 96 : i32
    %576 = tpu.dynamic_rotate %575 by %c96_i32_332 dim 1 : vector<1x128xf32>, i32 -> vector<1x128xf32>
    %c64_i32_333 = arith.constant 64 : i32
    %577 = tpu.dynamic_rotate %575 by %c64_i32_333 dim 1 : vector<1x128xf32>, i32 -> vector<1x128xf32>
    %c32_i32_334 = arith.constant 32 : i32
    %578 = tpu.dynamic_rotate %575 by %c32_i32_334 dim 1 : vector<1x128xf32>, i32 -> vector<1x128xf32>
    %579 = arith.mulf %576, %546 : vector<1x128xf32>
    %580 = arith.mulf %575, %577 : vector<1x128xf32>
    %581 = arith.addf %579, %580 : vector<1x128xf32>
    %582 = math.tanh %581 : vector<1x128xf32>
    %583 = arith.mulf %578, %582 : vector<1x128xf32>
    %584 = tpu.concatenate %548, %566 in 1 : vector<1x128xf32>, vector<1x128xf32> -> vector<1x256xf32>
    %c1_335 = arith.constant 1 : index
    %c0_336 = arith.constant 0 : index
    %c0_337 = arith.constant 0 : index
    %585 = vector.load %arg2[%c1_335, %c0_336, %c0_337] : memref<2x256x128xf32, #tpu.memory_space<vmem>>, vector<1x256x128xf32>
    %586 = vector.shape_cast %585 : vector<1x256x128xf32> to vector<256x128xf32>
    %cst_338 = arith.constant dense<0.000000e+00> : vector<1x128xf32>
    %587 = tpu.matmul %584, %586, %cst_338 {dimension_numbers = #tpu.dot_dimension_numbers<[1], [0], [0], [1], [0, 0, 1, 1], [], []>} : vector<1x256xf32>, vector<256x128xf32>, vector<1x128xf32> -> vector<1x128xf32>
    %c1_339 = arith.constant 1 : index
    %c0_340 = arith.constant 0 : index
    %c0_341 = arith.constant 0 : index
    %588 = vector.load %arg3[%c1_339, %c0_340, %c0_341] : memref<2x1x128xf32, #tpu.memory_space<vmem>>, vector<1x1x128xf32>
    %589 = vector.shape_cast %588 : vector<1x1x128xf32> to vector<1x128xf32>
    %590 = arith.addf %587, %589 : vector<1x128xf32>
    %591 = math.tanh %590 : vector<1x128xf32>
    %592 = arith.mulf %8, %591 : vector<1x128xf32>
    %593 = arith.addf %592, %11 : vector<1x128xf32>
    %c96_i32_342 = arith.constant 96 : i32
    %594 = tpu.dynamic_rotate %593 by %c96_i32_342 dim 1 : vector<1x128xf32>, i32 -> vector<1x128xf32>
    %c64_i32_343 = arith.constant 64 : i32
    %595 = tpu.dynamic_rotate %593 by %c64_i32_343 dim 1 : vector<1x128xf32>, i32 -> vector<1x128xf32>
    %c32_i32_344 = arith.constant 32 : i32
    %596 = tpu.dynamic_rotate %593 by %c32_i32_344 dim 1 : vector<1x128xf32>, i32 -> vector<1x128xf32>
    %597 = arith.mulf %594, %564 : vector<1x128xf32>
    %598 = arith.mulf %593, %595 : vector<1x128xf32>
    %599 = arith.addf %597, %598 : vector<1x128xf32>
    %600 = math.tanh %599 : vector<1x128xf32>
    %601 = arith.mulf %596, %600 : vector<1x128xf32>
    %c15_345 = arith.constant 15 : index
    %c0_346 = arith.constant 0 : index
    %602 = vector.load %arg7[%c15_345, %c0_346] : memref<24x128xf32, #tpu.memory_space<vmem>>, vector<1x128xf32>
    tpu.vector_store %arg7[%c15_345, %c0_346], %601 {strides = array<i32>} : memref<24x128xf32, #tpu.memory_space<vmem>>, vector<1x128xf32>,
    %603 = tpu.concatenate %583, %601 in 1 : vector<1x128xf32>, vector<1x128xf32> -> vector<1x256xf32>
    %c1_347 = arith.constant 1 : index
    %c0_348 = arith.constant 0 : index
    %c0_349 = arith.constant 0 : index
    %604 = vector.load %arg2[%c1_347, %c0_348, %c0_349] : memref<2x256x128xf32, #tpu.memory_space<vmem>>, vector<1x256x128xf32>
    %605 = vector.shape_cast %604 : vector<1x256x128xf32> to vector<256x128xf32>
    %cst_350 = arith.constant dense<0.000000e+00> : vector<1x128xf32>
    %606 = tpu.matmul %603, %605, %cst_350 {dimension_numbers = #tpu.dot_dimension_numbers<[1], [0], [0], [1], [0, 0, 1, 1], [], []>} : vector<1x256xf32>, vector<256x128xf32>, vector<1x128xf32> -> vector<1x128xf32>
    %c1_351 = arith.constant 1 : index
    %c0_352 = arith.constant 0 : index
    %c0_353 = arith.constant 0 : index
    %607 = vector.load %arg3[%c1_351, %c0_352, %c0_353] : memref<2x1x128xf32, #tpu.memory_space<vmem>>, vector<1x1x128xf32>
    %608 = vector.shape_cast %607 : vector<1x1x128xf32> to vector<1x128xf32>
    %609 = arith.addf %606, %608 : vector<1x128xf32>
    %610 = math.tanh %609 : vector<1x128xf32>
    %611 = arith.mulf %8, %610 : vector<1x128xf32>
    %612 = arith.addf %611, %11 : vector<1x128xf32>
    %c96_i32_354 = arith.constant 96 : i32
    %613 = tpu.dynamic_rotate %612 by %c96_i32_354 dim 1 : vector<1x128xf32>, i32 -> vector<1x128xf32>
    %c64_i32_355 = arith.constant 64 : i32
    %614 = tpu.dynamic_rotate %612 by %c64_i32_355 dim 1 : vector<1x128xf32>, i32 -> vector<1x128xf32>
    %c32_i32_356 = arith.constant 32 : i32
    %615 = tpu.dynamic_rotate %612 by %c32_i32_356 dim 1 : vector<1x128xf32>, i32 -> vector<1x128xf32>
    %616 = arith.mulf %613, %599 : vector<1x128xf32>
    %617 = arith.mulf %612, %614 : vector<1x128xf32>
    %618 = arith.addf %616, %617 : vector<1x128xf32>
    %619 = math.tanh %618 : vector<1x128xf32>
    %620 = arith.mulf %615, %619 : vector<1x128xf32>
    %c16_357 = arith.constant 16 : index
    %c0_358 = arith.constant 0 : index
    %621 = vector.load %arg7[%c16_357, %c0_358] : memref<24x128xf32, #tpu.memory_space<vmem>>, vector<1x128xf32>
    tpu.vector_store %arg7[%c16_357, %c0_358], %620 {strides = array<i32>} : memref<24x128xf32, #tpu.memory_space<vmem>>, vector<1x128xf32>,
    %c0_359 = arith.constant 0 : index
    %c0_360 = arith.constant 0 : index
    %622 = vector.load %arg7[%c0_359, %c0_360] : memref<24x128xf32, #tpu.memory_space<vmem>>, vector<24x128xf32>
    %c0_361 = arith.constant 0 : index
    %c0_362 = arith.constant 0 : index
    %623 = vector.load %arg4[%c0_361, %c0_362] : memref<128x128xf32, #tpu.memory_space<vmem>>, vector<128x128xf32>
    %cst_363 = arith.constant dense<0.000000e+00> : vector<24x128xf32>
    %624 = tpu.matmul %622, %623, %cst_363 {dimension_numbers = #tpu.dot_dimension_numbers<[1], [0], [0], [1], [0, 0, 1, 1], [], []>} : vector<24x128xf32>, vector<128x128xf32>, vector<24x128xf32> -> vector<24x128xf32>
    %c0_364 = arith.constant 0 : index
    %c0_365 = arith.constant 0 : index
    %625 = vector.load %arg5[%c0_364, %c0_365] : memref<1x128xf32, #tpu.memory_space<vmem>>, vector<1x128xf32>
    %626 = vector.broadcast %625 : vector<1x128xf32> to vector<24x128xf32>
    %627 = arith.addf %624, %626 : vector<24x128xf32>
    %c0_366 = arith.constant 0 : index
    %c0_367 = arith.constant 0 : index
    %628 = vector.load %arg6[%c0_366, %c0_367] : memref<24x128xf32, #tpu.memory_space<vmem>>, vector<24x128xf32>
    tpu.vector_store %arg6[%c0_366, %c0_367], %627 {strides = array<i32>} : memref<24x128xf32, #tpu.memory_space<vmem>>, vector<24x128xf32>,
    return
  }
  func.func @transform_0(%arg0: i32) -> (i32, i32) {
    %c0_i32 = arith.constant 0 : i32
    %c0_i32_0 = arith.constant 0 : i32
    %c0_i32_1 = arith.constant 0 : i32
    return %c0_i32, %c0_i32_0 : i32, i32
  }
  func.func @transform_1(%arg0: i32) -> (i32, i32, i32) {
    %c0_i32 = arith.constant 0 : i32
    %c0_i32_0 = arith.constant 0 : i32
    %c0_i32_1 = arith.constant 0 : i32
    %c0_i32_2 = arith.constant 0 : i32
    return %c0_i32, %c0_i32_0, %c0_i32_1 : i32, i32, i32
  }
  func.func @transform_2(%arg0: i32) -> (i32, i32, i32) {
    %c0_i32 = arith.constant 0 : i32
    %c0_i32_0 = arith.constant 0 : i32
    %c0_i32_1 = arith.constant 0 : i32
    %c0_i32_2 = arith.constant 0 : i32
    return %c0_i32, %c0_i32_0, %c0_i32_1 : i32, i32, i32
  }
  func.func @transform_3(%arg0: i32) -> (i32, i32) {
    %c0_i32 = arith.constant 0 : i32
    %c0_i32_0 = arith.constant 0 : i32
    %c0_i32_1 = arith.constant 0 : i32
    return %c0_i32, %c0_i32_0 : i32, i32
  }
  func.func @transform_4(%arg0: i32) -> (i32, i32) {
    %c0_i32 = arith.constant 0 : i32
    %c0_i32_0 = arith.constant 0 : i32
    %c0_i32_1 = arith.constant 0 : i32
    return %c0_i32, %c0_i32_0 : i32, i32
  }
  func.func @transform_5(%arg0: i32) -> (i32, i32) {
    %c0_i32 = arith.constant 0 : i32
    %c0_i32_0 = arith.constant 0 : i32
    %c0_i32_1 = arith.constant 0 : i32
    return %c0_i32, %c0_i32_0 : i32, i32
  }
}

</mosaic_0001>

<llo_original>
// kernel: rnn_forward.1
$region0: #{rnn_forward.1}
  #allocation0 [shape = 'u32[]', space=smem, size = 0x4, offset = 0x4, fixed_abs, tag = 'smem constant byte address 0x4 - core index']
  #allocation1 [shape = 'u32[144,128]{1,0:T(1,128)}', space=vmem, size = 0x12000, scoped, tag = 'internal scratch']
  #allocation2 [shape = 'f32[24,128]{1,0:T(8,128)}', space=vmem, size = 0x3000, scoped, tag = 'scratch operand']
  #allocation3 [shape = 'f32[24,128]{1,0:T(8,128)}', space=vmem, size = 0x3000, scoped, tag = 'scratch operand']
  %s0 = inlined_call_operand.vmem [shape: f32[24,128], index: 0, kind: input, shape index: {}]
  %s1 = inlined_call_operand.hbm [shape: f32[2,256,128], index: 1, kind: input, shape index: {}]
  %s2 = inlined_call_operand.vmem [shape: f32[2,1,128], index: 2, kind: input, shape index: {}]
  %s3 = inlined_call_operand.vmem [shape: f32[128,128], index: 3, kind: input, shape index: {}]
  %s4 = inlined_call_operand.vmem [shape: f32[1,128], index: 4, kind: input, shape index: {}]
  %s5 = inlined_call_operand.hbm [shape: f32[24,128], index: 5, kind: output, shape index: {}]
  %s6 = sld [smem:[#allocation0]]
  $region34: #{rnn_forward.1} parent=0
    _
  %s8 = ssub.s32 1, %s6
  %s9 = scalar_select 0, %s8, %s6
  $region1: #{rnn_forward.1} parent=0
    #allocation4 [shape = 'u8[262144]{0}', space=vmem, size = 0x40000, scoped, tag = 'input window, operand 1, single buffered']
    #allocation5 [shape = 's32[1]{0}', space=sflag, size = 0x4, scoped, tag = 'scoped memory for rnn_forward.1']
    #allocation6 [shape = 's32[1]{0}', space=sflag, size = 0x4, scoped, tag = 'scoped memory for rnn_forward.1']
    #allocation7 [shape = 'u8[12288]{0}', space=vmem, size = 0x3000, scoped, tag = 'output window, operand 0, single buffered']
    %10 = vsyncpa [#allocation5], 0
    %11 = vsyncpa [#allocation6], 0
    // Predicated region
    $region2: #{rnn_forward.1} parent=1 // pred_check
      _
    $region3: #{rnn_forward.1} parent=1 // pred_check_branch
      %13 = sbr.rel (0) target = $region5
    $region4: #{rnn_forward.1} parent=1 // pred_region
      _
    $region5: #{rnn_forward.1} parent=1 // pred_fallthru
      _
    // Predicated region
    $region6: #{rnn_forward.1} parent=1 // pred_check
      _
    $region7: #{rnn_forward.1} parent=1 // pred_check_branch
      %15 = sbr.rel (0) target = $region9
    $region8: #{rnn_forward.1} parent=1 // pred_region
      %s17 = ssub.s32 8192, 8192
      %18 = vsyncadd [#allocation5], %s17
      %s19 = sshll.u32 [#allocation4], 4
      %s20 = int_to_ptr.vmem [resolvable:$true] %s19
      %25 = dma.hbm_to_vmem [thread:$0]  %s1, 8192, %s20, [#allocation5], 128, 128, 8
    $region9: #{rnn_forward.1} parent=1 // pred_fallthru
      _
    // Predicated region
    $region10: #{rnn_forward.1} parent=1 // pred_check
      _
    $region11: #{rnn_forward.1} parent=1 // pred_check_branch
      %27 = sbr.rel (0) target = $region13
    $region12: #{rnn_forward.1} parent=1 // pred_region
      _
    $region13: #{rnn_forward.1} parent=1 // pred_fallthru
      _
    // Predicated region
    $region14: #{rnn_forward.1} parent=1 // pred_check
      _
    $region15: #{rnn_forward.1} parent=1 // pred_check_branch
      %29 = sbr.rel (0) target = $region17
    $region16: #{rnn_forward.1} parent=1 // pred_region
      _
    $region17: #{rnn_forward.1} parent=1 // pred_fallthru
      _
    // Predicated region
    $region18: #{rnn_forward.1} parent=1 // pred_check
      _
    $region19: #{rnn_forward.1} parent=1 // pred_check_branch
      %31 = sbr.rel (0) target = $region21
    $region20: #{rnn_forward.1} parent=1 // pred_region
      _
    $region21: #{rnn_forward.1} parent=1 // pred_fallthru
      _
    // Predicated region
    $region22: #{rnn_forward.1} parent=1 // pred_check
      _
    $region23: #{rnn_forward.1} parent=1 // pred_check_branch
      %33 = sbr.rel (0) target = $region25
    $region24: #{rnn_forward.1} parent=1 // pred_region
      %34 = dma.done [#allocation5], 8192
    $region25: #{rnn_forward.1} parent=1 // pred_fallthru
      _
    %v35 = vlaneseq
    %v36 = vand.u32 %v35, 127
    %vm37 = vcmp.ge.s32.totalorder %v36, 64
    %vm38 = vcmp.lt.s32.totalorder %v36, 96
    %vm39 = vmand %vm37, %vm38
    %v40 = vsel %vm39, 1.0, 0.5
    %v41 = vsel %vm39, 0.0, 0.5
    %42 = vst [vmem:[#allocation2] sm:$0xff] 0.0
    %43 = vst [vmem:[#allocation2 + $0x8] sm:$0xff] 0.0
    %44 = vst [vmem:[#allocation2 + $0x10] sm:$0xff] 0.0
    %v45 = vld [vmem:[%s0] sm:$0xff]
    %v46 = vld [vmem:[%s0 + $0x8] sm:$0xff]
    %v47 = vld [vmem:[%s0 + $0x10] sm:$0xff]
    %v48 = vld [vmem:[#allocation4] sm:$0xff]
    %v49 = vld [vmem:[#allocation4 + $0x8] sm:$0xff]
    %v50 = vld [vmem:[#allocation4 + $0x10] sm:$0xff]
    %v51 = vld [vmem:[#allocation4 + $0x18] sm:$0xff]
    %v52 = vld [vmem:[#allocation4 + $0x20] sm:$0xff]
    %v53 = vld [vmem:[#allocation4 + $0x28] sm:$0xff]
    %v54 = vld [vmem:[#allocation4 + $0x30] sm:$0xff]
    %v55 = vld [vmem:[#allocation4 + $0x38] sm:$0xff]
    %v56 = vld [vmem:[#allocation4 + $0x40] sm:$0xff]
    %v57 = vld [vmem:[#allocation4 + $0x48] sm:$0xff]
    %v58 = vld [vmem:[#allocation4 + $0x50] sm:$0xff]
    %v59 = vld [vmem:[#allocation4 + $0x58] sm:$0xff]
    %v60 = vld [vmem:[#allocation4 + $0x60] sm:$0xff]
    %v61 = vld [vmem:[#allocation4 + $0x68] sm:$0xff]
    %v62 = vld [vmem:[#allocation4 + $0x70] sm:$0xff]
    %v63 = vld [vmem:[#allocation4 + $0x78] sm:$0xff]
    %v64 = vld [vmem:[%s2] sm:$0x1]
    %v66 = vlaneseq
    %v67 = vshrl.u32 %v66, 7
    %v68 = vsub.s32 0, %v67
    %v69 = vrot.slane %v64, %v68
    %71 = vmatprep.subr.mxu0 0.0
    %72 = vmatpush1.msra.mxu0 %v48
    %73 = vmatprep.subr.mxu0 0.0
    %74 = vmatpush1.msra.mxu0 %v49
    %75 = vmatprep.subr.mxu0 0.0
    %76 = vmatpush1.msra.mxu0 %v50
    %77 = vmatprep.subr.mxu0 0.0
    %78 = vmatpush1.msra.mxu0 %v51
    %79 = vmatprep.subr.mxu0 0.0
    %80 = vmatpush1.msra.mxu0 %v52
    %81 = vmatprep.subr.mxu0 0.0
    %82 = vmatpush1.msra.mxu0 %v53
    %83 = vmatprep.subr.mxu0 0.0
    %84 = vmatpush1.msra.mxu0 %v54
    %85 = vmatprep.subr.mxu0 0.0
    %86 = vmatpush1.msra.mxu0 %v55
    %87 = vmatprep.subr.mxu0 0.0
    %88 = vmatpush1.msra.mxu0 %v56
    %89 = vmatprep.subr.mxu0 0.0
    %90 = vmatpush1.msra.mxu0 %v57
    %91 = vmatprep.subr.mxu0 0.0
    %92 = vmatpush1.msra.mxu0 %v58
    %93 = vmatprep.subr.mxu0 0.0
    %94 = vmatpush1.msra.mxu0 %v59
    %95 = vmatprep.subr.mxu0 0.0
    %96 = vmatpush1.msra.mxu0 %v60
    %97 = vmatprep.subr.mxu0 0.0
    %98 = vmatpush1.msra.mxu0 %v61
    %99 = vmatprep.subr.mxu0 0.0
    %100 = vmatpush1.msra.mxu0 %v62
    %101 = vmatprep.subr.mxu0 0.0
    %102 = vmatpush1.msra.mxu0 %v63
    %103 = vmatprep.subr.mxu0 0.0
    %104 = vmatpush1.msra.mxu0 0.0
    %105 = vmatprep.subr.mxu0 0.0
    %106 = vmatpush1.msra.mxu0 0.0
    %107 = vmatprep.subr.mxu0 0.0
    %108 = vmatpush1.msra.mxu0 0.0
    %109 = vmatprep.subr.mxu0 0.0
    %110 = vmatpush1.msra.mxu0 0.0
    %111 = vmatprep.subr.mxu0 0.0
    %112 = vmatpush1.msra.mxu0 0.0
    %113 = vmatprep.subr.mxu0 0.0
    %114 = vmatpush1.msra.mxu0 0.0
    %115 = vmatprep.subr.mxu0 0.0
    %116 = vmatpush1.msra.mxu0 0.0
    %117 = vmatprep.subr.mxu0 0.0
    %118 = vmatpush1.msra.mxu0 0.0
    %119 = vmatprep.subr.mxu0 0.0
    %120 = vmatpush1.msra.mxu0 0.0
    %121 = vmatprep.subr.mxu0 0.0
    %122 = vmatpush1.msra.mxu0 0.0
    %123 = vmatprep.subr.mxu0 0.0
    %124 = vmatpush1.msra.mxu0 0.0
    %125 = vmatprep.subr.mxu0 0.0
    %126 = vmatpush1.msra.mxu0 0.0
    %127 = vmatprep.subr.mxu0 0.0
    %128 = vmatpush1.msra.mxu0 0.0
    %129 = vmatprep.subr.mxu0 0.0
    %130 = vmatpush1.msra.mxu0 0.0
    %131 = vmatprep.subr.mxu0 0.0
    %132 = vmatpush1.msra.mxu0 0.0
    %133 = vmatprep.subr.mxu0 0.0
    %134 = vmatpush1.msra.mxu0 0.0
    %135 = vmatprep.mubr.f32.mxu0 0.0
    %136 = vmatmul.mubr.f32.gmra.mrb[0].mxu0 %v45
    %v137 = vpop.f32.mrb[0].mxu0
    %v138 = vadd.f32 %v69, %v137
    %v139 = vpop.f32.mrb[0].mxu0
    %140 = vmatprep.mubr.f32.mxu0 0.0
    %141 = vmatmul.mubr.f32.gmra.mrb[0].mxu0 %v46
    %v142 = vpop.f32.mrb[0].mxu0
    %v143 = vadd.f32 %v69, %v142
    %v144 = vpop.f32.mrb[0].mxu0
    %145 = vmatprep.mubr.f32.mxu0 0.0
    %146 = vmatmul.mubr.f32.gmra.mrb[0].mxu0 %v47
    %v147 = vpop.f32.mrb[0].mxu0
    %v148 = vadd.f32 %v69, %v147
    %v149 = vpop.f32.mrb[0].mxu0
    %150 = vdwg.mxu0
    %151 = vst [vmem:[#allocation3] sm:$0xff] %v138
    %152 = vst [vmem:[#allocation3 + $0x8] sm:$0xff] %v143
    %153 = vst [vmem:[#allocation3 + $0x10] sm:$0xff] %v148
    %v154 = vld [vmem:[#allocation3] sm:$0x1]
    %v155 = vld [vmem:[#allocation4 + $0x80] sm:$0xff]
    %v156 = vld [vmem:[#allocation4 + $0x88] sm:$0xff]
    %v157 = vld [vmem:[#allocation4 + $0x90] sm:$0xff]
    %v158 = vld [vmem:[#allocation4 + $0x98] sm:$0xff]
    %v159 = vld [vmem:[#allocation4 + $0xa0] sm:$0xff]
    %v160 = vld [vmem:[#allocation4 + $0xa8] sm:$0xff]
    %v161 = vld [vmem:[#allocation4 + $0xb0] sm:$0xff]
    %v162 = vld [vmem:[#allocation4 + $0xb8] sm:$0xff]
    %v163 = vld [vmem:[#allocation4 + $0xc0] sm:$0xff]
    %v164 = vld [vmem:[#allocation4 + $0xc8] sm:$0xff]
    %v165 = vld [vmem:[#allocation4 + $0xd0] sm:$0xff]
    %v166 = vld [vmem:[#allocation4 + $0xd8] sm:$0xff]
    %v167 = vld [vmem:[#allocation4 + $0xe0] sm:$0xff]
    %v168 = vld [vmem:[#allocation4 + $0xe8] sm:$0xff]
    %v169 = vld [vmem:[#allocation4 + $0xf0] sm:$0xff]
    %v170 = vld [vmem:[#allocation4 + $0xf8] sm:$0xff]
    %171 = vmatprep.subr.mxu0 0.0
    %172 = vmatpush1.msra.mxu0 %v155
    %173 = vmatprep.subr.mxu0 0.0
    %174 = vmatpush1.msra.mxu0 %v156
    %175 = vmatprep.subr.mxu0 0.0
    %176 = vmatpush1.msra.mxu0 %v157
    %177 = vmatprep.subr.mxu0 0.0
    %178 = vmatpush1.msra.mxu0 %v158
    %179 = vmatprep.subr.mxu0 0.0
    %180 = vmatpush1.msra.mxu0 %v159
    %181 = vmatprep.subr.mxu0 0.0
    %182 = vmatpush1.msra.mxu0 %v160
    %183 = vmatprep.subr.mxu0 0.0
    %184 = vmatpush1.msra.mxu0 %v161
    %185 = vmatprep.subr.mxu0 0.0
    %186 = vmatpush1.msra.mxu0 %v162
    %187 = vmatprep.subr.mxu0 0.0
    %188 = vmatpush1.msra.mxu0 %v163
    %189 = vmatprep.subr.mxu0 0.0
    %190 = vmatpush1.msra.mxu0 %v164
    %191 = vmatprep.subr.mxu0 0.0
    %192 = vmatpush1.msra.mxu0 %v165
    %193 = vmatprep.subr.mxu0 0.0
    %194 = vmatpush1.msra.mxu0 %v166
    %195 = vmatprep.subr.mxu0 0.0
    %196 = vmatpush1.msra.mxu0 %v167
    %197 = vmatprep.subr.mxu0 0.0
    %198 = vmatpush1.msra.mxu0 %v168
    %199 = vmatprep.subr.mxu0 0.0
    %200 = vmatpush1.msra.mxu0 %v169
    %201 = vmatprep.subr.mxu0 0.0
    %202 = vmatpush1.msra.mxu0 %v170
    %203 = vmatprep.subr.mxu0 0.0
    %204 = vmatpush1.msra.mxu0 0.0
    %205 = vmatprep.subr.mxu0 0.0
    %206 = vmatpush1.msra.mxu0 0.0
    %207 = vmatprep.subr.mxu0 0.0
    %208 = vmatpush1.msra.mxu0 0.0
    %209 = vmatprep.subr.mxu0 0.0
    %210 = vmatpush1.msra.mxu0 0.0
    %211 = vmatprep.subr.mxu0 0.0
    %212 = vmatpush1.msra.mxu0 0.0
    %213 = vmatprep.subr.mxu0 0.0
    %214 = vmatpush1.msra.mxu0 0.0
    %215 = vmatprep.subr.mxu0 0.0
    %216 = vmatpush1.msra.mxu0 0.0
    %217 = vmatprep.subr.mxu0 0.0
    %218 = vmatpush1.msra.mxu0 0.0
    %219 = vmatprep.subr.mxu0 0.0
    %220 = vmatpush1.msra.mxu0 0.0
    %221 = vmatprep.subr.mxu0 0.0
    %222 = vmatpush1.msra.mxu0 0.0
    %223 = vmatprep.subr.mxu0 0.0
    %224 = vmatpush1.msra.mxu0 0.0
    %225 = vmatprep.subr.mxu0 0.0
    %226 = vmatpush1.msra.mxu0 0.0
    %227 = vmatprep.subr.mxu0 0.0
    %228 = vmatpush1.msra.mxu0 0.0
    %229 = vmatprep.subr.mxu0 0.0
    %230 = vmatpush1.msra.mxu0 0.0
    %231 = vmatprep.subr.mxu0 0.0
    %232 = vmatpush1.msra.mxu0 0.0
    %233 = vmatprep.subr.mxu0 0.0
    %234 = vmatpush1.msra.mxu0 0.0
    %235 = vmatprep.mubr.f32.mxu0 0.0
    %236 = vmatmul.mubr.f32.gmra.mrb[0].mxu0 0.0
    %v237 = vpop.f32.mrb[0].mxu0
    %v238 = vadd.f32 0.0, %v237
    %v239 = vpop.f32.mrb[0].mxu0
    %240 = vdwg.mxu0
    %v241 = vadd.f32 %v154, %v238
    %v242 = vtanh.pop %v241
    %v243 = vmul.f32 %v40, %v242
    %v244 = vadd.f32 %v243, %v41
    %245 = vrot.lane.b32.xlu0 %v244, 96
    %v246 = vpop.permute.xlu0 %245
    %247 = vrot.lane.b32.xlu0 %v244, 64
    %v248 = vpop.permute.xlu0 %247
    %249 = vrot.lane.b32.xlu0 %v244, 32
    %v250 = vpop.permute.xlu0 %249
    %v251 = vmul.f32 %v246, 0.0
    %v252 = vmul.f32 %v244, %v248
    %v253 = vadd.f32 %v251, %v252
    %v254 = vtanh.pop %v253
    %v255 = vmul.f32 %v250, %v254
    %v256 = vld [vmem:[#allocation3 + $0x1] sm:$0x1]
    %257 = vmatprep.subr.mxu0 0.0
    %258 = vmatpush1.msra.mxu0 %v155
    %259 = vmatprep.subr.mxu0 0.0
    %260 = vmatpush1.msra.mxu0 %v156
    %261 = vmatprep.subr.mxu0 0.0
    %262 = vmatpush1.msra.mxu0 %v157
    %263 = vmatprep.subr.mxu0 0.0
    %264 = vmatpush1.msra.mxu0 %v158
    %265 = vmatprep.subr.mxu0 0.0
    %266 = vmatpush1.msra.mxu0 %v159
    %267 = vmatprep.subr.mxu0 0.0
    %268 = vmatpush1.msra.mxu0 %v160
    %269 = vmatprep.subr.mxu0 0.0
    %270 = vmatpush1.msra.mxu0 %v161
    %271 = vmatprep.subr.mxu0 0.0
    %272 = vmatpush1.msra.mxu0 %v162
    %273 = vmatprep.subr.mxu0 0.0
    %274 = vmatpush1.msra.mxu0 %v163
    %275 = vmatprep.subr.mxu0 0.0
    %276 = vmatpush1.msra.mxu0 %v164
    %277 = vmatprep.subr.mxu0 0.0
    %278 = vmatpush1.msra.mxu0 %v165
    %279 = vmatprep.subr.mxu0 0.0
    %280 = vmatpush1.msra.mxu0 %v166
    %281 = vmatprep.subr.mxu0 0.0
    %282 = vmatpush1.msra.mxu0 %v167
    %283 = vmatprep.subr.mxu0 0.0
    %284 = vmatpush1.msra.mxu0 %v168
    %285 = vmatprep.subr.mxu0 0.0
    %286 = vmatpush1.msra.mxu0 %v169
    %287 = vmatprep.subr.mxu0 0.0
    %288 = vmatpush1.msra.mxu0 %v170
    %289 = vmatprep.subr.mxu0 0.0
    %290 = vmatpush1.msra.mxu0 0.0
    %291 = vmatprep.subr.mxu0 0.0
    %292 = vmatpush1.msra.mxu0 0.0
    %293 = vmatprep.subr.mxu0 0.0
    %294 = vmatpush1.msra.mxu0 0.0
    %295 = vmatprep.subr.mxu0 0.0
    %296 = vmatpush1.msra.mxu0 0.0
    %297 = vmatprep.subr.mxu0 0.0
    %298 = vmatpush1.msra.mxu0 0.0
    %299 = vmatprep.subr.mxu0 0.0
    %300 = vmatpush1.msra.mxu0 0.0
    %301 = vmatprep.subr.mxu0 0.0
    %302 = vmatpush1.msra.mxu0 0.0
    %303 = vmatprep.subr.mxu0 0.0
    %304 = vmatpush1.msra.mxu0 0.0
    %305 = vmatprep.subr.mxu0 0.0
    %306 = vmatpush1.msra.mxu0 0.0
    %307 = vmatprep.subr.mxu0 0.0
    %308 = vmatpush1.msra.mxu0 0.0
    %309 = vmatprep.subr.mxu0 0.0
    %310 = vmatpush1.msra.mxu0 0.0
    %311 = vmatprep.subr.mxu0 0.0
    %312 = vmatpush1.msra.mxu0 0.0
    %313 = vmatprep.subr.mxu0 0.0
    %314 = vmatpush1.msra.mxu0 0.0
    %315 = vmatprep.subr.mxu0 0.0
    %316 = vmatpush1.msra.mxu0 0.0
    %317 = vmatprep.subr.mxu0 0.0
    %318 = vmatpush1.msra.mxu0 0.0
    %319 = vmatprep.subr.mxu0 0.0
    %320 = vmatpush1.msra.mxu0 0.0
    %321 = vmatprep.mubr.f32.mxu0 0.0
    %322 = vmatmul.mubr.f32.gmra.mrb[0].mxu0 %v255
    %v323 = vpop.f32.mrb[0].mxu0
    %v324 = vadd.f32 0.0, %v323
    %v325 = vpop.f32.mrb[0].mxu0
    %326 = vdwg.mxu0
    %v327 = vadd.f32 %v256, %v324
    %v328 = vtanh.pop %v327
    %v329 = vmul.f32 %v40, %v328
    %v330 = vadd.f32 %v329, %v41
    %331 = vrot.lane.b32.xlu0 %v330, 96
    %v332 = vpop.permute.xlu0 %331
    %333 = vrot.lane.b32.xlu0 %v330, 64
    %v334 = vpop.permute.xlu0 %333
    %335 = vrot.lane.b32.xlu0 %v330, 32
    %v336 = vpop.permute.xlu0 %335
    %v337 = vmul.f32 %v332, %v253
    %v338 = vmul.f32 %v330, %v334
    %v339 = vadd.f32 %v337, %v338
    %v340 = vtanh.pop %v339
    %v341 = vmul.f32 %v336, %v340
    %s342 = scalar_lea.vmem [#allocation4], 256
    %v343 = vld [vmem:[%s342] sm:$0xff]
    %v344 = vld [vmem:[%s342 + $0x8] sm:$0xff]
    %v345 = vld [vmem:[%s342 + $0x10] sm:$0xff]
    %v346 = vld [vmem:[%s342 + $0x18] sm:$0xff]
    %v347 = vld [vmem:[%s342 + $0x20] sm:$0xff]
    %v348 = vld [vmem:[%s342 + $0x28] sm:$0xff]
    %v349 = vld [vmem:[%s342 + $0x30] sm:$0xff]
    %v350 = vld [vmem:[%s342 + $0x38] sm:$0xff]
    %v351 = vld [vmem:[%s342 + $0x40] sm:$0xff]
    %v352 = vld [vmem:[%s342 + $0x48] sm:$0xff]
    %v353 = vld [vmem:[%s342 + $0x50] sm:$0xff]
    %v354 = vld [vmem:[%s342 + $0x58] sm:$0xff]
    %v355 = vld [vmem:[%s342 + $0x60] sm:$0xff]
    %v356 = vld [vmem:[%s342 + $0x68] sm:$0xff]
    %v357 = vld [vmem:[%s342 + $0x70] sm:$0xff]
    %v358 = vld [vmem:[%s342 + $0x78] sm:$0xff]
    %v359 = vld [vmem:[%s342 + $0x80] sm:$0xff]
    %v360 = vld [vmem:[%s342 + $0x88] sm:$0xff]
    %v361 = vld [vmem:[%s342 + $0x90] sm:$0xff]
    %v362 = vld [vmem:[%s342 + $0x98] sm:$0xff]
    %v363 = vld [vmem:[%s342 + $0xa0] sm:$0xff]
    %v364 = vld [vmem:[%s342 + $0xa8] sm:$0xff]
    %v365 = vld [vmem:[%s342 + $0xb0] sm:$0xff]
    %v366 = vld [vmem:[%s342 + $0xb8] sm:$0xff]
    %v367 = vld [vmem:[%s342 + $0xc0] sm:$0xff]
    %v368 = vld [vmem:[%s342 + $0xc8] sm:$0xff]
    %v369 = vld [vmem:[%s342 + $0xd0] sm:$0xff]
    %v370 = vld [vmem:[%s342 + $0xd8] sm:$0xff]
    %v371 = vld [vmem:[%s342 + $0xe0] sm:$0xff]
    %v372 = vld [vmem:[%s342 + $0xe8] sm:$0xff]
    %v373 = vld [vmem:[%s342 + $0xf0] sm:$0xff]
    %v374 = vld [vmem:[%s342 + $0xf8] sm:$0xff]
    %s375 = scalar_lea.vmem %s2, 1
    %v376 = vld [vmem:[%s375] sm:$0x1]
    %377 = vmatprep.subr.mxu0 0.0
    %378 = vmatpush1.msra.mxu0 %v343
    %379 = vmatprep.subr.mxu0 0.0
    %380 = vmatpush1.msra.mxu0 %v344
    %381 = vmatprep.subr.mxu0 0.0
    %382 = vmatpush1.msra.mxu0 %v345
    %383 = vmatprep.subr.mxu0 0.0
    %384 = vmatpush1.msra.mxu0 %v346
    %385 = vmatprep.subr.mxu0 0.0
    %386 = vmatpush1.msra.mxu0 %v347
    %387 = vmatprep.subr.mxu0 0.0
    %388 = vmatpush1.msra.mxu0 %v348
    %389 = vmatprep.subr.mxu0 0.0
    %390 = vmatpush1.msra.mxu0 %v349
    %391 = vmatprep.subr.mxu0 0.0
    %392 = vmatpush1.msra.mxu0 %v350
    %393 = vmatprep.subr.mxu0 0.0
    %394 = vmatpush1.msra.mxu0 %v351
    %395 = vmatprep.subr.mxu0 0.0
    %396 = vmatpush1.msra.mxu0 %v352
    %397 = vmatprep.subr.mxu0 0.0
    %398 = vmatpush1.msra.mxu0 %v353
    %399 = vmatprep.subr.mxu0 0.0
    %400 = vmatpush1.msra.mxu0 %v354
    %401 = vmatprep.subr.mxu0 0.0
    %402 = vmatpush1.msra.mxu0 %v355
    %403 = vmatprep.subr.mxu0 0.0
    %404 = vmatpush1.msra.mxu0 %v356
    %405 = vmatprep.subr.mxu0 0.0
    %406 = vmatpush1.msra.mxu0 %v357
    %407 = vmatprep.subr.mxu0 0.0
    %408 = vmatpush1.msra.mxu0 %v358
    %409 = vmatprep.subr.mxu0 0.0
    %410 = vmatpush1.msra.mxu0 %v359
    %411 = vmatprep.subr.mxu0 0.0
    %412 = vmatpush1.msra.mxu0 %v360
    %413 = vmatprep.subr.mxu0 0.0
    %414 = vmatpush1.msra.mxu0 %v361
    %415 = vmatprep.subr.mxu0 0.0
    %416 = vmatpush1.msra.mxu0 %v362
    %417 = vmatprep.subr.mxu0 0.0
    %418 = vmatpush1.msra.mxu0 %v363
    %419 = vmatprep.subr.mxu0 0.0
    %420 = vmatpush1.msra.mxu0 %v364
    %421 = vmatprep.subr.mxu0 0.0
    %422 = vmatpush1.msra.mxu0 %v365
    %423 = vmatprep.subr.mxu0 0.0
    %424 = vmatpush1.msra.mxu0 %v366
    %425 = vmatprep.subr.mxu0 0.0
    %426 = vmatpush1.msra.mxu0 %v367
    %427 = vmatprep.subr.mxu0 0.0
    %428 = vmatpush1.msra.mxu0 %v368
    %429 = vmatprep.subr.mxu0 0.0
    %430 = vmatpush1.msra.mxu0 %v369
    %431 = vmatprep.subr.mxu0 0.0
    %432 = vmatpush1.msra.mxu0 %v370
    %433 = vmatprep.subr.mxu0 0.0
    %434 = vmatpush1.msra.mxu0 %v371
    %435 = vmatprep.subr.mxu0 0.0
    %436 = vmatpush1.msra.mxu0 %v372
    %437 = vmatprep.subr.mxu0 0.0
    %438 = vmatpush1.msra.mxu0 %v373
    %439 = vmatprep.subr.mxu0 0.0
    %440 = vmatpush1.msra.mxu0 %v374
    %441 = vmatprep.mubr.f32.mxu0 0.0
    %442 = vmatmul.mubr.f32.gmra.mrb[0].mxu0 %v255
    %v443 = vpop.f32.mrb[0].mxu0
    %v444 = vadd.f32 %v376, %v443
    %v445 = vpop.f32.mrb[0].mxu0
    %446 = vdwg.mxu0
    %v447 = vtanh.pop %v444
    %v448 = vmul.f32 %v40, %v447
    %v449 = vadd.f32 %v448, %v41
    %450 = vrot.lane.b32.xlu0 %v449, 96
    %v451 = vpop.permute.xlu0 %450
    %452 = vrot.lane.b32.xlu0 %v449, 64
    %v453 = vpop.permute.xlu0 %452
    %454 = vrot.lane.b32.xlu0 %v449, 32
    %v455 = vpop.permute.xlu0 %454
    %v456 = vmul.f32 %v451, 0.0
    %v457 = vmul.f32 %v449, %v453
    %v458 = vadd.f32 %v456, %v457
    %v459 = vtanh.pop %v458
    %v460 = vmul.f32 %v455, %v459
    %461 = vst [vmem:[#allocation2] sm:$0x1] %v460
    %v462 = vld [vmem:[#allocation3 + $0x2] sm:$0x1]
    %v463 = vld [vmem:[#allocation4 + $0x80] sm:$0xff]
    %v464 = vld [vmem:[#allocation4 + $0x88] sm:$0xff]
    %v465 = vld [vmem:[#allocation4 + $0x90] sm:$0xff]
    %v466 = vld [vmem:[#allocation4 + $0x98] sm:$0xff]
    %v467 = vld [vmem:[#allocation4 + $0xa0] sm:$0xff]
    %v468 = vld [vmem:[#allocation4 + $0xa8] sm:$0xff]
    %v469 = vld [vmem:[#allocation4 + $0xb0] sm:$0xff]
    %v470 = vld [vmem:[#allocation4 + $0xb8] sm:$0xff]
    %v471 = vld [vmem:[#allocation4 + $0xc0] sm:$0xff]
    %v472 = vld [vmem:[#allocation4 + $0xc8] sm:$0xff]
    %v473 = vld [vmem:[#allocation4 + $0xd0] sm:$0xff]
    %v474 = vld [vmem:[#allocation4 + $0xd8] sm:$0xff]
    %v475 = vld [vmem:[#allocation4 + $0xe0] sm:$0xff]
    %v476 = vld [vmem:[#allocation4 + $0xe8] sm:$0xff]
    %v477 = vld [vmem:[#allocation4 + $0xf0] sm:$0xff]
    %v478 = vld [vmem:[#allocation4 + $0xf8] sm:$0xff]
    %479 = vmatprep.subr.mxu0 0.0
    %480 = vmatpush1.msra.mxu0 %v463
    %481 = vmatprep.subr.mxu0 0.0
    %482 = vmatpush1.msra.mxu0 %v464
    %483 = vmatprep.subr.mxu0 0.0
    %484 = vmatpush1.msra.mxu0 %v465
    %485 = vmatprep.subr.mxu0 0.0
    %486 = vmatpush1.msra.mxu0 %v466
    %487 = vmatprep.subr.mxu0 0.0
    %488 = vmatpush1.msra.mxu0 %v467
    %489 = vmatprep.subr.mxu0 0.0
    %490 = vmatpush1.msra.mxu0 %v468
    %491 = vmatprep.subr.mxu0 0.0
    %492 = vmatpush1.msra.mxu0 %v469
    %493 = vmatprep.subr.mxu0 0.0
    %494 = vmatpush1.msra.mxu0 %v470
    %495 = vmatprep.subr.mxu0 0.0
    %496 = vmatpush1.msra.mxu0 %v471
    %497 = vmatprep.subr.mxu0 0.0
    %498 = vmatpush1.msra.mxu0 %v472
    %499 = vmatprep.subr.mxu0 0.0
    %500 = vmatpush1.msra.mxu0 %v473
    %501 = vmatprep.subr.mxu0 0.0
    %502 = vmatpush1.msra.mxu0 %v474
    %503 = vmatprep.subr.mxu0 0.0
    %504 = vmatpush1.msra.mxu0 %v475
    %505 = vmatprep.subr.mxu0 0.0
    %506 = vmatpush1.msra.mxu0 %v476
    %507 = vmatprep.subr.mxu0 0.0
    %508 = vmatpush1.msra.mxu0 %v477
    %509 = vmatprep.subr.mxu0 0.0
    %510 = vmatpush1.msra.mxu0 %v478
    %511 = vmatprep.subr.mxu0 0.0
    %512 = vmatpush1.msra.mxu0 0.0
    %513 = vmatprep.subr.mxu0 0.0
    %514 = vmatpush1.msra.mxu0 0.0
    %515 = vmatprep.subr.mxu0 0.0
    %516 = vmatpush1.msra.mxu0 0.0
    %517 = vmatprep.subr.mxu0 0.0
    %518 = vmatpush1.msra.mxu0 0.0
    %519 = vmatprep.subr.mxu0 0.0
    %520 = vmatpush1.msra.mxu0 0.0
    %521 = vmatprep.subr.mxu0 0.0
    %522 = vmatpush1.msra.mxu0 0.0
    %523 = vmatprep.subr.mxu0 0.0
    %524 = vmatpush1.msra.mxu0 0.0
    %525 = vmatprep.subr.mxu0 0.0
    %526 = vmatpush1.msra.mxu0 0.0
    %527 = vmatprep.subr.mxu0 0.0
    %528 = vmatpush1.msra.mxu0 0.0
    %529 = vmatprep.subr.mxu0 0.0
    %530 = vmatpush1.msra.mxu0 0.0
    %531 = vmatprep.subr.mxu0 0.0
    %532 = vmatpush1.msra.mxu0 0.0
    %533 = vmatprep.subr.mxu0 0.0
    %534 = vmatpush1.msra.mxu0 0.0
    %535 = vmatprep.subr.mxu0 0.0
    %536 = vmatpush1.msra.mxu0 0.0
    %537 = vmatprep.subr.mxu0 0.0
    %538 = vmatpush1.msra.mxu0 0.0
    %539 = vmatprep.subr.mxu0 0.0
    %540 = vmatpush1.msra.mxu0 0.0
    %541 = vmatprep.subr.mxu0 0.0
    %542 = vmatpush1.msra.mxu0 0.0
    %543 = vmatprep.mubr.f32.mxu0 0.0
    %544 = vmatmul.mubr.f32.gmra.mrb[0].mxu0 %v341
    %v545 = vpop.f32.mrb[0].mxu0
    %v546 = vadd.f32 0.0, %v545
    %v547 = vpop.f32.mrb[0].mxu0
    %548 = vdwg.mxu0
    %v549 = vadd.f32 %v462, %v546
    %v550 = vtanh.pop %v549
    %v551 = vmul.f32 %v40, %v550
    %v552 = vadd.f32 %v551, %v41
    %553 = vrot.lane.b32.xlu0 %v552, 96
    %v554 = vpop.permute.xlu0 %553
    %555 = vrot.lane.b32.xlu0 %v552, 64
    %v556 = vpop.permute.xlu0 %555
    %557 = vrot.lane.b32.xlu0 %v552, 32
    %v558 = vpop.permute.xlu0 %557
    %v559 = vmul.f32 %v554, %v339
    %v560 = vmul.f32 %v552, %v556
    %v561 = vadd.f32 %v559, %v560
    %v562 = vtanh.pop %v561
    %v563 = vmul.f32 %v558, %v562
    %v564 = vld [vmem:[%s342] sm:$0xff]
    %v565 = vld [vmem:[%s342 + $0x8] sm:$0xff]
    %v566 = vld [vmem:[%s342 + $0x10] sm:$0xff]
    %v567 = vld [vmem:[%s342 + $0x18] sm:$0xff]
    %v568 = vld [vmem:[%s342 + $0x20] sm:$0xff]
    %v569 = vld [vmem:[%s342 + $0x28] sm:$0xff]
    %v570 = vld [vmem:[%s342 + $0x30] sm:$0xff]
    %v571 = vld [vmem:[%s342 + $0x38] sm:$0xff]
    %v572 = vld [vmem:[%s342 + $0x40] sm:$0xff]
    %v573 = vld [vmem:[%s342 + $0x48] sm:$0xff]
    %v574 = vld [vmem:[%s342 + $0x50] sm:$0xff]
    %v575 = vld [vmem:[%s342 + $0x58] sm:$0xff]
    %v576 = vld [vmem:[%s342 + $0x60] sm:$0xff]
    %v577 = vld [vmem:[%s342 + $0x68] sm:$0xff]
    %v578 = vld [vmem:[%s342 + $0x70] sm:$0xff]
    %v579 = vld [vmem:[%s342 + $0x78] sm:$0xff]
    %v580 = vld [vmem:[%s342 + $0x80] sm:$0xff]
    %v581 = vld [vmem:[%s342 + $0x88] sm:$0xff]
    %v582 = vld [vmem:[%s342 + $0x90] sm:$0xff]
    %v583 = vld [vmem:[%s342 + $0x98] sm:$0xff]
    %v584 = vld [vmem:[%s342 + $0xa0] sm:$0xff]
    %v585 = vld [vmem:[%s342 + $0xa8] sm:$0xff]
    %v586 = vld [vmem:[%s342 + $0xb0] sm:$0xff]
    %v587 = vld [vmem:[%s342 + $0xb8] sm:$0xff]
    %v588 = vld [vmem:[%s342 + $0xc0] sm:$0xff]
    %v589 = vld [vmem:[%s342 + $0xc8] sm:$0xff]
    %v590 = vld [vmem:[%s342 + $0xd0] sm:$0xff]
    %v591 = vld [vmem:[%s342 + $0xd8] sm:$0xff]
    %v592 = vld [vmem:[%s342 + $0xe0] sm:$0xff]
    %v593 = vld [vmem:[%s342 + $0xe8] sm:$0xff]
    %v594 = vld [vmem:[%s342 + $0xf0] sm:$0xff]
    %v595 = vld [vmem:[%s342 + $0xf8] sm:$0xff]
    %v596 = vld [vmem:[%s375] sm:$0x1]
    %597 = vmatprep.subr.mxu0 0.0
    %598 = vmatpush1.msra.mxu0 %v564
    %599 = vmatprep.subr.mxu0 0.0
    %600 = vmatpush1.msra.mxu0 %v565
    %601 = vmatprep.subr.mxu0 0.0
    %602 = vmatpush1.msra.mxu0 %v566
    %603 = vmatprep.subr.mxu0 0.0
    %604 = vmatpush1.msra.mxu0 %v567
    %605 = vmatprep.subr.mxu0 0.0
    %606 = vmatpush1.msra.mxu0 %v568
    %607 = vmatprep.subr.mxu0 0.0
    %608 = vmatpush1.msra.mxu0 %v569
    %609 = vmatprep.subr.mxu0 0.0
    %610 = vmatpush1.msra.mxu0 %v570
    %611 = vmatprep.subr.mxu0 0.0
    %612 = vmatpush1.msra.mxu0 %v571
    %613 = vmatprep.subr.mxu0 0.0
    %614 = vmatpush1.msra.mxu0 %v572
    %615 = vmatprep.subr.mxu0 0.0
    %616 = vmatpush1.msra.mxu0 %v573
    %617 = vmatprep.subr.mxu0 0.0
    %618 = vmatpush1.msra.mxu0 %v574
    %619 = vmatprep.subr.mxu0 0.0
    %620 = vmatpush1.msra.mxu0 %v575
    %621 = vmatprep.subr.mxu0 0.0
    %622 = vmatpush1.msra.mxu0 %v576
    %623 = vmatprep.subr.mxu0 0.0
    %624 = vmatpush1.msra.mxu0 %v577
    %625 = vmatprep.subr.mxu0 0.0
    %626 = vmatpush1.msra.mxu0 %v578
    %627 = vmatprep.subr.mxu0 0.0
    %628 = vmatpush1.msra.mxu0 %v579
    %629 = vmatprep.subr.mxu0 0.0
    %630 = vmatpush1.msra.mxu0 %v580
    %631 = vmatprep.subr.mxu0 0.0
    %632 = vmatpush1.msra.mxu0 %v581
    %633 = vmatprep.subr.mxu0 0.0
    %634 = vmatpush1.msra.mxu0 %v582
    %635 = vmatprep.subr.mxu0 0.0
    %636 = vmatpush1.msra.mxu0 %v583
    %637 = vmatprep.subr.mxu0 0.0
    %638 = vmatpush1.msra.mxu0 %v584
    %639 = vmatprep.subr.mxu0 0.0
    %640 = vmatpush1.msra.mxu0 %v585
    %641 = vmatprep.subr.mxu0 0.0
    %642 = vmatpush1.msra.mxu0 %v586
    %643 = vmatprep.subr.mxu0 0.0
    %644 = vmatpush1.msra.mxu0 %v587
    %645 = vmatprep.subr.mxu0 0.0
    %646 = vmatpush1.msra.mxu0 %v588
    %647 = vmatprep.subr.mxu0 0.0
    %648 = vmatpush1.msra.mxu0 %v589
    %649 = vmatprep.subr.mxu0 0.0
    %650 = vmatpush1.msra.mxu0 %v590
    %651 = vmatprep.subr.mxu0 0.0
    %652 = vmatpush1.msra.mxu0 %v591
    %653 = vmatprep.subr.mxu0 0.0
    %654 = vmatpush1.msra.mxu0 %v592
    %655 = vmatprep.subr.mxu0 0.0
    %656 = vmatpush1.msra.mxu0 %v593
    %657 = vmatprep.subr.mxu0 0.0
    %658 = vmatpush1.msra.mxu0 %v594
    %659 = vmatprep.subr.mxu0 0.0
    %660 = vmatpush1.msra.mxu0 %v595
    %661 = vmatprep.mubr.f32.mxu0 %v460
    %662 = vmatmul.mubr.f32.gmra.mrb[0].mxu0 %v341
    %v663 = vpop.f32.mrb[0].mxu0
    %v664 = vadd.f32 %v596, %v663
    %v665 = vpop.f32.mrb[0].mxu0
    %666 = vdwg.mxu0
    %v667 = vtanh.pop %v664
    %v668 = vmul.f32 %v40, %v667
    %v669 = vadd.f32 %v668, %v41
    %670 = vrot.lane.b32.xlu0 %v669, 96
    %v671 = vpop.permute.xlu0 %670
    %672 = vrot.lane.b32.xlu0 %v669, 64
    %v673 = vpop.permute.xlu0 %672
    %674 = vrot.lane.b32.xlu0 %v669, 32
    %v675 = vpop.permute.xlu0 %674
    %v676 = vmul.f32 %v671, %v458
    %v677 = vmul.f32 %v669, %v673
    %v678 = vadd.f32 %v676, %v677
    %v679 = vtanh.pop %v678
    %v680 = vmul.f32 %v675, %v679
    %681 = vst [vmem:[#allocation2 + $0x1] sm:$0x1] %v680
    %v682 = vld [vmem:[#allocation3 + $0x3] sm:$0x1]
    %v683 = vld [vmem:[#allocation4 + $0x80] sm:$0xff]
    %v684 = vld [vmem:[#allocation4 + $0x88] sm:$0xff]
    %v685 = vld [vmem:[#allocation4 + $0x90] sm:$0xff]
    %v686 = vld [vmem:[#allocation4 + $0x98] sm:$0xff]
    %v687 = vld [vmem:[#allocation4 + $0xa0] sm:$0xff]
    %v688 = vld [vmem:[#allocation4 + $0xa8] sm:$0xff]
    %v689 = vld [vmem:[#allocation4 + $0xb0] sm:$0xff]
    %v690 = vld [vmem:[#allocation4 + $0xb8] sm:$0xff]
    %v691 = vld [vmem:[#allocation4 + $0xc0] sm:$0xff]
    %v692 = vld [vmem:[#allocation4 + $0xc8] sm:$0xff]
    %v693 = vld [vmem:[#allocation4 + $0xd0] sm:$0xff]
    %v694 = vld [vmem:[#allocation4 + $0xd8] sm:$0xff]
    %v695 = vld [vmem:[#allocation4 + $0xe0] sm:$0xff]
    %v696 = vld [vmem:[#allocation4 + $0xe8] sm:$0xff]
    %v697 = vld [vmem:[#allocation4 + $0xf0] sm:$0xff]
    %v698 = vld [vmem:[#allocation4 + $0xf8] sm:$0xff]
    %699 = vmatprep.subr.mxu0 0.0
    %700 = vmatpush1.msra.mxu0 %v683
    %701 = vmatprep.subr.mxu0 0.0
    %702 = vmatpush1.msra.mxu0 %v684
    %703 = vmatprep.subr.mxu0 0.0
    %704 = vmatpush1.msra.mxu0 %v685
    %705 = vmatprep.subr.mxu0 0.0
    %706 = vmatpush1.msra.mxu0 %v686
    %707 = vmatprep.subr.mxu0 0.0
    %708 = vmatpush1.msra.mxu0 %v687
    %709 = vmatprep.subr.mxu0 0.0
    %710 = vmatpush1.msra.mxu0 %v688
    %711 = vmatprep.subr.mxu0 0.0
    %712 = vmatpush1.msra.mxu0 %v689
    %713 = vmatprep.subr.mxu0 0.0
    %714 = vmatpush1.msra.mxu0 %v690
    %715 = vmatprep.subr.mxu0 0.0
    %716 = vmatpush1.msra.mxu0 %v691
    %717 = vmatprep.subr.mxu0 0.0
    %718 = vmatpush1.msra.mxu0 %v692
    %719 = vmatprep.subr.mxu0 0.0
    %720 = vmatpush1.msra.mxu0 %v693
    %721 = vmatprep.subr.mxu0 0.0
    %722 = vmatpush1.msra.mxu0 %v694
    %723 = vmatprep.subr.mxu0 0.0
    %724 = vmatpush1.msra.mxu0 %v695
    %725 = vmatprep.subr.mxu0 0.0
    %726 = vmatpush1.msra.mxu0 %v696
    %727 = vmatprep.subr.mxu0 0.0
    %728 = vmatpush1.msra.mxu0 %v697
    %729 = vmatprep.subr.mxu0 0.0
    %730 = vmatpush1.msra.mxu0 %v698
    %731 = vmatprep.subr.mxu0 0.0
    %732 = vmatpush1.msra.mxu0 0.0
    %733 = vmatprep.subr.mxu0 0.0
    %734 = vmatpush1.msra.mxu0 0.0
    %735 = vmatprep.subr.mxu0 0.0
    %736 = vmatpush1.msra.mxu0 0.0
    %737 = vmatprep.subr.mxu0 0.0
    %738 = vmatpush1.msra.mxu0 0.0
    %739 = vmatprep.subr.mxu0 0.0
    %740 = vmatpush1.msra.mxu0 0.0
    %741 = vmatprep.subr.mxu0 0.0
    %742 = vmatpush1.msra.mxu0 0.0
    %743 = vmatprep.subr.mxu0 0.0
    %744 = vmatpush1.msra.mxu0 0.0
    %745 = vmatprep.subr.mxu0 0.0
    %746 = vmatpush1.msra.mxu0 0.0
    %747 = vmatprep.subr.mxu0 0.0
    %748 = vmatpush1.msra.mxu0 0.0
    %749 = vmatprep.subr.mxu0 0.0
    %750 = vmatpush1.msra.mxu0 0.0
    %751 = vmatprep.subr.mxu0 0.0
    %752 = vmatpush1.msra.mxu0 0.0
    %753 = vmatprep.subr.mxu0 0.0
    %754 = vmatpush1.msra.mxu0 0.0
    %755 = vmatprep.subr.mxu0 0.0
    %756 = vmatpush1.msra.mxu0 0.0
    %757 = vmatprep.subr.mxu0 0.0
    %758 = vmatpush1.msra.mxu0 0.0
    %759 = vmatprep.subr.mxu0 0.0
    %760 = vmatpush1.msra.mxu0 0.0
    %761 = vmatprep.subr.mxu0 0.0
    %762 = vmatpush1.msra.mxu0 0.0
    %763 = vmatprep.mubr.f32.mxu0 0.0
    %764 = vmatmul.mubr.f32.gmra.mrb[0].mxu0 %v563
    %v765 = vpop.f32.mrb[0].mxu0
    %v766 = vadd.f32 0.0, %v765
    %v767 = vpop.f32.mrb[0].mxu0
    %768 = vdwg.mxu0
    %v769 = vadd.f32 %v682, %v766
    %v770 = vtanh.pop %v769
    %v771 = vmul.f32 %v40, %v770
    %v772 = vadd.f32 %v771, %v41
    %773 = vrot.lane.b32.xlu0 %v772, 96
    %v774 = vpop.permute.xlu0 %773
    %775 = vrot.lane.b32.xlu0 %v772, 64
    %v776 = vpop.permute.xlu0 %775
    %777 = vrot.lane.b32.xlu0 %v772, 32
    %v778 = vpop.permute.xlu0 %777
    %v779 = vmul.f32 %v774, %v561
    %v780 = vmul.f32 %v772, %v776
    %v781 = vadd.f32 %v779, %v780
    %v782 = vtanh.pop %v781
    %v783 = vmul.f32 %v778, %v782
    %v784 = vld [vmem:[%s342] sm:$0xff]
    %v785 = vld [vmem:[%s342 + $0x8] sm:$0xff]
    %v786 = vld [vmem:[%s342 + $0x10] sm:$0xff]
    %v787 = vld [vmem:[%s342 + $0x18] sm:$0xff]
    %v788 = vld [vmem:[%s342 + $0x20] sm:$0xff]
    %v789 = vld [vmem:[%s342 + $0x28] sm:$0xff]
    %v790 = vld [vmem:[%s342 + $0x30] sm:$0xff]
    %v791 = vld [vmem:[%s342 + $0x38] sm:$0xff]
    %v792 = vld [vmem:[%s342 + $0x40] sm:$0xff]
    %v793 = vld [vmem:[%s342 + $0x48] sm:$0xff]
    %v794 = vld [vmem:[%s342 + $0x50] sm:$0xff]
    %v795 = vld [vmem:[%s342 + $0x58] sm:$0xff]
    %v796 = vld [vmem:[%s342 + $0x60] sm:$0xff]
    %v797 = vld [vmem:[%s342 + $0x68] sm:$0xff]
    %v798 = vld [vmem:[%s342 + $0x70] sm:$0xff]
    %v799 = vld [vmem:[%s342 + $0x78] sm:$0xff]
    %v800 = vld [vmem:[%s342 + $0x80] sm:$0xff]
    %v801 = vld [vmem:[%s342 + $0x88] sm:$0xff]
    %v802 = vld [vmem:[%s342 + $0x90] sm:$0xff]
    %v803 = vld [vmem:[%s342 + $0x98] sm:$0xff]
    %v804 = vld [vmem:[%s342 + $0xa0] sm:$0xff]
    %v805 = vld [vmem:[%s342 + $0xa8] sm:$0xff]
    %v806 = vld [vmem:[%s342 + $0xb0] sm:$0xff]
    %v807 = vld [vmem:[%s342 + $0xb8] sm:$0xff]
    %v808 = vld [vmem:[%s342 + $0xc0] sm:$0xff]
    %v809 = vld [vmem:[%s342 + $0xc8] sm:$0xff]
    %v810 = vld [vmem:[%s342 + $0xd0] sm:$0xff]
    %v811 = vld [vmem:[%s342 + $0xd8] sm:$0xff]
    %v812 = vld [vmem:[%s342 + $0xe0] sm:$0xff]
    %v813 = vld [vmem:[%s342 + $0xe8] sm:$0xff]
    %v814 = vld [vmem:[%s342 + $0xf0] sm:$0xff]
    %v815 = vld [vmem:[%s342 + $0xf8] sm:$0xff]
    %v816 = vld [vmem:[%s375] sm:$0x1]
    %817 = vmatprep.subr.mxu0 0.0
    %818 = vmatpush1.msra.mxu0 %v784
    %819 = vmatprep.subr.mxu0 0.0
    %820 = vmatpush1.msra.mxu0 %v785
    %821 = vmatprep.subr.mxu0 0.0
    %822 = vmatpush1.msra.mxu0 %v786
    %823 = vmatprep.subr.mxu0 0.0
    %824 = vmatpush1.msra.mxu0 %v787
    %825 = vmatprep.subr.mxu0 0.0
    %826 = vmatpush1.msra.mxu0 %v788
    %827 = vmatprep.subr.mxu0 0.0
    %828 = vmatpush1.msra.mxu0 %v789
    %829 = vmatprep.subr.mxu0 0.0
    %830 = vmatpush1.msra.mxu0 %v790
    %831 = vmatprep.subr.mxu0 0.0
    %832 = vmatpush1.msra.mxu0 %v791
    %833 = vmatprep.subr.mxu0 0.0
    %834 = vmatpush1.msra.mxu0 %v792
    %835 = vmatprep.subr.mxu0 0.0
    %836 = vmatpush1.msra.mxu0 %v793
    %837 = vmatprep.subr.mxu0 0.0
    %838 = vmatpush1.msra.mxu0 %v794
    %839 = vmatprep.subr.mxu0 0.0
    %840 = vmatpush1.msra.mxu0 %v795
    %841 = vmatprep.subr.mxu0 0.0
    %842 = vmatpush1.msra.mxu0 %v796
    %843 = vmatprep.subr.mxu0 0.0
    %844 = vmatpush1.msra.mxu0 %v797
    %845 = vmatprep.subr.mxu0 0.0
    %846 = vmatpush1.msra.mxu0 %v798
    %847 = vmatprep.subr.mxu0 0.0
    %848 = vmatpush1.msra.mxu0 %v799
    %849 = vmatprep.subr.mxu0 0.0
    %850 = vmatpush1.msra.mxu0 %v800
    %851 = vmatprep.subr.mxu0 0.0
    %852 = vmatpush1.msra.mxu0 %v801
    %853 = vmatprep.subr.mxu0 0.0
    %854 = vmatpush1.msra.mxu0 %v802
    %855 = vmatprep.subr.mxu0 0.0
    %856 = vmatpush1.msra.mxu0 %v803
    %857 = vmatprep.subr.mxu0 0.0
    %858 = vmatpush1.msra.mxu0 %v804
    %859 = vmatprep.subr.mxu0 0.0
    %860 = vmatpush1.msra.mxu0 %v805
    %861 = vmatprep.subr.mxu0 0.0
    %862 = vmatpush1.msra.mxu0 %v806
    %863 = vmatprep.subr.mxu0 0.0
    %864 = vmatpush1.msra.mxu0 %v807
    %865 = vmatprep.subr.mxu0 0.0
    %866 = vmatpush1.msra.mxu0 %v808
    %867 = vmatprep.subr.mxu0 0.0
    %868 = vmatpush1.msra.mxu0 %v809
    %869 = vmatprep.subr.mxu0 0.0
    %870 = vmatpush1.msra.mxu0 %v810
    %871 = vmatprep.subr.mxu0 0.0
    %872 = vmatpush1.msra.mxu0 %v811
    %873 = vmatprep.subr.mxu0 0.0
    %874 = vmatpush1.msra.mxu0 %v812
    %875 = vmatprep.subr.mxu0 0.0
    %876 = vmatpush1.msra.mxu0 %v813
    %877 = vmatprep.subr.mxu0 0.0
    %878 = vmatpush1.msra.mxu0 %v814
    %879 = vmatprep.subr.mxu0 0.0
    %880 = vmatpush1.msra.mxu0 %v815
    %881 = vmatprep.mubr.f32.mxu0 %v680
    %882 = vmatmul.mubr.f32.gmra.mrb[0].mxu0 %v563
    %v883 = vpop.f32.mrb[0].mxu0
    %v884 = vadd.f32 %v816, %v883
    %v885 = vpop.f32.mrb[0].mxu0
    %886 = vdwg.mxu0
    %v887 = vtanh.pop %v884
    %v888 = vmul.f32 %v40, %v887
    %v889 = vadd.f32 %v888, %v41
    %890 = vrot.lane.b32.xlu0 %v889, 96
    %v891 = vpop.permute.xlu0 %890
    %892 = vrot.lane.b32.xlu0 %v889, 64
    %v893 = vpop.permute.xlu0 %892
    %894 = vrot.lane.b32.xlu0 %v889, 32
    %v895 = vpop.permute.xlu0 %894
    %v896 = vmul.f32 %v891, %v678
    %v897 = vmul.f32 %v889, %v893
    %v898 = vadd.f32 %v896, %v897
    %v899 = vtanh.pop %v898
    %v900 = vmul.f32 %v895, %v899
    %901 = vst [vmem:[#allocation2 + $0x2] sm:$0x1] %v900
    %v902 = vld [vmem:[#allocation3 + $0x4] sm:$0x1]
    %v903 = vld [vmem:[#allocation4 + $0x80] sm:$0xff]
    %v904 = vld [vmem:[#allocation4 + $0x88] sm:$0xff]
    %v905 = vld [vmem:[#allocation4 + $0x90] sm:$0xff]
    %v906 = vld [vmem:[#allocation4 + $0x98] sm:$0xff]
    %v907 = vld [vmem:[#allocation4 + $0xa0] sm:$0xff]
    %v908 = vld [vmem:[#allocation4 + $0xa8] sm:$0xff]
    %v909 = vld [vmem:[#allocation4 + $0xb0] sm:$0xff]
    %v910 = vld [vmem:[#allocation4 + $0xb8] sm:$0xff]
    %v911 = vld [vmem:[#allocation4 + $0xc0] sm:$0xff]
    %v912 = vld [vmem:[#allocation4 + $0xc8] sm:$0xff]
    %v913 = vld [vmem:[#allocation4 + $0xd0] sm:$0xff]
    %v914 = vld [vmem:[#allocation4 + $0xd8] sm:$0xff]
    %v915 = vld [vmem:[#allocation4 + $0xe0] sm:$0xff]
    %v916 = vld [vmem:[#allocation4 + $0xe8] sm:$0xff]
    %v917 = vld [vmem:[#allocation4 + $0xf0] sm:$0xff]
    %v918 = vld [vmem:[#allocation4 + $0xf8] sm:$0xff]
    %919 = vmatprep.subr.mxu0 0.0
    %920 = vmatpush1.msra.mxu0 %v903
    %921 = vmatprep.subr.mxu0 0.0
    %922 = vmatpush1.msra.mxu0 %v904
    %923 = vmatprep.subr.mxu0 0.0
    %924 = vmatpush1.msra.mxu0 %v905
    %925 = vmatprep.subr.mxu0 0.0
    %926 = vmatpush1.msra.mxu0 %v906
    %927 = vmatprep.subr.mxu0 0.0
    %928 = vmatpush1.msra.mxu0 %v907
    %929 = vmatprep.subr.mxu0 0.0
    %930 = vmatpush1.msra.mxu0 %v908
    %931 = vmatprep.subr.mxu0 0.0
    %932 = vmatpush1.msra.mxu0 %v909
    %933 = vmatprep.subr.mxu0 0.0
    %934 = vmatpush1.msra.mxu0 %v910
    %935 = vmatprep.subr.mxu0 0.0
    %936 = vmatpush1.msra.mxu0 %v911
    %937 = vmatprep.subr.mxu0 0.0
    %938 = vmatpush1.msra.mxu0 %v912
    %939 = vmatprep.subr.mxu0 0.0
    %940 = vmatpush1.msra.mxu0 %v913
    %941 = vmatprep.subr.mxu0 0.0
    %942 = vmatpush1.msra.mxu0 %v914
    %943 = vmatprep.subr.mxu0 0.0
    %944 = vmatpush1.msra.mxu0 %v915
    %945 = vmatprep.subr.mxu0 0.0
    %946 = vmatpush1.msra.mxu0 %v916
    %947 = vmatprep.subr.mxu0 0.0
    %948 = vmatpush1.msra.mxu0 %v917
    %949 = vmatprep.subr.mxu0 0.0
    %950 = vmatpush1.msra.mxu0 %v918
    %951 = vmatprep.subr.mxu0 0.0
    %952 = vmatpush1.msra.mxu0 0.0
    %953 = vmatprep.subr.mxu0 0.0
    %954 = vmatpush1.msra.mxu0 0.0
    %955 = vmatprep.subr.mxu0 0.0
    %956 = vmatpush1.msra.mxu0 0.0
    %957 = vmatprep.subr.mxu0 0.0
    %958 = vmatpush1.msra.mxu0 0.0
    %959 = vmatprep.subr.mxu0 0.0
    %960 = vmatpush1.msra.mxu0 0.0
    %961 = vmatprep.subr.mxu0 0.0
    %962 = vmatpush1.msra.mxu0 0.0
    %963 = vmatprep.subr.mxu0 0.0
    %964 = vmatpush1.msra.mxu0 0.0
    %965 = vmatprep.subr.mxu0 0.0
    %966 = vmatpush1.msra.mxu0 0.0
    %967 = vmatprep.subr.mxu0 0.0
    %968 = vmatpush1.msra.mxu0 0.0
    %969 = vmatprep.subr.mxu0 0.0
    %970 = vmatpush1.msra.mxu0 0.0
    %971 = vmatprep.subr.mxu0 0.0
    %972 = vmatpush1.msra.mxu0 0.0
    %973 = vmatprep.subr.mxu0 0.0
    %974 = vmatpush1.msra.mxu0 0.0
    %975 = vmatprep.subr.mxu0 0.0
    %976 = vmatpush1.msra.mxu0 0.0
    %977 = vmatprep.subr.mxu0 0.0
    %978 = vmatpush1.msra.mxu0 0.0
    %979 = vmatprep.subr.mxu0 0.0
    %980 = vmatpush1.msra.mxu0 0.0
    %981 = vmatprep.subr.mxu0 0.0
    %982 = vmatpush1.msra.mxu0 0.0
    %983 = vmatprep.mubr.f32.mxu0 0.0
    %984 = vmatmul.mubr.f32.gmra.mrb[0].mxu0 %v783
    %v985 = vpop.f32.mrb[0].mxu0
    %v986 = vadd.f32 0.0, %v985
    %v987 = vpop.f32.mrb[0].mxu0
    %988 = vdwg.mxu0
    %v989 = vadd.f32 %v902, %v986
    %v990 = vtanh.pop %v989
    %v991 = vmul.f32 %v40, %v990
    %v992 = vadd.f32 %v991, %v41
    %993 = vrot.lane.b32.xlu0 %v992, 96
    %v994 = vpop.permute.xlu0 %993
    %995 = vrot.lane.b32.xlu0 %v992, 64
    %v996 = vpop.permute.xlu0 %995
    %997 = vrot.lane.b32.xlu0 %v992, 32
    %v998 = vpop.permute.xlu0 %997
    %v999 = vmul.f32 %v994, %v781
    %v1000 = vmul.f32 %v992, %v996
    %v1001 = vadd.f32 %v999, %v1000
    %v1002 = vtanh.pop %v1001
    %v1003 = vmul.f32 %v998, %v1002
    %v1004 = vld [vmem:[%s342] sm:$0xff]
    %v1005 = vld [vmem:[%s342 + $0x8] sm:$0xff]
    %v1006 = vld [vmem:[%s342 + $0x10] sm:$0xff]
    %v1007 = vld [vmem:[%s342 + $0x18] sm:$0xff]
    %v1008 = vld [vmem:[%s342 + $0x20] sm:$0xff]
    %v1009 = vld [vmem:[%s342 + $0x28] sm:$0xff]
    %v1010 = vld [vmem:[%s342 + $0x30] sm:$0xff]
    %v1011 = vld [vmem:[%s342 + $0x38] sm:$0xff]
    %v1012 = vld [vmem:[%s342 + $0x40] sm:$0xff]
    %v1013 = vld [vmem:[%s342 + $0x48] sm:$0xff]
    %v1014 = vld [vmem:[%s342 + $0x50] sm:$0xff]
    %v1015 = vld [vmem:[%s342 + $0x58] sm:$0xff]
    %v1016 = vld [vmem:[%s342 + $0x60] sm:$0xff]
    %v1017 = vld [vmem:[%s342 + $0x68] sm:$0xff]
    %v1018 = vld [vmem:[%s342 + $0x70] sm:$0xff]
    %v1019 = vld [vmem:[%s342 + $0x78] sm:$0xff]
    %v1020 = vld [vmem:[%s342 + $0x80] sm:$0xff]
    %v1021 = vld [vmem:[%s342 + $0x88] sm:$0xff]
    %v1022 = vld [vmem:[%s342 + $0x90] sm:$0xff]
    %v1023 = vld [vmem:[%s342 + $0x98] sm:$0xff]
    %v1024 = vld [vmem:[%s342 + $0xa0] sm:$0xff]
    %v1025 = vld [vmem:[%s342 + $0xa8] sm:$0xff]
    %v1026 = vld [vmem:[%s342 + $0xb0] sm:$0xff]
    %v1027 = vld [vmem:[%s342 + $0xb8] sm:$0xff]
    %v1028 = vld [vmem:[%s342 + $0xc0] sm:$0xff]
    %v1029 = vld [vmem:[%s342 + $0xc8] sm:$0xff]
    %v1030 = vld [vmem:[%s342 + $0xd0] sm:$0xff]
    %v1031 = vld [vmem:[%s342 + $0xd8] sm:$0xff]
    %v1032 = vld [vmem:[%s342 + $0xe0] sm:$0xff]
    %v1033 = vld [vmem:[%s342 + $0xe8] sm:$0xff]
    %v1034 = vld [vmem:[%s342 + $0xf0] sm:$0xff]
    %v1035 = vld [vmem:[%s342 + $0xf8] sm:$0xff]
    %v1036 = vld [vmem:[%s375] sm:$0x1]
    %1037 = vmatprep.subr.mxu0 0.0
    %1038 = vmatpush1.msra.mxu0 %v1004
    %1039 = vmatprep.subr.mxu0 0.0
    %1040 = vmatpush1.msra.mxu0 %v1005
    %1041 = vmatprep.subr.mxu0 0.0
    %1042 = vmatpush1.msra.mxu0 %v1006
    %1043 = vmatprep.subr.mxu0 0.0
    %1044 = vmatpush1.msra.mxu0 %v1007
    %1045 = vmatprep.subr.mxu0 0.0
    %1046 = vmatpush1.msra.mxu0 %v1008
    %1047 = vmatprep.subr.mxu0 0.0
    %1048 = vmatpush1.msra.mxu0 %v1009
    %1049 = vmatprep.subr.mxu0 0.0
    %1050 = vmatpush1.msra.mxu0 %v1010
    %1051 = vmatprep.subr.mxu0 0.0
    %1052 = vmatpush1.msra.mxu0 %v1011
    %1053 = vmatprep.subr.mxu0 0.0
    %1054 = vmatpush1.msra.mxu0 %v1012
    %1055 = vmatprep.subr.mxu0 0.0
    %1056 = vmatpush1.msra.mxu0 %v1013
    %1057 = vmatprep.subr.mxu0 0.0
    %1058 = vmatpush1.msra.mxu0 %v1014
    %1059 = vmatprep.subr.mxu0 0.0
    %1060 = vmatpush1.msra.mxu0 %v1015
    %1061 = vmatprep.subr.mxu0 0.0
    %1062 = vmatpush1.msra.mxu0 %v1016
    %1063 = vmatprep.subr.mxu0 0.0
    %1064 = vmatpush1.msra.mxu0 %v1017
    %1065 = vmatprep.subr.mxu0 0.0
    %1066 = vmatpush1.msra.mxu0 %v1018
    %1067 = vmatprep.subr.mxu0 0.0
    %1068 = vmatpush1.msra.mxu0 %v1019
    %1069 = vmatprep.subr.mxu0 0.0
    %1070 = vmatpush1.msra.mxu0 %v1020
    %1071 = vmatprep.subr.mxu0 0.0
    %1072 = vmatpush1.msra.mxu0 %v1021
    %1073 = vmatprep.subr.mxu0 0.0
    %1074 = vmatpush1.msra.mxu0 %v1022
    %1075 = vmatprep.subr.mxu0 0.0
    %1076 = vmatpush1.msra.mxu0 %v1023
    %1077 = vmatprep.subr.mxu0 0.0
    %1078 = vmatpush1.msra.mxu0 %v1024
    %1079 = vmatprep.subr.mxu0 0.0
    %1080 = vmatpush1.msra.mxu0 %v1025
    %1081 = vmatprep.subr.mxu0 0.0
    %1082 = vmatpush1.msra.mxu0 %v1026
    %1083 = vmatprep.subr.mxu0 0.0
    %1084 = vmatpush1.msra.mxu0 %v1027
    %1085 = vmatprep.subr.mxu0 0.0
    %1086 = vmatpush1.msra.mxu0 %v1028
    %1087 = vmatprep.subr.mxu0 0.0
    %1088 = vmatpush1.msra.mxu0 %v1029
    %1089 = vmatprep.subr.mxu0 0.0
    %1090 = vmatpush1.msra.mxu0 %v1030
    %1091 = vmatprep.subr.mxu0 0.0
    %1092 = vmatpush1.msra.mxu0 %v1031
    %1093 = vmatprep.subr.mxu0 0.0
    %1094 = vmatpush1.msra.mxu0 %v1032
    %1095 = vmatprep.subr.mxu0 0.0
    %1096 = vmatpush1.msra.mxu0 %v1033
    %1097 = vmatprep.subr.mxu0 0.0
    %1098 = vmatpush1.msra.mxu0 %v1034
    %1099 = vmatprep.subr.mxu0 0.0
    %1100 = vmatpush1.msra.mxu0 %v1035
    %1101 = vmatprep.mubr.f32.mxu0 %v900
    %1102 = vmatmul.mubr.f32.gmra.mrb[0].mxu0 %v783
    %v1103 = vpop.f32.mrb[0].mxu0
    %v1104 = vadd.f32 %v1036, %v1103
    %v1105 = vpop.f32.mrb[0].mxu0
    %1106 = vdwg.mxu0
    %v1107 = vtanh.pop %v1104
    %v1108 = vmul.f32 %v40, %v1107
    %v1109 = vadd.f32 %v1108, %v41
    %1110 = vrot.lane.b32.xlu0 %v1109, 96
    %v1111 = vpop.permute.xlu0 %1110
    %1112 = vrot.lane.b32.xlu0 %v1109, 64
    %v1113 = vpop.permute.xlu0 %1112
    %1114 = vrot.lane.b32.xlu0 %v1109, 32
    %v1115 = vpop.permute.xlu0 %1114
    %v1116 = vmul.f32 %v1111, %v898
    %v1117 = vmul.f32 %v1109, %v1113
    %v1118 = vadd.f32 %v1116, %v1117
    %v1119 = vtanh.pop %v1118
    %v1120 = vmul.f32 %v1115, %v1119
    %1121 = vst [vmem:[#allocation2 + $0x3] sm:$0x1] %v1120
    %v1122 = vld [vmem:[#allocation3 + $0x5] sm:$0x1]
    %v1123 = vld [vmem:[#allocation4 + $0x80] sm:$0xff]
    %v1124 = vld [vmem:[#allocation4 + $0x88] sm:$0xff]
    %v1125 = vld [vmem:[#allocation4 + $0x90] sm:$0xff]
    %v1126 = vld [vmem:[#allocation4 + $0x98] sm:$0xff]
    %v1127 = vld [vmem:[#allocation4 + $0xa0] sm:$0xff]
    %v1128 = vld [vmem:[#allocation4 + $0xa8] sm:$0xff]
    %v1129 = vld [vmem:[#allocation4 + $0xb0] sm:$0xff]
    %v1130 = vld [vmem:[#allocation4 + $0xb8] sm:$0xff]
    %v1131 = vld [vmem:[#allocation4 + $0xc0] sm:$0xff]
    %v1132 = vld [vmem:[#allocation4 + $0xc8] sm:$0xff]
    %v1133 = vld [vmem:[#allocation4 + $0xd0] sm:$0xff]
    %v1134 = vld [vmem:[#allocation4 + $0xd8] sm:$0xff]
    %v1135 = vld [vmem:[#allocation4 + $0xe0] sm:$0xff]
    %v1136 = vld [vmem:[#allocation4 + $0xe8] sm:$0xff]
    %v1137 = vld [vmem:[#allocation4 + $0xf0] sm:$0xff]
    %v1138 = vld [vmem:[#allocation4 + $0xf8] sm:$0xff]
    %1139 = vmatprep.subr.mxu0 0.0
    %1140 = vmatpush1.msra.mxu0 %v1123
    %1141 = vmatprep.subr.mxu0 0.0
    %1142 = vmatpush1.msra.mxu0 %v1124
    %1143 = vmatprep.subr.mxu0 0.0
    %1144 = vmatpush1.msra.mxu0 %v1125
    %1145 = vmatprep.subr.mxu0 0.0
    %1146 = vmatpush1.msra.mxu0 %v1126
    %1147 = vmatprep.subr.mxu0 0.0
    %1148 = vmatpush1.msra.mxu0 %v1127
    %1149 = vmatprep.subr.mxu0 0.0
    %1150 = vmatpush1.msra.mxu0 %v1128
    %1151 = vmatprep.subr.mxu0 0.0
    %1152 = vmatpush1.msra.mxu0 %v1129
    %1153 = vmatprep.subr.mxu0 0.0
    %1154 = vmatpush1.msra.mxu0 %v1130
    %1155 = vmatprep.subr.mxu0 0.0
    %1156 = vmatpush1.msra.mxu0 %v1131
    %1157 = vmatprep.subr.mxu0 0.0
    %1158 = vmatpush1.msra.mxu0 %v1132
    %1159 = vmatprep.subr.mxu0 0.0
    %1160 = vmatpush1.msra.mxu0 %v1133
    %1161 = vmatprep.subr.mxu0 0.0
    %1162 = vmatpush1.msra.mxu0 %v1134
    %1163 = vmatprep.subr.mxu0 0.0
    %1164 = vmatpush1.msra.mxu0 %v1135
    %1165 = vmatprep.subr.mxu0 0.0
    %1166 = vmatpush1.msra.mxu0 %v1136
    %1167 = vmatprep.subr.mxu0 0.0
    %1168 = vmatpush1.msra.mxu0 %v1137
    %1169 = vmatprep.subr.mxu0 0.0
    %1170 = vmatpush1.msra.mxu0 %v1138
    %1171 = vmatprep.subr.mxu0 0.0
    %1172 = vmatpush1.msra.mxu0 0.0
    %1173 = vmatprep.subr.mxu0 0.0
    %1174 = vmatpush1.msra.mxu0 0.0
    %1175 = vmatprep.subr.mxu0 0.0
    %1176 = vmatpush1.msra.mxu0 0.0
    %1177 = vmatprep.subr.mxu0 0.0
    %1178 = vmatpush1.msra.mxu0 0.0
    %1179 = vmatprep.subr.mxu0 0.0
    %1180 = vmatpush1.msra.mxu0 0.0
    %1181 = vmatprep.subr.mxu0 0.0
    %1182 = vmatpush1.msra.mxu0 0.0
    %1183 = vmatprep.subr.mxu0 0.0
    %1184 = vmatpush1.msra.mxu0 0.0
    %1185 = vmatprep.subr.mxu0 0.0
    %1186 = vmatpush1.msra.mxu0 0.0
    %1187 = vmatprep.subr.mxu0 0.0
    %1188 = vmatpush1.msra.mxu0 0.0
    %1189 = vmatprep.subr.mxu0 0.0
    %1190 = vmatpush1.msra.mxu0 0.0
    %1191 = vmatprep.subr.mxu0 0.0
    %1192 = vmatpush1.msra.mxu0 0.0
    %1193 = vmatprep.subr.mxu0 0.0
    %1194 = vmatpush1.msra.mxu0 0.0
    %1195 = vmatprep.subr.mxu0 0.0
    %1196 = vmatpush1.msra.mxu0 0.0
    %1197 = vmatprep.subr.mxu0 0.0
    %1198 = vmatpush1.msra.mxu0 0.0
    %1199 = vmatprep.subr.mxu0 0.0
    %1200 = vmatpush1.msra.mxu0 0.0
    %1201 = vmatprep.subr.mxu0 0.0
    %1202 = vmatpush1.msra.mxu0 0.0
    %1203 = vmatprep.mubr.f32.mxu0 0.0
    %1204 = vmatmul.mubr.f32.gmra.mrb[0].mxu0 %v1003
    %v1205 = vpop.f32.mrb[0].mxu0
    %v1206 = vadd.f32 0.0, %v1205
    %v1207 = vpop.f32.mrb[0].mxu0
    %1208 = vdwg.mxu0
    %v1209 = vadd.f32 %v1122, %v1206
    %v1210 = vtanh.pop %v1209
    %v1211 = vmul.f32 %v40, %v1210
    %v1212 = vadd.f32 %v1211, %v41
    %1213 = vrot.lane.b32.xlu0 %v1212, 96
    %v1214 = vpop.permute.xlu0 %1213
    %1215 = vrot.lane.b32.xlu0 %v1212, 64
    %v1216 = vpop.permute.xlu0 %1215
    %1217 = vrot.lane.b32.xlu0 %v1212, 32
    %v1218 = vpop.permute.xlu0 %1217
    %v1219 = vmul.f32 %v1214, %v1001
    %v1220 = vmul.f32 %v1212, %v1216
    %v1221 = vadd.f32 %v1219, %v1220
    %v1222 = vtanh.pop %v1221
    %v1223 = vmul.f32 %v1218, %v1222
    %v1224 = vld [vmem:[%s342] sm:$0xff]
    %v1225 = vld [vmem:[%s342 + $0x8] sm:$0xff]
    %v1226 = vld [vmem:[%s342 + $0x10] sm:$0xff]
    %v1227 = vld [vmem:[%s342 + $0x18] sm:$0xff]
    %v1228 = vld [vmem:[%s342 + $0x20] sm:$0xff]
    %v1229 = vld [vmem:[%s342 + $0x28] sm:$0xff]
    %v1230 = vld [vmem:[%s342 + $0x30] sm:$0xff]
    %v1231 = vld [vmem:[%s342 + $0x38] sm:$0xff]
    %v1232 = vld [vmem:[%s342 + $0x40] sm:$0xff]
    %v1233 = vld [vmem:[%s342 + $0x48] sm:$0xff]
    %v1234 = vld [vmem:[%s342 + $0x50] sm:$0xff]
    %v1235 = vld [vmem:[%s342 + $0x58] sm:$0xff]
    %v1236 = vld [vmem:[%s342 + $0x60] sm:$0xff]
    %v1237 = vld [vmem:[%s342 + $0x68] sm:$0xff]
    %v1238 = vld [vmem:[%s342 + $0x70] sm:$0xff]
    %v1239 = vld [vmem:[%s342 + $0x78] sm:$0xff]
    %v1240 = vld [vmem:[%s342 + $0x80] sm:$0xff]
    %v1241 = vld [vmem:[%s342 + $0x88] sm:$0xff]
    %v1242 = vld [vmem:[%s342 + $0x90] sm:$0xff]
    %v1243 = vld [vmem:[%s342 + $0x98] sm:$0xff]
    %v1244 = vld [vmem:[%s342 + $0xa0] sm:$0xff]
    %v1245 = vld [vmem:[%s342 + $0xa8] sm:$0xff]
    %v1246 = vld [vmem:[%s342 + $0xb0] sm:$0xff]
    %v1247 = vld [vmem:[%s342 + $0xb8] sm:$0xff]
    %v1248 = vld [vmem:[%s342 + $0xc0] sm:$0xff]
    %v1249 = vld [vmem:[%s342 + $0xc8] sm:$0xff]
    %v1250 = vld [vmem:[%s342 + $0xd0] sm:$0xff]
    %v1251 = vld [vmem:[%s342 + $0xd8] sm:$0xff]
    %v1252 = vld [vmem:[%s342 + $0xe0] sm:$0xff]
    %v1253 = vld [vmem:[%s342 + $0xe8] sm:$0xff]
    %v1254 = vld [vmem:[%s342 + $0xf0] sm:$0xff]
    %v1255 = vld [vmem:[%s342 + $0xf8] sm:$0xff]
    %v1256 = vld [vmem:[%s375] sm:$0x1]
    %1257 = vmatprep.subr.mxu0 0.0
    %1258 = vmatpush1.msra.mxu0 %v1224
    %1259 = vmatprep.subr.mxu0 0.0
    %1260 = vmatpush1.msra.mxu0 %v1225
    %1261 = vmatprep.subr.mxu0 0.0
    %1262 = vmatpush1.msra.mxu0 %v1226
    %1263 = vmatprep.subr.mxu0 0.0
    %1264 = vmatpush1.msra.mxu0 %v1227
    %1265 = vmatprep.subr.mxu0 0.0
    %1266 = vmatpush1.msra.mxu0 %v1228
    %1267 = vmatprep.subr.mxu0 0.0
    %1268 = vmatpush1.msra.mxu0 %v1229
    %1269 = vmatprep.subr.mxu0 0.0
    %1270 = vmatpush1.msra.mxu0 %v1230
    %1271 = vmatprep.subr.mxu0 0.0
    %1272 = vmatpush1.msra.mxu0 %v1231
    %1273 = vmatprep.subr.mxu0 0.0
    %1274 = vmatpush1.msra.mxu0 %v1232
    %1275 = vmatprep.subr.mxu0 0.0
    %1276 = vmatpush1.msra.mxu0 %v1233
    %1277 = vmatprep.subr.mxu0 0.0
    %1278 = vmatpush1.msra.mxu0 %v1234
    %1279 = vmatprep.subr.mxu0 0.0
    %1280 = vmatpush1.msra.mxu0 %v1235
    %1281 = vmatprep.subr.mxu0 0.0
    %1282 = vmatpush1.msra.mxu0 %v1236
    %1283 = vmatprep.subr.mxu0 0.0
    %1284 = vmatpush1.msra.mxu0 %v1237
    %1285 = vmatprep.subr.mxu0 0.0
    %1286 = vmatpush1.msra.mxu0 %v1238
    %1287 = vmatprep.subr.mxu0 0.0
    %1288 = vmatpush1.msra.mxu0 %v1239
    %1289 = vmatprep.subr.mxu0 0.0
    %1290 = vmatpush1.msra.mxu0 %v1240
    %1291 = vmatprep.subr.mxu0 0.0
    %1292 = vmatpush1.msra.mxu0 %v1241
    %1293 = vmatprep.subr.mxu0 0.0
    %1294 = vmatpush1.msra.mxu0 %v1242
    %1295 = vmatprep.subr.mxu0 0.0
    %1296 = vmatpush1.msra.mxu0 %v1243
    %1297 = vmatprep.subr.mxu0 0.0
    %1298 = vmatpush1.msra.mxu0 %v1244
    %1299 = vmatprep.subr.mxu0 0.0
    %1300 = vmatpush1.msra.mxu0 %v1245
    %1301 = vmatprep.subr.mxu0 0.0
    %1302 = vmatpush1.msra.mxu0 %v1246
    %1303 = vmatprep.subr.mxu0 0.0
    %1304 = vmatpush1.msra.mxu0 %v1247
    %1305 = vmatprep.subr.mxu0 0.0
    %1306 = vmatpush1.msra.mxu0 %v1248
    %1307 = vmatprep.subr.mxu0 0.0
    %1308 = vmatpush1.msra.mxu0 %v1249
    %1309 = vmatprep.subr.mxu0 0.0
    %1310 = vmatpush1.msra.mxu0 %v1250
    %1311 = vmatprep.subr.mxu0 0.0
    %1312 = vmatpush1.msra.mxu0 %v1251
    %1313 = vmatprep.subr.mxu0 0.0
    %1314 = vmatpush1.msra.mxu0 %v1252
    %1315 = vmatprep.subr.mxu0 0.0
    %1316 = vmatpush1.msra.mxu0 %v1253
    %1317 = vmatprep.subr.mxu0 0.0
    %1318 = vmatpush1.msra.mxu0 %v1254
    %1319 = vmatprep.subr.mxu0 0.0
    %1320 = vmatpush1.msra.mxu0 %v1255
    %1321 = vmatprep.mubr.f32.mxu0 %v1120
    %1322 = vmatmul.mubr.f32.gmra.mrb[0].mxu0 %v1003
    %v1323 = vpop.f32.mrb[0].mxu0
    %v1324 = vadd.f32 %v1256, %v1323
    %v1325 = vpop.f32.mrb[0].mxu0
    %1326 = vdwg.mxu0
    %v1327 = vtanh.pop %v1324
    %v1328 = vmul.f32 %v40, %v1327
    %v1329 = vadd.f32 %v1328, %v41
    %1330 = vrot.lane.b32.xlu0 %v1329, 96
    %v1331 = vpop.permute.xlu0 %1330
    %1332 = vrot.lane.b32.xlu0 %v1329, 64
    %v1333 = vpop.permute.xlu0 %1332
    %1334 = vrot.lane.b32.xlu0 %v1329, 32
    %v1335 = vpop.permute.xlu0 %1334
    %v1336 = vmul.f32 %v1331, %v1118
    %v1337 = vmul.f32 %v1329, %v1333
    %v1338 = vadd.f32 %v1336, %v1337
    %v1339 = vtanh.pop %v1338
    %v1340 = vmul.f32 %v1335, %v1339
    %1341 = vst [vmem:[#allocation2 + $0x4] sm:$0x1] %v1340
    %v1342 = vld [vmem:[#allocation3 + $0x6] sm:$0x1]
    %v1343 = vld [vmem:[#allocation4 + $0x80] sm:$0xff]
    %v1344 = vld [vmem:[#allocation4 + $0x88] sm:$0xff]
    %v1345 = vld [vmem:[#allocation4 + $0x90] sm:$0xff]
    %v1346 = vld [vmem:[#allocation4 + $0x98] sm:$0xff]
    %v1347 = vld [vmem:[#allocation4 + $0xa0] sm:$0xff]
    %v1348 = vld [vmem:[#allocation4 + $0xa8] sm:$0xff]
    %v1349 = vld [vmem:[#allocation4 + $0xb0] sm:$0xff]
    %v1350 = vld [vmem:[#allocation4 + $0xb8] sm:$0xff]
    %v1351 = vld [vmem:[#allocation4 + $0xc0] sm:$0xff]
    %v1352 = vld [vmem:[#allocation4 + $0xc8] sm:$0xff]
    %v1353 = vld [vmem:[#allocation4 + $0xd0] sm:$0xff]
    %v1354 = vld [vmem:[#allocation4 + $0xd8] sm:$0xff]
    %v1355 = vld [vmem:[#allocation4 + $0xe0] sm:$0xff]
    %v1356 = vld [vmem:[#allocation4 + $0xe8] sm:$0xff]
    %v1357 = vld [vmem:[#allocation4 + $0xf0] sm:$0xff]
    %v1358 = vld [vmem:[#allocation4 + $0xf8] sm:$0xff]
    %1359 = vmatprep.subr.mxu0 0.0
    %1360 = vmatpush1.msra.mxu0 %v1343
    %1361 = vmatprep.subr.mxu0 0.0
    %1362 = vmatpush1.msra.mxu0 %v1344
    %1363 = vmatprep.subr.mxu0 0.0
    %1364 = vmatpush1.msra.mxu0 %v1345
    %1365 = vmatprep.subr.mxu0 0.0
    %1366 = vmatpush1.msra.mxu0 %v1346
    %1367 = vmatprep.subr.mxu0 0.0
    %1368 = vmatpush1.msra.mxu0 %v1347
    %1369 = vmatprep.subr.mxu0 0.0
    %1370 = vmatpush1.msra.mxu0 %v1348
    %1371 = vmatprep.subr.mxu0 0.0
    %1372 = vmatpush1.msra.mxu0 %v1349
    %1373 = vmatprep.subr.mxu0 0.0
    %1374 = vmatpush1.msra.mxu0 %v1350
    %1375 = vmatprep.subr.mxu0 0.0
    %1376 = vmatpush1.msra.mxu0 %v1351
    %1377 = vmatprep.subr.mxu0 0.0
    %1378 = vmatpush1.msra.mxu0 %v1352
    %1379 = vmatprep.subr.mxu0 0.0
    %1380 = vmatpush1.msra.mxu0 %v1353
    %1381 = vmatprep.subr.mxu0 0.0
    %1382 = vmatpush1.msra.mxu0 %v1354
    %1383 = vmatprep.subr.mxu0 0.0
    %1384 = vmatpush1.msra.mxu0 %v1355
    %1385 = vmatprep.subr.mxu0 0.0
    %1386 = vmatpush1.msra.mxu0 %v1356
    %1387 = vmatprep.subr.mxu0 0.0
    %1388 = vmatpush1.msra.mxu0 %v1357
    %1389 = vmatprep.subr.mxu0 0.0
    %1390 = vmatpush1.msra.mxu0 %v1358
    %1391 = vmatprep.subr.mxu0 0.0
    %1392 = vmatpush1.msra.mxu0 0.0
    %1393 = vmatprep.subr.mxu0 0.0
    %1394 = vmatpush1.msra.mxu0 0.0
    %1395 = vmatprep.subr.mxu0 0.0
    %1396 = vmatpush1.msra.mxu0 0.0
    %1397 = vmatprep.subr.mxu0 0.0
    %1398 = vmatpush1.msra.mxu0 0.0
    %1399 = vmatprep.subr.mxu0 0.0
    %1400 = vmatpush1.msra.mxu0 0.0
    %1401 = vmatprep.subr.mxu0 0.0
    %1402 = vmatpush1.msra.mxu0 0.0
    %1403 = vmatprep.subr.mxu0 0.0
    %1404 = vmatpush1.msra.mxu0 0.0
    %1405 = vmatprep.subr.mxu0 0.0
    %1406 = vmatpush1.msra.mxu0 0.0
    %1407 = vmatprep.subr.mxu0 0.0
    %1408 = vmatpush1.msra.mxu0 0.0
    %1409 = vmatprep.subr.mxu0 0.0
    %1410 = vmatpush1.msra.mxu0 0.0
    %1411 = vmatprep.subr.mxu0 0.0
    %1412 = vmatpush1.msra.mxu0 0.0
    %1413 = vmatprep.subr.mxu0 0.0
    %1414 = vmatpush1.msra.mxu0 0.0
    %1415 = vmatprep.subr.mxu0 0.0
    %1416 = vmatpush1.msra.mxu0 0.0
    %1417 = vmatprep.subr.mxu0 0.0
    %1418 = vmatpush1.msra.mxu0 0.0
    %1419 = vmatprep.subr.mxu0 0.0
    %1420 = vmatpush1.msra.mxu0 0.0
    %1421 = vmatprep.subr.mxu0 0.0
    %1422 = vmatpush1.msra.mxu0 0.0
    %1423 = vmatprep.mubr.f32.mxu0 0.0
    %1424 = vmatmul.mubr.f32.gmra.mrb[0].mxu0 %v1223
    %v1425 = vpop.f32.mrb[0].mxu0
    %v1426 = vadd.f32 0.0, %v1425
    %v1427 = vpop.f32.mrb[0].mxu0
    %1428 = vdwg.mxu0
    %v1429 = vadd.f32 %v1342, %v1426
    %v1430 = vtanh.pop %v1429
    %v1431 = vmul.f32 %v40, %v1430
    %v1432 = vadd.f32 %v1431, %v41
    %1433 = vrot.lane.b32.xlu0 %v1432, 96
    %v1434 = vpop.permute.xlu0 %1433
    %1435 = vrot.lane.b32.xlu0 %v1432, 64
    %v1436 = vpop.permute.xlu0 %1435
    %1437 = vrot.lane.b32.xlu0 %v1432, 32
    %v1438 = vpop.permute.xlu0 %1437
    %v1439 = vmul.f32 %v1434, %v1221
    %v1440 = vmul.f32 %v1432, %v1436
    %v1441 = vadd.f32 %v1439, %v1440
    %v1442 = vtanh.pop %v1441
    %v1443 = vmul.f32 %v1438, %v1442
    %v1444 = vld [vmem:[%s342] sm:$0xff]
    %v1445 = vld [vmem:[%s342 + $0x8] sm:$0xff]
    %v1446 = vld [vmem:[%s342 + $0x10] sm:$0xff]
    %v1447 = vld [vmem:[%s342 + $0x18] sm:$0xff]
    %v1448 = vld [vmem:[%s342 + $0x20] sm:$0xff]
    %v1449 = vld [vmem:[%s342 + $0x28] sm:$0xff]
    %v1450 = vld [vmem:[%s342 + $0x30] sm:$0xff]
    %v1451 = vld [vmem:[%s342 + $0x38] sm:$0xff]
    %v1452 = vld [vmem:[%s342 + $0x40] sm:$0xff]
    %v1453 = vld [vmem:[%s342 + $0x48] sm:$0xff]
    %v1454 = vld [vmem:[%s342 + $0x50] sm:$0xff]
    %v1455 = vld [vmem:[%s342 + $0x58] sm:$0xff]
    %v1456 = vld [vmem:[%s342 + $0x60] sm:$0xff]
    %v1457 = vld [vmem:[%s342 + $0x68] sm:$0xff]
    %v1458 = vld [vmem:[%s342 + $0x70] sm:$0xff]
    %v1459 = vld [vmem:[%s342 + $0x78] sm:$0xff]
    %v1460 = vld [vmem:[%s342 + $0x80] sm:$0xff]
    %v1461 = vld [vmem:[%s342 + $0x88] sm:$0xff]
    %v1462 = vld [vmem:[%s342 + $0x90] sm:$0xff]
    %v1463 = vld [vmem:[%s342 + $0x98] sm:$0xff]
    %v1464 = vld [vmem:[%s342 + $0xa0] sm:$0xff]
    %v1465 = vld [vmem:[%s342 + $0xa8] sm:$0xff]
    %v1466 = vld [vmem:[%s342 + $0xb0] sm:$0xff]
    %v1467 = vld [vmem:[%s342 + $0xb8] sm:$0xff]
    %v1468 = vld [vmem:[%s342 + $0xc0] sm:$0xff]
    %v1469 = vld [vmem:[%s342 + $0xc8] sm:$0xff]
    %v1470 = vld [vmem:[%s342 + $0xd0] sm:$0xff]
    %v1471 = vld [vmem:[%s342 + $0xd8] sm:$0xff]
    %v1472 = vld [vmem:[%s342 + $0xe0] sm:$0xff]
    %v1473 = vld [vmem:[%s342 + $0xe8] sm:$0xff]
    %v1474 = vld [vmem:[%s342 + $0xf0] sm:$0xff]
    %v1475 = vld [vmem:[%s342 + $0xf8] sm:$0xff]
    %v1476 = vld [vmem:[%s375] sm:$0x1]
    %1477 = vmatprep.subr.mxu0 0.0
    %1478 = vmatpush1.msra.mxu0 %v1444
    %1479 = vmatprep.subr.mxu0 0.0
    %1480 = vmatpush1.msra.mxu0 %v1445
    %1481 = vmatprep.subr.mxu0 0.0
    %1482 = vmatpush1.msra.mxu0 %v1446
    %1483 = vmatprep.subr.mxu0 0.0
    %1484 = vmatpush1.msra.mxu0 %v1447
    %1485 = vmatprep.subr.mxu0 0.0
    %1486 = vmatpush1.msra.mxu0 %v1448
    %1487 = vmatprep.subr.mxu0 0.0
    %1488 = vmatpush1.msra.mxu0 %v1449
    %1489 = vmatprep.subr.mxu0 0.0
    %1490 = vmatpush1.msra.mxu0 %v1450
    %1491 = vmatprep.subr.mxu0 0.0
    %1492 = vmatpush1.msra.mxu0 %v1451
    %1493 = vmatprep.subr.mxu0 0.0
    %1494 = vmatpush1.msra.mxu0 %v1452
    %1495 = vmatprep.subr.mxu0 0.0
    %1496 = vmatpush1.msra.mxu0 %v1453
    %1497 = vmatprep.subr.mxu0 0.0
    %1498 = vmatpush1.msra.mxu0 %v1454
    %1499 = vmatprep.subr.mxu0 0.0
    %1500 = vmatpush1.msra.mxu0 %v1455
    %1501 = vmatprep.subr.mxu0 0.0
    %1502 = vmatpush1.msra.mxu0 %v1456
    %1503 = vmatprep.subr.mxu0 0.0
    %1504 = vmatpush1.msra.mxu0 %v1457
    %1505 = vmatprep.subr.mxu0 0.0
    %1506 = vmatpush1.msra.mxu0 %v1458
    %1507 = vmatprep.subr.mxu0 0.0
    %1508 = vmatpush1.msra.mxu0 %v1459
    %1509 = vmatprep.subr.mxu0 0.0
    %1510 = vmatpush1.msra.mxu0 %v1460
    %1511 = vmatprep.subr.mxu0 0.0
    %1512 = vmatpush1.msra.mxu0 %v1461
    %1513 = vmatprep.subr.mxu0 0.0
    %1514 = vmatpush1.msra.mxu0 %v1462
    %1515 = vmatprep.subr.mxu0 0.0
    %1516 = vmatpush1.msra.mxu0 %v1463
    %1517 = vmatprep.subr.mxu0 0.0
    %1518 = vmatpush1.msra.mxu0 %v1464
    %1519 = vmatprep.subr.mxu0 0.0
    %1520 = vmatpush1.msra.mxu0 %v1465
    %1521 = vmatprep.subr.mxu0 0.0
    %1522 = vmatpush1.msra.mxu0 %v1466
    %1523 = vmatprep.subr.mxu0 0.0
    %1524 = vmatpush1.msra.mxu0 %v1467
    %1525 = vmatprep.subr.mxu0 0.0
    %1526 = vmatpush1.msra.mxu0 %v1468
    %1527 = vmatprep.subr.mxu0 0.0
    %1528 = vmatpush1.msra.mxu0 %v1469
    %1529 = vmatprep.subr.mxu0 0.0
    %1530 = vmatpush1.msra.mxu0 %v1470
    %1531 = vmatprep.subr.mxu0 0.0
    %1532 = vmatpush1.msra.mxu0 %v1471
    %1533 = vmatprep.subr.mxu0 0.0
    %1534 = vmatpush1.msra.mxu0 %v1472
    %1535 = vmatprep.subr.mxu0 0.0
    %1536 = vmatpush1.msra.mxu0 %v1473
    %1537 = vmatprep.subr.mxu0 0.0
    %1538 = vmatpush1.msra.mxu0 %v1474
    %1539 = vmatprep.subr.mxu0 0.0
    %1540 = vmatpush1.msra.mxu0 %v1475
    %1541 = vmatprep.mubr.f32.mxu0 %v1340
    %1542 = vmatmul.mubr.f32.gmra.mrb[0].mxu0 %v1223
    %v1543 = vpop.f32.mrb[0].mxu0
    %v1544 = vadd.f32 %v1476, %v1543
    %v1545 = vpop.f32.mrb[0].mxu0
    %1546 = vdwg.mxu0
    %v1547 = vtanh.pop %v1544
    %v1548 = vmul.f32 %v40, %v1547
    %v1549 = vadd.f32 %v1548, %v41
    %1550 = vrot.lane.b32.xlu0 %v1549, 96
    %v1551 = vpop.permute.xlu0 %1550
    %1552 = vrot.lane.b32.xlu0 %v1549, 64
    %v1553 = vpop.permute.xlu0 %1552
    %1554 = vrot.lane.b32.xlu0 %v1549, 32
    %v1555 = vpop.permute.xlu0 %1554
    %v1556 = vmul.f32 %v1551, %v1338
    %v1557 = vmul.f32 %v1549, %v1553
    %v1558 = vadd.f32 %v1556, %v1557
    %v1559 = vtanh.pop %v1558
    %v1560 = vmul.f32 %v1555, %v1559
    %1561 = vst [vmem:[#allocation2 + $0x5] sm:$0x1] %v1560
    %v1562 = vld [vmem:[#allocation3 + $0x7] sm:$0x1]
    %v1563 = vld [vmem:[#allocation4 + $0x80] sm:$0xff]
    %v1564 = vld [vmem:[#allocation4 + $0x88] sm:$0xff]
    %v1565 = vld [vmem:[#allocation4 + $0x90] sm:$0xff]
    %v1566 = vld [vmem:[#allocation4 + $0x98] sm:$0xff]
    %v1567 = vld [vmem:[#allocation4 + $0xa0] sm:$0xff]
    %v1568 = vld [vmem:[#allocation4 + $0xa8] sm:$0xff]
    %v1569 = vld [vmem:[#allocation4 + $0xb0] sm:$0xff]
    %v1570 = vld [vmem:[#allocation4 + $0xb8] sm:$0xff]
    %v1571 = vld [vmem:[#allocation4 + $0xc0] sm:$0xff]
    %v1572 = vld [vmem:[#allocation4 + $0xc8] sm:$0xff]
    %v1573 = vld [vmem:[#allocation4 + $0xd0] sm:$0xff]
    %v1574 = vld [vmem:[#allocation4 + $0xd8] sm:$0xff]
    %v1575 = vld [vmem:[#allocation4 + $0xe0] sm:$0xff]
    %v1576 = vld [vmem:[#allocation4 + $0xe8] sm:$0xff]
    %v1577 = vld [vmem:[#allocation4 + $0xf0] sm:$0xff]
    %v1578 = vld [vmem:[#allocation4 + $0xf8] sm:$0xff]
    %1579 = vmatprep.subr.mxu0 0.0
    %1580 = vmatpush1.msra.mxu0 %v1563
    %1581 = vmatprep.subr.mxu0 0.0
    %1582 = vmatpush1.msra.mxu0 %v1564
    %1583 = vmatprep.subr.mxu0 0.0
    %1584 = vmatpush1.msra.mxu0 %v1565
    %1585 = vmatprep.subr.mxu0 0.0
    %1586 = vmatpush1.msra.mxu0 %v1566
    %1587 = vmatprep.subr.mxu0 0.0
    %1588 = vmatpush1.msra.mxu0 %v1567
    %1589 = vmatprep.subr.mxu0 0.0
    %1590 = vmatpush1.msra.mxu0 %v1568
    %1591 = vmatprep.subr.mxu0 0.0
    %1592 = vmatpush1.msra.mxu0 %v1569
    %1593 = vmatprep.subr.mxu0 0.0
    %1594 = vmatpush1.msra.mxu0 %v1570
    %1595 = vmatprep.subr.mxu0 0.0
    %1596 = vmatpush1.msra.mxu0 %v1571
    %1597 = vmatprep.subr.mxu0 0.0
    %1598 = vmatpush1.msra.mxu0 %v1572
    %1599 = vmatprep.subr.mxu0 0.0
    %1600 = vmatpush1.msra.mxu0 %v1573
    %1601 = vmatprep.subr.mxu0 0.0
    %1602 = vmatpush1.msra.mxu0 %v1574
    %1603 = vmatprep.subr.mxu0 0.0
    %1604 = vmatpush1.msra.mxu0 %v1575
    %1605 = vmatprep.subr.mxu0 0.0
    %1606 = vmatpush1.msra.mxu0 %v1576
    %1607 = vmatprep.subr.mxu0 0.0
    %1608 = vmatpush1.msra.mxu0 %v1577
    %1609 = vmatprep.subr.mxu0 0.0
    %1610 = vmatpush1.msra.mxu0 %v1578
    %1611 = vmatprep.subr.mxu0 0.0
    %1612 = vmatpush1.msra.mxu0 0.0
    %1613 = vmatprep.subr.mxu0 0.0
    %1614 = vmatpush1.msra.mxu0 0.0
    %1615 = vmatprep.subr.mxu0 0.0
    %1616 = vmatpush1.msra.mxu0 0.0
    %1617 = vmatprep.subr.mxu0 0.0
    %1618 = vmatpush1.msra.mxu0 0.0
    %1619 = vmatprep.subr.mxu0 0.0
    %1620 = vmatpush1.msra.mxu0 0.0
    %1621 = vmatprep.subr.mxu0 0.0
    %1622 = vmatpush1.msra.mxu0 0.0
    %1623 = vmatprep.subr.mxu0 0.0
    %1624 = vmatpush1.msra.mxu0 0.0
    %1625 = vmatprep.subr.mxu0 0.0
    %1626 = vmatpush1.msra.mxu0 0.0
    %1627 = vmatprep.subr.mxu0 0.0
    %1628 = vmatpush1.msra.mxu0 0.0
    %1629 = vmatprep.subr.mxu0 0.0
    %1630 = vmatpush1.msra.mxu0 0.0
    %1631 = vmatprep.subr.mxu0 0.0
    %1632 = vmatpush1.msra.mxu0 0.0
    %1633 = vmatprep.subr.mxu0 0.0
    %1634 = vmatpush1.msra.mxu0 0.0
    %1635 = vmatprep.subr.mxu0 0.0
    %1636 = vmatpush1.msra.mxu0 0.0
    %1637 = vmatprep.subr.mxu0 0.0
    %1638 = vmatpush1.msra.mxu0 0.0
    %1639 = vmatprep.subr.mxu0 0.0
    %1640 = vmatpush1.msra.mxu0 0.0
    %1641 = vmatprep.subr.mxu0 0.0
    %1642 = vmatpush1.msra.mxu0 0.0
    %1643 = vmatprep.mubr.f32.mxu0 0.0
    %1644 = vmatmul.mubr.f32.gmra.mrb[0].mxu0 %v1443
    %v1645 = vpop.f32.mrb[0].mxu0
    %v1646 = vadd.f32 0.0, %v1645
    %v1647 = vpop.f32.mrb[0].mxu0
    %1648 = vdwg.mxu0
    %v1649 = vadd.f32 %v1562, %v1646
    %v1650 = vtanh.pop %v1649
    %v1651 = vmul.f32 %v40, %v1650
    %v1652 = vadd.f32 %v1651, %v41
    %1653 = vrot.lane.b32.xlu0 %v1652, 96
    %v1654 = vpop.permute.xlu0 %1653
    %1655 = vrot.lane.b32.xlu0 %v1652, 64
    %v1656 = vpop.permute.xlu0 %1655
    %1657 = vrot.lane.b32.xlu0 %v1652, 32
    %v1658 = vpop.permute.xlu0 %1657
    %v1659 = vmul.f32 %v1654, %v1441
    %v1660 = vmul.f32 %v1652, %v1656
    %v1661 = vadd.f32 %v1659, %v1660
    %v1662 = vtanh.pop %v1661
    %v1663 = vmul.f32 %v1658, %v1662
    %v1664 = vld [vmem:[%s342] sm:$0xff]
    %v1665 = vld [vmem:[%s342 + $0x8] sm:$0xff]
    %v1666 = vld [vmem:[%s342 + $0x10] sm:$0xff]
    %v1667 = vld [vmem:[%s342 + $0x18] sm:$0xff]
    %v1668 = vld [vmem:[%s342 + $0x20] sm:$0xff]
    %v1669 = vld [vmem:[%s342 + $0x28] sm:$0xff]
    %v1670 = vld [vmem:[%s342 + $0x30] sm:$0xff]
    %v1671 = vld [vmem:[%s342 + $0x38] sm:$0xff]
    %v1672 = vld [vmem:[%s342 + $0x40] sm:$0xff]
    %v1673 = vld [vmem:[%s342 + $0x48] sm:$0xff]
    %v1674 = vld [vmem:[%s342 + $0x50] sm:$0xff]
    %v1675 = vld [vmem:[%s342 + $0x58] sm:$0xff]
    %v1676 = vld [vmem:[%s342 + $0x60] sm:$0xff]
    %v1677 = vld [vmem:[%s342 + $0x68] sm:$0xff]
    %v1678 = vld [vmem:[%s342 + $0x70] sm:$0xff]
    %v1679 = vld [vmem:[%s342 + $0x78] sm:$0xff]
    %v1680 = vld [vmem:[%s342 + $0x80] sm:$0xff]
    %v1681 = vld [vmem:[%s342 + $0x88] sm:$0xff]
    %v1682 = vld [vmem:[%s342 + $0x90] sm:$0xff]
    %v1683 = vld [vmem:[%s342 + $0x98] sm:$0xff]
    %v1684 = vld [vmem:[%s342 + $0xa0] sm:$0xff]
    %v1685 = vld [vmem:[%s342 + $0xa8] sm:$0xff]
    %v1686 = vld [vmem:[%s342 + $0xb0] sm:$0xff]
    %v1687 = vld [vmem:[%s342 + $0xb8] sm:$0xff]
    %v1688 = vld [vmem:[%s342 + $0xc0] sm:$0xff]
    %v1689 = vld [vmem:[%s342 + $0xc8] sm:$0xff]
    %v1690 = vld [vmem:[%s342 + $0xd0] sm:$0xff]
    %v1691 = vld [vmem:[%s342 + $0xd8] sm:$0xff]
    %v1692 = vld [vmem:[%s342 + $0xe0] sm:$0xff]
    %v1693 = vld [vmem:[%s342 + $0xe8] sm:$0xff]
    %v1694 = vld [vmem:[%s342 + $0xf0] sm:$0xff]
    %v1695 = vld [vmem:[%s342 + $0xf8] sm:$0xff]
    %v1696 = vld [vmem:[%s375] sm:$0x1]
    %1697 = vmatprep.subr.mxu0 0.0
    %1698 = vmatpush1.msra.mxu0 %v1664
    %1699 = vmatprep.subr.mxu0 0.0
    %1700 = vmatpush1.msra.mxu0 %v1665
    %1701 = vmatprep.subr.mxu0 0.0
    %1702 = vmatpush1.msra.mxu0 %v1666
    %1703 = vmatprep.subr.mxu0 0.0
    %1704 = vmatpush1.msra.mxu0 %v1667
    %1705 = vmatprep.subr.mxu0 0.0
    %1706 = vmatpush1.msra.mxu0 %v1668
    %1707 = vmatprep.subr.mxu0 0.0
    %1708 = vmatpush1.msra.mxu0 %v1669
    %1709 = vmatprep.subr.mxu0 0.0
    %1710 = vmatpush1.msra.mxu0 %v1670
    %1711 = vmatprep.subr.mxu0 0.0
    %1712 = vmatpush1.msra.mxu0 %v1671
    %1713 = vmatprep.subr.mxu0 0.0
    %1714 = vmatpush1.msra.mxu0 %v1672
    %1715 = vmatprep.subr.mxu0 0.0
    %1716 = vmatpush1.msra.mxu0 %v1673
    %1717 = vmatprep.subr.mxu0 0.0
    %1718 = vmatpush1.msra.mxu0 %v1674
    %1719 = vmatprep.subr.mxu0 0.0
    %1720 = vmatpush1.msra.mxu0 %v1675
    %1721 = vmatprep.subr.mxu0 0.0
    %1722 = vmatpush1.msra.mxu0 %v1676
    %1723 = vmatprep.subr.mxu0 0.0
    %1724 = vmatpush1.msra.mxu0 %v1677
    %1725 = vmatprep.subr.mxu0 0.0
    %1726 = vmatpush1.msra.mxu0 %v1678
    %1727 = vmatprep.subr.mxu0 0.0
    %1728 = vmatpush1.msra.mxu0 %v1679
    %1729 = vmatprep.subr.mxu0 0.0
    %1730 = vmatpush1.msra.mxu0 %v1680
    %1731 = vmatprep.subr.mxu0 0.0
    %1732 = vmatpush1.msra.mxu0 %v1681
    %1733 = vmatprep.subr.mxu0 0.0
    %1734 = vmatpush1.msra.mxu0 %v1682
    %1735 = vmatprep.subr.mxu0 0.0
    %1736 = vmatpush1.msra.mxu0 %v1683
    %1737 = vmatprep.subr.mxu0 0.0
    %1738 = vmatpush1.msra.mxu0 %v1684
    %1739 = vmatprep.subr.mxu0 0.0
    %1740 = vmatpush1.msra.mxu0 %v1685
    %1741 = vmatprep.subr.mxu0 0.0
    %1742 = vmatpush1.msra.mxu0 %v1686
    %1743 = vmatprep.subr.mxu0 0.0
    %1744 = vmatpush1.msra.mxu0 %v1687
    %1745 = vmatprep.subr.mxu0 0.0
    %1746 = vmatpush1.msra.mxu0 %v1688
    %1747 = vmatprep.subr.mxu0 0.0
    %1748 = vmatpush1.msra.mxu0 %v1689
    %1749 = vmatprep.subr.mxu0 0.0
    %1750 = vmatpush1.msra.mxu0 %v1690
    %1751 = vmatprep.subr.mxu0 0.0
    %1752 = vmatpush1.msra.mxu0 %v1691
    %1753 = vmatprep.subr.mxu0 0.0
    %1754 = vmatpush1.msra.mxu0 %v1692
    %1755 = vmatprep.subr.mxu0 0.0
    %1756 = vmatpush1.msra.mxu0 %v1693
    %1757 = vmatprep.subr.mxu0 0.0
    %1758 = vmatpush1.msra.mxu0 %v1694
    %1759 = vmatprep.subr.mxu0 0.0
    %1760 = vmatpush1.msra.mxu0 %v1695
    %1761 = vmatprep.mubr.f32.mxu0 %v1560
    %1762 = vmatmul.mubr.f32.gmra.mrb[0].mxu0 %v1443
    %v1763 = vpop.f32.mrb[0].mxu0
    %v1764 = vadd.f32 %v1696, %v1763
    %v1765 = vpop.f32.mrb[0].mxu0
    %1766 = vdwg.mxu0
    %v1767 = vtanh.pop %v1764
    %v1768 = vmul.f32 %v40, %v1767
    %v1769 = vadd.f32 %v1768, %v41
    %1770 = vrot.lane.b32.xlu0 %v1769, 96
    %v1771 = vpop.permute.xlu0 %1770
    %1772 = vrot.lane.b32.xlu0 %v1769, 64
    %v1773 = vpop.permute.xlu0 %1772
    %1774 = vrot.lane.b32.xlu0 %v1769, 32
    %v1775 = vpop.permute.xlu0 %1774
    %v1776 = vmul.f32 %v1771, %v1558
    %v1777 = vmul.f32 %v1769, %v1773
    %v1778 = vadd.f32 %v1776, %v1777
    %v1779 = vtanh.pop %v1778
    %v1780 = vmul.f32 %v1775, %v1779
    %1781 = vst [vmem:[#allocation2 + $0x6] sm:$0x1] %v1780
    %v1782 = vld [vmem:[#allocation3 + $0x8] sm:$0x1]
    %v1783 = vld [vmem:[#allocation4 + $0x80] sm:$0xff]
    %v1784 = vld [vmem:[#allocation4 + $0x88] sm:$0xff]
    %v1785 = vld [vmem:[#allocation4 + $0x90] sm:$0xff]
    %v1786 = vld [vmem:[#allocation4 + $0x98] sm:$0xff]
    %v1787 = vld [vmem:[#allocation4 + $0xa0] sm:$0xff]
    %v1788 = vld [vmem:[#allocation4 + $0xa8] sm:$0xff]
    %v1789 = vld [vmem:[#allocation4 + $0xb0] sm:$0xff]
    %v1790 = vld [vmem:[#allocation4 + $0xb8] sm:$0xff]
    %v1791 = vld [vmem:[#allocation4 + $0xc0] sm:$0xff]
    %v1792 = vld [vmem:[#allocation4 + $0xc8] sm:$0xff]
    %v1793 = vld [vmem:[#allocation4 + $0xd0] sm:$0xff]
    %v1794 = vld [vmem:[#allocation4 + $0xd8] sm:$0xff]
    %v1795 = vld [vmem:[#allocation4 + $0xe0] sm:$0xff]
    %v1796 = vld [vmem:[#allocation4 + $0xe8] sm:$0xff]
    %v1797 = vld [vmem:[#allocation4 + $0xf0] sm:$0xff]
    %v1798 = vld [vmem:[#allocation4 + $0xf8] sm:$0xff]
    %1799 = vmatprep.subr.mxu0 0.0
    %1800 = vmatpush1.msra.mxu0 %v1783
    %1801 = vmatprep.subr.mxu0 0.0
    %1802 = vmatpush1.msra.mxu0 %v1784
    %1803 = vmatprep.subr.mxu0 0.0
    %1804 = vmatpush1.msra.mxu0 %v1785
    %1805 = vmatprep.subr.mxu0 0.0
    %1806 = vmatpush1.msra.mxu0 %v1786
    %1807 = vmatprep.subr.mxu0 0.0
    %1808 = vmatpush1.msra.mxu0 %v1787
    %1809 = vmatprep.subr.mxu0 0.0
    %1810 = vmatpush1.msra.mxu0 %v1788
    %1811 = vmatprep.subr.mxu0 0.0
    %1812 = vmatpush1.msra.mxu0 %v1789
    %1813 = vmatprep.subr.mxu0 0.0
    %1814 = vmatpush1.msra.mxu0 %v1790
    %1815 = vmatprep.subr.mxu0 0.0
    %1816 = vmatpush1.msra.mxu0 %v1791
    %1817 = vmatprep.subr.mxu0 0.0
    %1818 = vmatpush1.msra.mxu0 %v1792
    %1819 = vmatprep.subr.mxu0 0.0
    %1820 = vmatpush1.msra.mxu0 %v1793
    %1821 = vmatprep.subr.mxu0 0.0
    %1822 = vmatpush1.msra.mxu0 %v1794
    %1823 = vmatprep.subr.mxu0 0.0
    %1824 = vmatpush1.msra.mxu0 %v1795
    %1825 = vmatprep.subr.mxu0 0.0
    %1826 = vmatpush1.msra.mxu0 %v1796
    %1827 = vmatprep.subr.mxu0 0.0
    %1828 = vmatpush1.msra.mxu0 %v1797
    %1829 = vmatprep.subr.mxu0 0.0
    %1830 = vmatpush1.msra.mxu0 %v1798
    %1831 = vmatprep.subr.mxu0 0.0
    %1832 = vmatpush1.msra.mxu0 0.0
    %1833 = vmatprep.subr.mxu0 0.0
    %1834 = vmatpush1.msra.mxu0 0.0
    %1835 = vmatprep.subr.mxu0 0.0
    %1836 = vmatpush1.msra.mxu0 0.0
    %1837 = vmatprep.subr.mxu0 0.0
    %1838 = vmatpush1.msra.mxu0 0.0
    %1839 = vmatprep.subr.mxu0 0.0
    %1840 = vmatpush1.msra.mxu0 0.0
    %1841 = vmatprep.subr.mxu0 0.0
    %1842 = vmatpush1.msra.mxu0 0.0
    %1843 = vmatprep.subr.mxu0 0.0
    %1844 = vmatpush1.msra.mxu0 0.0
    %1845 = vmatprep.subr.mxu0 0.0
    %1846 = vmatpush1.msra.mxu0 0.0
    %1847 = vmatprep.subr.mxu0 0.0
    %1848 = vmatpush1.msra.mxu0 0.0
    %1849 = vmatprep.subr.mxu0 0.0
    %1850 = vmatpush1.msra.mxu0 0.0
    %1851 = vmatprep.subr.mxu0 0.0
    %1852 = vmatpush1.msra.mxu0 0.0
    %1853 = vmatprep.subr.mxu0 0.0
    %1854 = vmatpush1.msra.mxu0 0.0
    %1855 = vmatprep.subr.mxu0 0.0
    %1856 = vmatpush1.msra.mxu0 0.0
    %1857 = vmatprep.subr.mxu0 0.0
    %1858 = vmatpush1.msra.mxu0 0.0
    %1859 = vmatprep.subr.mxu0 0.0
    %1860 = vmatpush1.msra.mxu0 0.0
    %1861 = vmatprep.subr.mxu0 0.0
    %1862 = vmatpush1.msra.mxu0 0.0
    %1863 = vmatprep.mubr.f32.mxu0 0.0
    %1864 = vmatmul.mubr.f32.gmra.mrb[0].mxu0 %v1663
    %v1865 = vpop.f32.mrb[0].mxu0
    %v1866 = vadd.f32 0.0, %v1865
    %v1867 = vpop.f32.mrb[0].mxu0
    %1868 = vdwg.mxu0
    %v1869 = vadd.f32 %v1782, %v1866
    %v1870 = vtanh.pop %v1869
    %v1871 = vmul.f32 %v40, %v1870
    %v1872 = vadd.f32 %v1871, %v41
    %1873 = vrot.lane.b32.xlu0 %v1872, 96
    %v1874 = vpop.permute.xlu0 %1873
    %1875 = vrot.lane.b32.xlu0 %v1872, 64
    %v1876 = vpop.permute.xlu0 %1875
    %1877 = vrot.lane.b32.xlu0 %v1872, 32
    %v1878 = vpop.permute.xlu0 %1877
    %v1879 = vmul.f32 %v1874, %v1661
    %v1880 = vmul.f32 %v1872, %v1876
    %v1881 = vadd.f32 %v1879, %v1880
    %v1882 = vtanh.pop %v1881
    %v1883 = vmul.f32 %v1878, %v1882
    %v1884 = vld [vmem:[%s342] sm:$0xff]
    %v1885 = vld [vmem:[%s342 + $0x8] sm:$0xff]
    %v1886 = vld [vmem:[%s342 + $0x10] sm:$0xff]
    %v1887 = vld [vmem:[%s342 + $0x18] sm:$0xff]
    %v1888 = vld [vmem:[%s342 + $0x20] sm:$0xff]
    %v1889 = vld [vmem:[%s342 + $0x28] sm:$0xff]
    %v1890 = vld [vmem:[%s342 + $0x30] sm:$0xff]
    %v1891 = vld [vmem:[%s342 + $0x38] sm:$0xff]
    %v1892 = vld [vmem:[%s342 + $0x40] sm:$0xff]
    %v1893 = vld [vmem:[%s342 + $0x48] sm:$0xff]
    %v1894 = vld [vmem:[%s342 + $0x50] sm:$0xff]
    %v1895 = vld [vmem:[%s342 + $0x58] sm:$0xff]
    %v1896 = vld [vmem:[%s342 + $0x60] sm:$0xff]
    %v1897 = vld [vmem:[%s342 + $0x68] sm:$0xff]
    %v1898 = vld [vmem:[%s342 + $0x70] sm:$0xff]
    %v1899 = vld [vmem:[%s342 + $0x78] sm:$0xff]
    %v1900 = vld [vmem:[%s342 + $0x80] sm:$0xff]
    %v1901 = vld [vmem:[%s342 + $0x88] sm:$0xff]
    %v1902 = vld [vmem:[%s342 + $0x90] sm:$0xff]
    %v1903 = vld [vmem:[%s342 + $0x98] sm:$0xff]
    %v1904 = vld [vmem:[%s342 + $0xa0] sm:$0xff]
    %v1905 = vld [vmem:[%s342 + $0xa8] sm:$0xff]
    %v1906 = vld [vmem:[%s342 + $0xb0] sm:$0xff]
    %v1907 = vld [vmem:[%s342 + $0xb8] sm:$0xff]
    %v1908 = vld [vmem:[%s342 + $0xc0] sm:$0xff]
    %v1909 = vld [vmem:[%s342 + $0xc8] sm:$0xff]
    %v1910 = vld [vmem:[%s342 + $0xd0] sm:$0xff]
    %v1911 = vld [vmem:[%s342 + $0xd8] sm:$0xff]
    %v1912 = vld [vmem:[%s342 + $0xe0] sm:$0xff]
    %v1913 = vld [vmem:[%s342 + $0xe8] sm:$0xff]
    %v1914 = vld [vmem:[%s342 + $0xf0] sm:$0xff]
    %v1915 = vld [vmem:[%s342 + $0xf8] sm:$0xff]
    %v1916 = vld [vmem:[%s375] sm:$0x1]
    %1917 = vmatprep.subr.mxu0 0.0
    %1918 = vmatpush1.msra.mxu0 %v1884
    %1919 = vmatprep.subr.mxu0 0.0
    %1920 = vmatpush1.msra.mxu0 %v1885
    %1921 = vmatprep.subr.mxu0 0.0
    %1922 = vmatpush1.msra.mxu0 %v1886
    %1923 = vmatprep.subr.mxu0 0.0
    %1924 = vmatpush1.msra.mxu0 %v1887
    %1925 = vmatprep.subr.mxu0 0.0
    %1926 = vmatpush1.msra.mxu0 %v1888
    %1927 = vmatprep.subr.mxu0 0.0
    %1928 = vmatpush1.msra.mxu0 %v1889
    %1929 = vmatprep.subr.mxu0 0.0
    %1930 = vmatpush1.msra.mxu0 %v1890
    %1931 = vmatprep.subr.mxu0 0.0
    %1932 = vmatpush1.msra.mxu0 %v1891
    %1933 = vmatprep.subr.mxu0 0.0
    %1934 = vmatpush1.msra.mxu0 %v1892
    %1935 = vmatprep.subr.mxu0 0.0
    %1936 = vmatpush1.msra.mxu0 %v1893
    %1937 = vmatprep.subr.mxu0 0.0
    %1938 = vmatpush1.msra.mxu0 %v1894
    %1939 = vmatprep.subr.mxu0 0.0
    %1940 = vmatpush1.msra.mxu0 %v1895
    %1941 = vmatprep.subr.mxu0 0.0
    %1942 = vmatpush1.msra.mxu0 %v1896
    %1943 = vmatprep.subr.mxu0 0.0
    %1944 = vmatpush1.msra.mxu0 %v1897
    %1945 = vmatprep.subr.mxu0 0.0
    %1946 = vmatpush1.msra.mxu0 %v1898
    %1947 = vmatprep.subr.mxu0 0.0
    %1948 = vmatpush1.msra.mxu0 %v1899
    %1949 = vmatprep.subr.mxu0 0.0
    %1950 = vmatpush1.msra.mxu0 %v1900
    %1951 = vmatprep.subr.mxu0 0.0
    %1952 = vmatpush1.msra.mxu0 %v1901
    %1953 = vmatprep.subr.mxu0 0.0
    %1954 = vmatpush1.msra.mxu0 %v1902
    %1955 = vmatprep.subr.mxu0 0.0
    %1956 = vmatpush1.msra.mxu0 %v1903
    %1957 = vmatprep.subr.mxu0 0.0
    %1958 = vmatpush1.msra.mxu0 %v1904
    %1959 = vmatprep.subr.mxu0 0.0
    %1960 = vmatpush1.msra.mxu0 %v1905
    %1961 = vmatprep.subr.mxu0 0.0
    %1962 = vmatpush1.msra.mxu0 %v1906
    %1963 = vmatprep.subr.mxu0 0.0
    %1964 = vmatpush1.msra.mxu0 %v1907
    %1965 = vmatprep.subr.mxu0 0.0
    %1966 = vmatpush1.msra.mxu0 %v1908
    %1967 = vmatprep.subr.mxu0 0.0
    %1968 = vmatpush1.msra.mxu0 %v1909
    %1969 = vmatprep.subr.mxu0 0.0
    %1970 = vmatpush1.msra.mxu0 %v1910
    %1971 = vmatprep.subr.mxu0 0.0
    %1972 = vmatpush1.msra.mxu0 %v1911
    %1973 = vmatprep.subr.mxu0 0.0
    %1974 = vmatpush1.msra.mxu0 %v1912
    %1975 = vmatprep.subr.mxu0 0.0
    %1976 = vmatpush1.msra.mxu0 %v1913
    %1977 = vmatprep.subr.mxu0 0.0
    %1978 = vmatpush1.msra.mxu0 %v1914
    %1979 = vmatprep.subr.mxu0 0.0
    %1980 = vmatpush1.msra.mxu0 %v1915
    %1981 = vmatprep.mubr.f32.mxu0 %v1780
    %1982 = vmatmul.mubr.f32.gmra.mrb[0].mxu0 %v1663
    %v1983 = vpop.f32.mrb[0].mxu0
    %v1984 = vadd.f32 %v1916, %v1983
    %v1985 = vpop.f32.mrb[0].mxu0
    %1986 = vdwg.mxu0
    %v1987 = vtanh.pop %v1984
    %v1988 = vmul.f32 %v40, %v1987
    %v1989 = vadd.f32 %v1988, %v41
    %1990 = vrot.lane.b32.xlu0 %v1989, 96
    %v1991 = vpop.permute.xlu0 %1990
    %1992 = vrot.lane.b32.xlu0 %v1989, 64
    %v1993 = vpop.permute.xlu0 %1992
    %1994 = vrot.lane.b32.xlu0 %v1989, 32
    %v1995 = vpop.permute.xlu0 %1994
    %v1996 = vmul.f32 %v1991, %v1778
    %v1997 = vmul.f32 %v1989, %v1993
    %v1998 = vadd.f32 %v1996, %v1997
    %v1999 = vtanh.pop %v1998
    %v2000 = vmul.f32 %v1995, %v1999
    %2001 = vst [vmem:[#allocation2 + $0x7] sm:$0x1] %v2000
    %v2002 = vld [vmem:[#allocation3 + $0x9] sm:$0x1]
    %v2003 = vld [vmem:[#allocation4 + $0x80] sm:$0xff]
    %v2004 = vld [vmem:[#allocation4 + $0x88] sm:$0xff]
    %v2005 = vld [vmem:[#allocation4 + $0x90] sm:$0xff]
    %v2006 = vld [vmem:[#allocation4 + $0x98] sm:$0xff]
    %v2007 = vld [vmem:[#allocation4 + $0xa0] sm:$0xff]
    %v2008 = vld [vmem:[#allocation4 + $0xa8] sm:$0xff]
    %v2009 = vld [vmem:[#allocation4 + $0xb0] sm:$0xff]
    %v2010 = vld [vmem:[#allocation4 + $0xb8] sm:$0xff]
    %v2011 = vld [vmem:[#allocation4 + $0xc0] sm:$0xff]
    %v2012 = vld [vmem:[#allocation4 + $0xc8] sm:$0xff]
    %v2013 = vld [vmem:[#allocation4 + $0xd0] sm:$0xff]
    %v2014 = vld [vmem:[#allocation4 + $0xd8] sm:$0xff]
    %v2015 = vld [vmem:[#allocation4 + $0xe0] sm:$0xff]
    %v2016 = vld [vmem:[#allocation4 + $0xe8] sm:$0xff]
    %v2017 = vld [vmem:[#allocation4 + $0xf0] sm:$0xff]
    %v2018 = vld [vmem:[#allocation4 + $0xf8] sm:$0xff]
    %2019 = vmatprep.subr.mxu0 0.0
    %2020 = vmatpush1.msra.mxu0 %v2003
    %2021 = vmatprep.subr.mxu0 0.0
    %2022 = vmatpush1.msra.mxu0 %v2004
    %2023 = vmatprep.subr.mxu0 0.0
    %2024 = vmatpush1.msra.mxu0 %v2005
    %2025 = vmatprep.subr.mxu0 0.0
    %2026 = vmatpush1.msra.mxu0 %v2006
    %2027 = vmatprep.subr.mxu0 0.0
    %2028 = vmatpush1.msra.mxu0 %v2007
    %2029 = vmatprep.subr.mxu0 0.0
    %2030 = vmatpush1.msra.mxu0 %v2008
    %2031 = vmatprep.subr.mxu0 0.0
    %2032 = vmatpush1.msra.mxu0 %v2009
    %2033 = vmatprep.subr.mxu0 0.0
    %2034 = vmatpush1.msra.mxu0 %v2010
    %2035 = vmatprep.subr.mxu0 0.0
    %2036 = vmatpush1.msra.mxu0 %v2011
    %2037 = vmatprep.subr.mxu0 0.0
    %2038 = vmatpush1.msra.mxu0 %v2012
    %2039 = vmatprep.subr.mxu0 0.0
    %2040 = vmatpush1.msra.mxu0 %v2013
    %2041 = vmatprep.subr.mxu0 0.0
    %2042 = vmatpush1.msra.mxu0 %v2014
    %2043 = vmatprep.subr.mxu0 0.0
    %2044 = vmatpush1.msra.mxu0 %v2015
    %2045 = vmatprep.subr.mxu0 0.0
    %2046 = vmatpush1.msra.mxu0 %v2016
    %2047 = vmatprep.subr.mxu0 0.0
    %2048 = vmatpush1.msra.mxu0 %v2017
    %2049 = vmatprep.subr.mxu0 0.0
    %2050 = vmatpush1.msra.mxu0 %v2018
    %2051 = vmatprep.subr.mxu0 0.0
    %2052 = vmatpush1.msra.mxu0 0.0
    %2053 = vmatprep.subr.mxu0 0.0
    %2054 = vmatpush1.msra.mxu0 0.0
    %2055 = vmatprep.subr.mxu0 0.0
    %2056 = vmatpush1.msra.mxu0 0.0
    %2057 = vmatprep.subr.mxu0 0.0
    %2058 = vmatpush1.msra.mxu0 0.0
    %2059 = vmatprep.subr.mxu0 0.0
    %2060 = vmatpush1.msra.mxu0 0.0
    %2061 = vmatprep.subr.mxu0 0.0
    %2062 = vmatpush1.msra.mxu0 0.0
    %2063 = vmatprep.subr.mxu0 0.0
    %2064 = vmatpush1.msra.mxu0 0.0
    %2065 = vmatprep.subr.mxu0 0.0
    %2066 = vmatpush1.msra.mxu0 0.0
    %2067 = vmatprep.subr.mxu0 0.0
    %2068 = vmatpush1.msra.mxu0 0.0
    %2069 = vmatprep.subr.mxu0 0.0
    %2070 = vmatpush1.msra.mxu0 0.0
    %2071 = vmatprep.subr.mxu0 0.0
    %2072 = vmatpush1.msra.mxu0 0.0
    %2073 = vmatprep.subr.mxu0 0.0
    %2074 = vmatpush1.msra.mxu0 0.0
    %2075 = vmatprep.subr.mxu0 0.0
    %2076 = vmatpush1.msra.mxu0 0.0
    %2077 = vmatprep.subr.mxu0 0.0
    %2078 = vmatpush1.msra.mxu0 0.0
    %2079 = vmatprep.subr.mxu0 0.0
    %2080 = vmatpush1.msra.mxu0 0.0
    %2081 = vmatprep.subr.mxu0 0.0
    %2082 = vmatpush1.msra.mxu0 0.0
    %2083 = vmatprep.mubr.f32.mxu0 0.0
    %2084 = vmatmul.mubr.f32.gmra.mrb[0].mxu0 %v1883
    %v2085 = vpop.f32.mrb[0].mxu0
    %v2086 = vadd.f32 0.0, %v2085
    %v2087 = vpop.f32.mrb[0].mxu0
    %2088 = vdwg.mxu0
    %v2089 = vadd.f32 %v2002, %v2086
    %v2090 = vtanh.pop %v2089
    %v2091 = vmul.f32 %v40, %v2090
    %v2092 = vadd.f32 %v2091, %v41
    %2093 = vrot.lane.b32.xlu0 %v2092, 96
    %v2094 = vpop.permute.xlu0 %2093
    %2095 = vrot.lane.b32.xlu0 %v2092, 64
    %v2096 = vpop.permute.xlu0 %2095
    %2097 = vrot.lane.b32.xlu0 %v2092, 32
    %v2098 = vpop.permute.xlu0 %2097
    %v2099 = vmul.f32 %v2094, %v1881
    %v2100 = vmul.f32 %v2092, %v2096
    %v2101 = vadd.f32 %v2099, %v2100
    %v2102 = vtanh.pop %v2101
    %v2103 = vmul.f32 %v2098, %v2102
    %v2104 = vld [vmem:[%s342] sm:$0xff]
    %v2105 = vld [vmem:[%s342 + $0x8] sm:$0xff]
    %v2106 = vld [vmem:[%s342 + $0x10] sm:$0xff]
    %v2107 = vld [vmem:[%s342 + $0x18] sm:$0xff]
    %v2108 = vld [vmem:[%s342 + $0x20] sm:$0xff]
    %v2109 = vld [vmem:[%s342 + $0x28] sm:$0xff]
    %v2110 = vld [vmem:[%s342 + $0x30] sm:$0xff]
    %v2111 = vld [vmem:[%s342 + $0x38] sm:$0xff]
    %v2112 = vld [vmem:[%s342 + $0x40] sm:$0xff]
    %v2113 = vld [vmem:[%s342 + $0x48] sm:$0xff]
    %v2114 = vld [vmem:[%s342 + $0x50] sm:$0xff]
    %v2115 = vld [vmem:[%s342 + $0x58] sm:$0xff]
    %v2116 = vld [vmem:[%s342 + $0x60] sm:$0xff]
    %v2117 = vld [vmem:[%s342 + $0x68] sm:$0xff]
    %v2118 = vld [vmem:[%s342 + $0x70] sm:$0xff]
    %v2119 = vld [vmem:[%s342 + $0x78] sm:$0xff]
    %v2120 = vld [vmem:[%s342 + $0x80] sm:$0xff]
    %v2121 = vld [vmem:[%s342 + $0x88] sm:$0xff]
    %v2122 = vld [vmem:[%s342 + $0x90] sm:$0xff]
    %v2123 = vld [vmem:[%s342 + $0x98] sm:$0xff]
    %v2124 = vld [vmem:[%s342 + $0xa0] sm:$0xff]
    %v2125 = vld [vmem:[%s342 + $0xa8] sm:$0xff]
    %v2126 = vld [vmem:[%s342 + $0xb0] sm:$0xff]
    %v2127 = vld [vmem:[%s342 + $0xb8] sm:$0xff]
    %v2128 = vld [vmem:[%s342 + $0xc0] sm:$0xff]
    %v2129 = vld [vmem:[%s342 + $0xc8] sm:$0xff]
    %v2130 = vld [vmem:[%s342 + $0xd0] sm:$0xff]
    %v2131 = vld [vmem:[%s342 + $0xd8] sm:$0xff]
    %v2132 = vld [vmem:[%s342 + $0xe0] sm:$0xff]
    %v2133 = vld [vmem:[%s342 + $0xe8] sm:$0xff]
    %v2134 = vld [vmem:[%s342 + $0xf0] sm:$0xff]
    %v2135 = vld [vmem:[%s342 + $0xf8] sm:$0xff]
    %v2136 = vld [vmem:[%s375] sm:$0x1]
    %2137 = vmatprep.subr.mxu0 0.0
    %2138 = vmatpush1.msra.mxu0 %v2104
    %2139 = vmatprep.subr.mxu0 0.0
    %2140 = vmatpush1.msra.mxu0 %v2105
    %2141 = vmatprep.subr.mxu0 0.0
    %2142 = vmatpush1.msra.mxu0 %v2106
    %2143 = vmatprep.subr.mxu0 0.0
    %2144 = vmatpush1.msra.mxu0 %v2107
    %2145 = vmatprep.subr.mxu0 0.0
    %2146 = vmatpush1.msra.mxu0 %v2108
    %2147 = vmatprep.subr.mxu0 0.0
    %2148 = vmatpush1.msra.mxu0 %v2109
    %2149 = vmatprep.subr.mxu0 0.0
    %2150 = vmatpush1.msra.mxu0 %v2110
    %2151 = vmatprep.subr.mxu0 0.0
    %2152 = vmatpush1.msra.mxu0 %v2111
    %2153 = vmatprep.subr.mxu0 0.0
    %2154 = vmatpush1.msra.mxu0 %v2112
    %2155 = vmatprep.subr.mxu0 0.0
    %2156 = vmatpush1.msra.mxu0 %v2113
    %2157 = vmatprep.subr.mxu0 0.0
    %2158 = vmatpush1.msra.mxu0 %v2114
    %2159 = vmatprep.subr.mxu0 0.0
    %2160 = vmatpush1.msra.mxu0 %v2115
    %2161 = vmatprep.subr.mxu0 0.0
    %2162 = vmatpush1.msra.mxu0 %v2116
    %2163 = vmatprep.subr.mxu0 0.0
    %2164 = vmatpush1.msra.mxu0 %v2117
    %2165 = vmatprep.subr.mxu0 0.0
    %2166 = vmatpush1.msra.mxu0 %v2118
    %2167 = vmatprep.subr.mxu0 0.0
    %2168 = vmatpush1.msra.mxu0 %v2119
    %2169 = vmatprep.subr.mxu0 0.0
    %2170 = vmatpush1.msra.mxu0 %v2120
    %2171 = vmatprep.subr.mxu0 0.0
    %2172 = vmatpush1.msra.mxu0 %v2121
    %2173 = vmatprep.subr.mxu0 0.0
    %2174 = vmatpush1.msra.mxu0 %v2122
    %2175 = vmatprep.subr.mxu0 0.0
    %2176 = vmatpush1.msra.mxu0 %v2123
    %2177 = vmatprep.subr.mxu0 0.0
    %2178 = vmatpush1.msra.mxu0 %v2124
    %2179 = vmatprep.subr.mxu0 0.0
    %2180 = vmatpush1.msra.mxu0 %v2125
    %2181 = vmatprep.subr.mxu0 0.0
    %2182 = vmatpush1.msra.mxu0 %v2126
    %2183 = vmatprep.subr.mxu0 0.0
    %2184 = vmatpush1.msra.mxu0 %v2127
    %2185 = vmatprep.subr.mxu0 0.0
    %2186 = vmatpush1.msra.mxu0 %v2128
    %2187 = vmatprep.subr.mxu0 0.0
    %2188 = vmatpush1.msra.mxu0 %v2129
    %2189 = vmatprep.subr.mxu0 0.0
    %2190 = vmatpush1.msra.mxu0 %v2130
    %2191 = vmatprep.subr.mxu0 0.0
    %2192 = vmatpush1.msra.mxu0 %v2131
    %2193 = vmatprep.subr.mxu0 0.0
    %2194 = vmatpush1.msra.mxu0 %v2132
    %2195 = vmatprep.subr.mxu0 0.0
    %2196 = vmatpush1.msra.mxu0 %v2133
    %2197 = vmatprep.subr.mxu0 0.0
    %2198 = vmatpush1.msra.mxu0 %v2134
    %2199 = vmatprep.subr.mxu0 0.0
    %2200 = vmatpush1.msra.mxu0 %v2135
    %2201 = vmatprep.mubr.f32.mxu0 %v2000
    %2202 = vmatmul.mubr.f32.gmra.mrb[0].mxu0 %v1883
    %v2203 = vpop.f32.mrb[0].mxu0
    %v2204 = vadd.f32 %v2136, %v2203
    %v2205 = vpop.f32.mrb[0].mxu0
    %2206 = vdwg.mxu0
    %v2207 = vtanh.pop %v2204
    %v2208 = vmul.f32 %v40, %v2207
    %v2209 = vadd.f32 %v2208, %v41
    %2210 = vrot.lane.b32.xlu0 %v2209, 96
    %v2211 = vpop.permute.xlu0 %2210
    %2212 = vrot.lane.b32.xlu0 %v2209, 64
    %v2213 = vpop.permute.xlu0 %2212
    %2214 = vrot.lane.b32.xlu0 %v2209, 32
    %v2215 = vpop.permute.xlu0 %2214
    %v2216 = vmul.f32 %v2211, %v1998
    %v2217 = vmul.f32 %v2209, %v2213
    %v2218 = vadd.f32 %v2216, %v2217
    %v2219 = vtanh.pop %v2218
    %v2220 = vmul.f32 %v2215, %v2219
    %2221 = vst [vmem:[#allocation2 + $0x8] sm:$0x1] %v2220
    %v2222 = vld [vmem:[#allocation3 + $0xa] sm:$0x1]
    %v2223 = vld [vmem:[#allocation4 + $0x80] sm:$0xff]
    %v2224 = vld [vmem:[#allocation4 + $0x88] sm:$0xff]
    %v2225 = vld [vmem:[#allocation4 + $0x90] sm:$0xff]
    %v2226 = vld [vmem:[#allocation4 + $0x98] sm:$0xff]
    %v2227 = vld [vmem:[#allocation4 + $0xa0] sm:$0xff]
    %v2228 = vld [vmem:[#allocation4 + $0xa8] sm:$0xff]
    %v2229 = vld [vmem:[#allocation4 + $0xb0] sm:$0xff]
    %v2230 = vld [vmem:[#allocation4 + $0xb8] sm:$0xff]
    %v2231 = vld [vmem:[#allocation4 + $0xc0] sm:$0xff]
    %v2232 = vld [vmem:[#allocation4 + $0xc8] sm:$0xff]
    %v2233 = vld [vmem:[#allocation4 + $0xd0] sm:$0xff]
    %v2234 = vld [vmem:[#allocation4 + $0xd8] sm:$0xff]
    %v2235 = vld [vmem:[#allocation4 + $0xe0] sm:$0xff]
    %v2236 = vld [vmem:[#allocation4 + $0xe8] sm:$0xff]
    %v2237 = vld [vmem:[#allocation4 + $0xf0] sm:$0xff]
    %v2238 = vld [vmem:[#allocation4 + $0xf8] sm:$0xff]
    %2239 = vmatprep.subr.mxu0 0.0
    %2240 = vmatpush1.msra.mxu0 %v2223
    %2241 = vmatprep.subr.mxu0 0.0
    %2242 = vmatpush1.msra.mxu0 %v2224
    %2243 = vmatprep.subr.mxu0 0.0
    %2244 = vmatpush1.msra.mxu0 %v2225
    %2245 = vmatprep.subr.mxu0 0.0
    %2246 = vmatpush1.msra.mxu0 %v2226
    %2247 = vmatprep.subr.mxu0 0.0
    %2248 = vmatpush1.msra.mxu0 %v2227
    %2249 = vmatprep.subr.mxu0 0.0
    %2250 = vmatpush1.msra.mxu0 %v2228
    %2251 = vmatprep.subr.mxu0 0.0
    %2252 = vmatpush1.msra.mxu0 %v2229
    %2253 = vmatprep.subr.mxu0 0.0
    %2254 = vmatpush1.msra.mxu0 %v2230
    %2255 = vmatprep.subr.mxu0 0.0
    %2256 = vmatpush1.msra.mxu0 %v2231
    %2257 = vmatprep.subr.mxu0 0.0
    %2258 = vmatpush1.msra.mxu0 %v2232
    %2259 = vmatprep.subr.mxu0 0.0
    %2260 = vmatpush1.msra.mxu0 %v2233
    %2261 = vmatprep.subr.mxu0 0.0
    %2262 = vmatpush1.msra.mxu0 %v2234
    %2263 = vmatprep.subr.mxu0 0.0
    %2264 = vmatpush1.msra.mxu0 %v2235
    %2265 = vmatprep.subr.mxu0 0.0
    %2266 = vmatpush1.msra.mxu0 %v2236
    %2267 = vmatprep.subr.mxu0 0.0
    %2268 = vmatpush1.msra.mxu0 %v2237
    %2269 = vmatprep.subr.mxu0 0.0
    %2270 = vmatpush1.msra.mxu0 %v2238
    %2271 = vmatprep.subr.mxu0 0.0
    %2272 = vmatpush1.msra.mxu0 0.0
    %2273 = vmatprep.subr.mxu0 0.0
    %2274 = vmatpush1.msra.mxu0 0.0
    %2275 = vmatprep.subr.mxu0 0.0
    %2276 = vmatpush1.msra.mxu0 0.0
    %2277 = vmatprep.subr.mxu0 0.0
    %2278 = vmatpush1.msra.mxu0 0.0
    %2279 = vmatprep.subr.mxu0 0.0
    %2280 = vmatpush1.msra.mxu0 0.0
    %2281 = vmatprep.subr.mxu0 0.0
    %2282 = vmatpush1.msra.mxu0 0.0
    %2283 = vmatprep.subr.mxu0 0.0
    %2284 = vmatpush1.msra.mxu0 0.0
    %2285 = vmatprep.subr.mxu0 0.0
    %2286 = vmatpush1.msra.mxu0 0.0
    %2287 = vmatprep.subr.mxu0 0.0
    %2288 = vmatpush1.msra.mxu0 0.0
    %2289 = vmatprep.subr.mxu0 0.0
    %2290 = vmatpush1.msra.mxu0 0.0
    %2291 = vmatprep.subr.mxu0 0.0
    %2292 = vmatpush1.msra.mxu0 0.0
    %2293 = vmatprep.subr.mxu0 0.0
    %2294 = vmatpush1.msra.mxu0 0.0
    %2295 = vmatprep.subr.mxu0 0.0
    %2296 = vmatpush1.msra.mxu0 0.0
    %2297 = vmatprep.subr.mxu0 0.0
    %2298 = vmatpush1.msra.mxu0 0.0
    %2299 = vmatprep.subr.mxu0 0.0
    %2300 = vmatpush1.msra.mxu0 0.0
    %2301 = vmatprep.subr.mxu0 0.0
    %2302 = vmatpush1.msra.mxu0 0.0
    %2303 = vmatprep.mubr.f32.mxu0 0.0
    %2304 = vmatmul.mubr.f32.gmra.mrb[0].mxu0 %v2103
    %v2305 = vpop.f32.mrb[0].mxu0
    %v2306 = vadd.f32 0.0, %v2305
    %v2307 = vpop.f32.mrb[0].mxu0
    %2308 = vdwg.mxu0
    %v2309 = vadd.f32 %v2222, %v2306
    %v2310 = vtanh.pop %v2309
    %v2311 = vmul.f32 %v40, %v2310
    %v2312 = vadd.f32 %v2311, %v41
    %2313 = vrot.lane.b32.xlu0 %v2312, 96
    %v2314 = vpop.permute.xlu0 %2313
    %2315 = vrot.lane.b32.xlu0 %v2312, 64
    %v2316 = vpop.permute.xlu0 %2315
    %2317 = vrot.lane.b32.xlu0 %v2312, 32
    %v2318 = vpop.permute.xlu0 %2317
    %v2319 = vmul.f32 %v2314, %v2101
    %v2320 = vmul.f32 %v2312, %v2316
    %v2321 = vadd.f32 %v2319, %v2320
    %v2322 = vtanh.pop %v2321
    %v2323 = vmul.f32 %v2318, %v2322
    %v2324 = vld [vmem:[%s342] sm:$0xff]
    %v2325 = vld [vmem:[%s342 + $0x8] sm:$0xff]
    %v2326 = vld [vmem:[%s342 + $0x10] sm:$0xff]
    %v2327 = vld [vmem:[%s342 + $0x18] sm:$0xff]
    %v2328 = vld [vmem:[%s342 + $0x20] sm:$0xff]
    %v2329 = vld [vmem:[%s342 + $0x28] sm:$0xff]
    %v2330 = vld [vmem:[%s342 + $0x30] sm:$0xff]
    %v2331 = vld [vmem:[%s342 + $0x38] sm:$0xff]
    %v2332 = vld [vmem:[%s342 + $0x40] sm:$0xff]
    %v2333 = vld [vmem:[%s342 + $0x48] sm:$0xff]
    %v2334 = vld [vmem:[%s342 + $0x50] sm:$0xff]
    %v2335 = vld [vmem:[%s342 + $0x58] sm:$0xff]
    %v2336 = vld [vmem:[%s342 + $0x60] sm:$0xff]
    %v2337 = vld [vmem:[%s342 + $0x68] sm:$0xff]
    %v2338 = vld [vmem:[%s342 + $0x70] sm:$0xff]
    %v2339 = vld [vmem:[%s342 + $0x78] sm:$0xff]
    %v2340 = vld [vmem:[%s342 + $0x80] sm:$0xff]
    %v2341 = vld [vmem:[%s342 + $0x88] sm:$0xff]
    %v2342 = vld [vmem:[%s342 + $0x90] sm:$0xff]
    %v2343 = vld [vmem:[%s342 + $0x98] sm:$0xff]
    %v2344 = vld [vmem:[%s342 + $0xa0] sm:$0xff]
    %v2345 = vld [vmem:[%s342 + $0xa8] sm:$0xff]
    %v2346 = vld [vmem:[%s342 + $0xb0] sm:$0xff]
    %v2347 = vld [vmem:[%s342 + $0xb8] sm:$0xff]
    %v2348 = vld [vmem:[%s342 + $0xc0] sm:$0xff]
    %v2349 = vld [vmem:[%s342 + $0xc8] sm:$0xff]
    %v2350 = vld [vmem:[%s342 + $0xd0] sm:$0xff]
    %v2351 = vld [vmem:[%s342 + $0xd8] sm:$0xff]
    %v2352 = vld [vmem:[%s342 + $0xe0] sm:$0xff]
    %v2353 = vld [vmem:[%s342 + $0xe8] sm:$0xff]
    %v2354 = vld [vmem:[%s342 + $0xf0] sm:$0xff]
    %v2355 = vld [vmem:[%s342 + $0xf8] sm:$0xff]
    %v2356 = vld [vmem:[%s375] sm:$0x1]
    %2357 = vmatprep.subr.mxu0 0.0
    %2358 = vmatpush1.msra.mxu0 %v2324
    %2359 = vmatprep.subr.mxu0 0.0
    %2360 = vmatpush1.msra.mxu0 %v2325
    %2361 = vmatprep.subr.mxu0 0.0
    %2362 = vmatpush1.msra.mxu0 %v2326
    %2363 = vmatprep.subr.mxu0 0.0
    %2364 = vmatpush1.msra.mxu0 %v2327
    %2365 = vmatprep.subr.mxu0 0.0
    %2366 = vmatpush1.msra.mxu0 %v2328
    %2367 = vmatprep.subr.mxu0 0.0
    %2368 = vmatpush1.msra.mxu0 %v2329
    %2369 = vmatprep.subr.mxu0 0.0
    %2370 = vmatpush1.msra.mxu0 %v2330
    %2371 = vmatprep.subr.mxu0 0.0
    %2372 = vmatpush1.msra.mxu0 %v2331
    %2373 = vmatprep.subr.mxu0 0.0
    %2374 = vmatpush1.msra.mxu0 %v2332
    %2375 = vmatprep.subr.mxu0 0.0
    %2376 = vmatpush1.msra.mxu0 %v2333
    %2377 = vmatprep.subr.mxu0 0.0
    %2378 = vmatpush1.msra.mxu0 %v2334
    %2379 = vmatprep.subr.mxu0 0.0
    %2380 = vmatpush1.msra.mxu0 %v2335
    %2381 = vmatprep.subr.mxu0 0.0
    %2382 = vmatpush1.msra.mxu0 %v2336
    %2383 = vmatprep.subr.mxu0 0.0
    %2384 = vmatpush1.msra.mxu0 %v2337
    %2385 = vmatprep.subr.mxu0 0.0
    %2386 = vmatpush1.msra.mxu0 %v2338
    %2387 = vmatprep.subr.mxu0 0.0
    %2388 = vmatpush1.msra.mxu0 %v2339
    %2389 = vmatprep.subr.mxu0 0.0
    %2390 = vmatpush1.msra.mxu0 %v2340
    %2391 = vmatprep.subr.mxu0 0.0
    %2392 = vmatpush1.msra.mxu0 %v2341
    %2393 = vmatprep.subr.mxu0 0.0
    %2394 = vmatpush1.msra.mxu0 %v2342
    %2395 = vmatprep.subr.mxu0 0.0
    %2396 = vmatpush1.msra.mxu0 %v2343
    %2397 = vmatprep.subr.mxu0 0.0
    %2398 = vmatpush1.msra.mxu0 %v2344
    %2399 = vmatprep.subr.mxu0 0.0
    %2400 = vmatpush1.msra.mxu0 %v2345
    %2401 = vmatprep.subr.mxu0 0.0
    %2402 = vmatpush1.msra.mxu0 %v2346
    %2403 = vmatprep.subr.mxu0 0.0
    %2404 = vmatpush1.msra.mxu0 %v2347
    %2405 = vmatprep.subr.mxu0 0.0
    %2406 = vmatpush1.msra.mxu0 %v2348
    %2407 = vmatprep.subr.mxu0 0.0
    %2408 = vmatpush1.msra.mxu0 %v2349
    %2409 = vmatprep.subr.mxu0 0.0
    %2410 = vmatpush1.msra.mxu0 %v2350
    %2411 = vmatprep.subr.mxu0 0.0
    %2412 = vmatpush1.msra.mxu0 %v2351
    %2413 = vmatprep.subr.mxu0 0.0
    %2414 = vmatpush1.msra.mxu0 %v2352
    %2415 = vmatprep.subr.mxu0 0.0
    %2416 = vmatpush1.msra.mxu0 %v2353
    %2417 = vmatprep.subr.mxu0 0.0
    %2418 = vmatpush1.msra.mxu0 %v2354
    %2419 = vmatprep.subr.mxu0 0.0
    %2420 = vmatpush1.msra.mxu0 %v2355
    %2421 = vmatprep.mubr.f32.mxu0 %v2220
    %2422 = vmatmul.mubr.f32.gmra.mrb[0].mxu0 %v2103
    %v2423 = vpop.f32.mrb[0].mxu0
    %v2424 = vadd.f32 %v2356, %v2423
    %v2425 = vpop.f32.mrb[0].mxu0
    %2426 = vdwg.mxu0
    %v2427 = vtanh.pop %v2424
    %v2428 = vmul.f32 %v40, %v2427
    %v2429 = vadd.f32 %v2428, %v41
    %2430 = vrot.lane.b32.xlu0 %v2429, 96
    %v2431 = vpop.permute.xlu0 %2430
    %2432 = vrot.lane.b32.xlu0 %v2429, 64
    %v2433 = vpop.permute.xlu0 %2432
    %2434 = vrot.lane.b32.xlu0 %v2429, 32
    %v2435 = vpop.permute.xlu0 %2434
    %v2436 = vmul.f32 %v2431, %v2218
    %v2437 = vmul.f32 %v2429, %v2433
    %v2438 = vadd.f32 %v2436, %v2437
    %v2439 = vtanh.pop %v2438
    %v2440 = vmul.f32 %v2435, %v2439
    %2441 = vst [vmem:[#allocation2 + $0x9] sm:$0x1] %v2440
    %v2442 = vld [vmem:[#allocation3 + $0xb] sm:$0x1]
    %v2443 = vld [vmem:[#allocation4 + $0x80] sm:$0xff]
    %v2444 = vld [vmem:[#allocation4 + $0x88] sm:$0xff]
    %v2445 = vld [vmem:[#allocation4 + $0x90] sm:$0xff]
    %v2446 = vld [vmem:[#allocation4 + $0x98] sm:$0xff]
    %v2447 = vld [vmem:[#allocation4 + $0xa0] sm:$0xff]
    %v2448 = vld [vmem:[#allocation4 + $0xa8] sm:$0xff]
    %v2449 = vld [vmem:[#allocation4 + $0xb0] sm:$0xff]
    %v2450 = vld [vmem:[#allocation4 + $0xb8] sm:$0xff]
    %v2451 = vld [vmem:[#allocation4 + $0xc0] sm:$0xff]
    %v2452 = vld [vmem:[#allocation4 + $0xc8] sm:$0xff]
    %v2453 = vld [vmem:[#allocation4 + $0xd0] sm:$0xff]
    %v2454 = vld [vmem:[#allocation4 + $0xd8] sm:$0xff]
    %v2455 = vld [vmem:[#allocation4 + $0xe0] sm:$0xff]
    %v2456 = vld [vmem:[#allocation4 + $0xe8] sm:$0xff]
    %v2457 = vld [vmem:[#allocation4 + $0xf0] sm:$0xff]
    %v2458 = vld [vmem:[#allocation4 + $0xf8] sm:$0xff]
    %2459 = vmatprep.subr.mxu0 0.0
    %2460 = vmatpush1.msra.mxu0 %v2443
    %2461 = vmatprep.subr.mxu0 0.0
    %2462 = vmatpush1.msra.mxu0 %v2444
    %2463 = vmatprep.subr.mxu0 0.0
    %2464 = vmatpush1.msra.mxu0 %v2445
    %2465 = vmatprep.subr.mxu0 0.0
    %2466 = vmatpush1.msra.mxu0 %v2446
    %2467 = vmatprep.subr.mxu0 0.0
    %2468 = vmatpush1.msra.mxu0 %v2447
    %2469 = vmatprep.subr.mxu0 0.0
    %2470 = vmatpush1.msra.mxu0 %v2448
    %2471 = vmatprep.subr.mxu0 0.0
    %2472 = vmatpush1.msra.mxu0 %v2449
    %2473 = vmatprep.subr.mxu0 0.0
    %2474 = vmatpush1.msra.mxu0 %v2450
    %2475 = vmatprep.subr.mxu0 0.0
    %2476 = vmatpush1.msra.mxu0 %v2451
    %2477 = vmatprep.subr.mxu0 0.0
    %2478 = vmatpush1.msra.mxu0 %v2452
    %2479 = vmatprep.subr.mxu0 0.0
    %2480 = vmatpush1.msra.mxu0 %v2453
    %2481 = vmatprep.subr.mxu0 0.0
    %2482 = vmatpush1.msra.mxu0 %v2454
    %2483 = vmatprep.subr.mxu0 0.0
    %2484 = vmatpush1.msra.mxu0 %v2455
    %2485 = vmatprep.subr.mxu0 0.0
    %2486 = vmatpush1.msra.mxu0 %v2456
    %2487 = vmatprep.subr.mxu0 0.0
    %2488 = vmatpush1.msra.mxu0 %v2457
    %2489 = vmatprep.subr.mxu0 0.0
    %2490 = vmatpush1.msra.mxu0 %v2458
    %2491 = vmatprep.subr.mxu0 0.0
    %2492 = vmatpush1.msra.mxu0 0.0
    %2493 = vmatprep.subr.mxu0 0.0
    %2494 = vmatpush1.msra.mxu0 0.0
    %2495 = vmatprep.subr.mxu0 0.0
    %2496 = vmatpush1.msra.mxu0 0.0
    %2497 = vmatprep.subr.mxu0 0.0
    %2498 = vmatpush1.msra.mxu0 0.0
    %2499 = vmatprep.subr.mxu0 0.0
    %2500 = vmatpush1.msra.mxu0 0.0
    %2501 = vmatprep.subr.mxu0 0.0
    %2502 = vmatpush1.msra.mxu0 0.0
    %2503 = vmatprep.subr.mxu0 0.0
    %2504 = vmatpush1.msra.mxu0 0.0
    %2505 = vmatprep.subr.mxu0 0.0
    %2506 = vmatpush1.msra.mxu0 0.0
    %2507 = vmatprep.subr.mxu0 0.0
    %2508 = vmatpush1.msra.mxu0 0.0
    %2509 = vmatprep.subr.mxu0 0.0
    %2510 = vmatpush1.msra.mxu0 0.0
    %2511 = vmatprep.subr.mxu0 0.0
    %2512 = vmatpush1.msra.mxu0 0.0
    %2513 = vmatprep.subr.mxu0 0.0
    %2514 = vmatpush1.msra.mxu0 0.0
    %2515 = vmatprep.subr.mxu0 0.0
    %2516 = vmatpush1.msra.mxu0 0.0
    %2517 = vmatprep.subr.mxu0 0.0
    %2518 = vmatpush1.msra.mxu0 0.0
    %2519 = vmatprep.subr.mxu0 0.0
    %2520 = vmatpush1.msra.mxu0 0.0
    %2521 = vmatprep.subr.mxu0 0.0
    %2522 = vmatpush1.msra.mxu0 0.0
    %2523 = vmatprep.mubr.f32.mxu0 0.0
    %2524 = vmatmul.mubr.f32.gmra.mrb[0].mxu0 %v2323
    %v2525 = vpop.f32.mrb[0].mxu0
    %v2526 = vadd.f32 0.0, %v2525
    %v2527 = vpop.f32.mrb[0].mxu0
    %2528 = vdwg.mxu0
    %v2529 = vadd.f32 %v2442, %v2526
    %v2530 = vtanh.pop %v2529
    %v2531 = vmul.f32 %v40, %v2530
    %v2532 = vadd.f32 %v2531, %v41
    %2533 = vrot.lane.b32.xlu0 %v2532, 96
    %v2534 = vpop.permute.xlu0 %2533
    %2535 = vrot.lane.b32.xlu0 %v2532, 64
    %v2536 = vpop.permute.xlu0 %2535
    %2537 = vrot.lane.b32.xlu0 %v2532, 32
    %v2538 = vpop.permute.xlu0 %2537
    %v2539 = vmul.f32 %v2534, %v2321
    %v2540 = vmul.f32 %v2532, %v2536
    %v2541 = vadd.f32 %v2539, %v2540
    %v2542 = vtanh.pop %v2541
    %v2543 = vmul.f32 %v2538, %v2542
    %v2544 = vld [vmem:[%s342] sm:$0xff]
    %v2545 = vld [vmem:[%s342 + $0x8] sm:$0xff]
    %v2546 = vld [vmem:[%s342 + $0x10] sm:$0xff]
    %v2547 = vld [vmem:[%s342 + $0x18] sm:$0xff]
    %v2548 = vld [vmem:[%s342 + $0x20] sm:$0xff]
    %v2549 = vld [vmem:[%s342 + $0x28] sm:$0xff]
    %v2550 = vld [vmem:[%s342 + $0x30] sm:$0xff]
    %v2551 = vld [vmem:[%s342 + $0x38] sm:$0xff]
    %v2552 = vld [vmem:[%s342 + $0x40] sm:$0xff]
    %v2553 = vld [vmem:[%s342 + $0x48] sm:$0xff]
    %v2554 = vld [vmem:[%s342 + $0x50] sm:$0xff]
    %v2555 = vld [vmem:[%s342 + $0x58] sm:$0xff]
    %v2556 = vld [vmem:[%s342 + $0x60] sm:$0xff]
    %v2557 = vld [vmem:[%s342 + $0x68] sm:$0xff]
    %v2558 = vld [vmem:[%s342 + $0x70] sm:$0xff]
    %v2559 = vld [vmem:[%s342 + $0x78] sm:$0xff]
    %v2560 = vld [vmem:[%s342 + $0x80] sm:$0xff]
    %v2561 = vld [vmem:[%s342 + $0x88] sm:$0xff]
    %v2562 = vld [vmem:[%s342 + $0x90] sm:$0xff]
    %v2563 = vld [vmem:[%s342 + $0x98] sm:$0xff]
    %v2564 = vld [vmem:[%s342 + $0xa0] sm:$0xff]
    %v2565 = vld [vmem:[%s342 + $0xa8] sm:$0xff]
    %v2566 = vld [vmem:[%s342 + $0xb0] sm:$0xff]
    %v2567 = vld [vmem:[%s342 + $0xb8] sm:$0xff]
    %v2568 = vld [vmem:[%s342 + $0xc0] sm:$0xff]
    %v2569 = vld [vmem:[%s342 + $0xc8] sm:$0xff]
    %v2570 = vld [vmem:[%s342 + $0xd0] sm:$0xff]
    %v2571 = vld [vmem:[%s342 + $0xd8] sm:$0xff]
    %v2572 = vld [vmem:[%s342 + $0xe0] sm:$0xff]
    %v2573 = vld [vmem:[%s342 + $0xe8] sm:$0xff]
    %v2574 = vld [vmem:[%s342 + $0xf0] sm:$0xff]
    %v2575 = vld [vmem:[%s342 + $0xf8] sm:$0xff]
    %v2576 = vld [vmem:[%s375] sm:$0x1]
    %2577 = vmatprep.subr.mxu0 0.0
    %2578 = vmatpush1.msra.mxu0 %v2544
    %2579 = vmatprep.subr.mxu0 0.0
    %2580 = vmatpush1.msra.mxu0 %v2545
    %2581 = vmatprep.subr.mxu0 0.0
    %2582 = vmatpush1.msra.mxu0 %v2546
    %2583 = vmatprep.subr.mxu0 0.0
    %2584 = vmatpush1.msra.mxu0 %v2547
    %2585 = vmatprep.subr.mxu0 0.0
    %2586 = vmatpush1.msra.mxu0 %v2548
    %2587 = vmatprep.subr.mxu0 0.0
    %2588 = vmatpush1.msra.mxu0 %v2549
    %2589 = vmatprep.subr.mxu0 0.0
    %2590 = vmatpush1.msra.mxu0 %v2550
    %2591 = vmatprep.subr.mxu0 0.0
    %2592 = vmatpush1.msra.mxu0 %v2551
    %2593 = vmatprep.subr.mxu0 0.0
    %2594 = vmatpush1.msra.mxu0 %v2552
    %2595 = vmatprep.subr.mxu0 0.0
    %2596 = vmatpush1.msra.mxu0 %v2553
    %2597 = vmatprep.subr.mxu0 0.0
    %2598 = vmatpush1.msra.mxu0 %v2554
    %2599 = vmatprep.subr.mxu0 0.0
    %2600 = vmatpush1.msra.mxu0 %v2555
    %2601 = vmatprep.subr.mxu0 0.0
    %2602 = vmatpush1.msra.mxu0 %v2556
    %2603 = vmatprep.subr.mxu0 0.0
    %2604 = vmatpush1.msra.mxu0 %v2557
    %2605 = vmatprep.subr.mxu0 0.0
    %2606 = vmatpush1.msra.mxu0 %v2558
    %2607 = vmatprep.subr.mxu0 0.0
    %2608 = vmatpush1.msra.mxu0 %v2559
    %2609 = vmatprep.subr.mxu0 0.0
    %2610 = vmatpush1.msra.mxu0 %v2560
    %2611 = vmatprep.subr.mxu0 0.0
    %2612 = vmatpush1.msra.mxu0 %v2561
    %2613 = vmatprep.subr.mxu0 0.0
    %2614 = vmatpush1.msra.mxu0 %v2562
    %2615 = vmatprep.subr.mxu0 0.0
    %2616 = vmatpush1.msra.mxu0 %v2563
    %2617 = vmatprep.subr.mxu0 0.0
    %2618 = vmatpush1.msra.mxu0 %v2564
    %2619 = vmatprep.subr.mxu0 0.0
    %2620 = vmatpush1.msra.mxu0 %v2565
    %2621 = vmatprep.subr.mxu0 0.0
    %2622 = vmatpush1.msra.mxu0 %v2566
    %2623 = vmatprep.subr.mxu0 0.0
    %2624 = vmatpush1.msra.mxu0 %v2567
    %2625 = vmatprep.subr.mxu0 0.0
    %2626 = vmatpush1.msra.mxu0 %v2568
    %2627 = vmatprep.subr.mxu0 0.0
    %2628 = vmatpush1.msra.mxu0 %v2569
    %2629 = vmatprep.subr.mxu0 0.0
    %2630 = vmatpush1.msra.mxu0 %v2570
    %2631 = vmatprep.subr.mxu0 0.0
    %2632 = vmatpush1.msra.mxu0 %v2571
    %2633 = vmatprep.subr.mxu0 0.0
    %2634 = vmatpush1.msra.mxu0 %v2572
    %2635 = vmatprep.subr.mxu0 0.0
    %2636 = vmatpush1.msra.mxu0 %v2573
    %2637 = vmatprep.subr.mxu0 0.0
    %2638 = vmatpush1.msra.mxu0 %v2574
    %2639 = vmatprep.subr.mxu0 0.0
    %2640 = vmatpush1.msra.mxu0 %v2575
    %2641 = vmatprep.mubr.f32.mxu0 %v2440
    %2642 = vmatmul.mubr.f32.gmra.mrb[0].mxu0 %v2323
    %v2643 = vpop.f32.mrb[0].mxu0
    %v2644 = vadd.f32 %v2576, %v2643
    %v2645 = vpop.f32.mrb[0].mxu0
    %2646 = vdwg.mxu0
    %v2647 = vtanh.pop %v2644
    %v2648 = vmul.f32 %v40, %v2647
    %v2649 = vadd.f32 %v2648, %v41
    %2650 = vrot.lane.b32.xlu0 %v2649, 96
    %v2651 = vpop.permute.xlu0 %2650
    %2652 = vrot.lane.b32.xlu0 %v2649, 64
    %v2653 = vpop.permute.xlu0 %2652
    %2654 = vrot.lane.b32.xlu0 %v2649, 32
    %v2655 = vpop.permute.xlu0 %2654
    %v2656 = vmul.f32 %v2651, %v2438
    %v2657 = vmul.f32 %v2649, %v2653
    %v2658 = vadd.f32 %v2656, %v2657
    %v2659 = vtanh.pop %v2658
    %v2660 = vmul.f32 %v2655, %v2659
    %2661 = vst [vmem:[#allocation2 + $0xa] sm:$0x1] %v2660
    %v2662 = vld [vmem:[#allocation3 + $0xc] sm:$0x1]
    %v2663 = vld [vmem:[#allocation4 + $0x80] sm:$0xff]
    %v2664 = vld [vmem:[#allocation4 + $0x88] sm:$0xff]
    %v2665 = vld [vmem:[#allocation4 + $0x90] sm:$0xff]
    %v2666 = vld [vmem:[#allocation4 + $0x98] sm:$0xff]
    %v2667 = vld [vmem:[#allocation4 + $0xa0] sm:$0xff]
    %v2668 = vld [vmem:[#allocation4 + $0xa8] sm:$0xff]
    %v2669 = vld [vmem:[#allocation4 + $0xb0] sm:$0xff]
    %v2670 = vld [vmem:[#allocation4 + $0xb8] sm:$0xff]
    %v2671 = vld [vmem:[#allocation4 + $0xc0] sm:$0xff]
    %v2672 = vld [vmem:[#allocation4 + $0xc8] sm:$0xff]
    %v2673 = vld [vmem:[#allocation4 + $0xd0] sm:$0xff]
    %v2674 = vld [vmem:[#allocation4 + $0xd8] sm:$0xff]
    %v2675 = vld [vmem:[#allocation4 + $0xe0] sm:$0xff]
    %v2676 = vld [vmem:[#allocation4 + $0xe8] sm:$0xff]
    %v2677 = vld [vmem:[#allocation4 + $0xf0] sm:$0xff]
    %v2678 = vld [vmem:[#allocation4 + $0xf8] sm:$0xff]
    %2679 = vmatprep.subr.mxu0 0.0
    %2680 = vmatpush1.msra.mxu0 %v2663
    %2681 = vmatprep.subr.mxu0 0.0
    %2682 = vmatpush1.msra.mxu0 %v2664
    %2683 = vmatprep.subr.mxu0 0.0
    %2684 = vmatpush1.msra.mxu0 %v2665
    %2685 = vmatprep.subr.mxu0 0.0
    %2686 = vmatpush1.msra.mxu0 %v2666
    %2687 = vmatprep.subr.mxu0 0.0
    %2688 = vmatpush1.msra.mxu0 %v2667
    %2689 = vmatprep.subr.mxu0 0.0
    %2690 = vmatpush1.msra.mxu0 %v2668
    %2691 = vmatprep.subr.mxu0 0.0
    %2692 = vmatpush1.msra.mxu0 %v2669
    %2693 = vmatprep.subr.mxu0 0.0
    %2694 = vmatpush1.msra.mxu0 %v2670
    %2695 = vmatprep.subr.mxu0 0.0
    %2696 = vmatpush1.msra.mxu0 %v2671
    %2697 = vmatprep.subr.mxu0 0.0
    %2698 = vmatpush1.msra.mxu0 %v2672
    %2699 = vmatprep.subr.mxu0 0.0
    %2700 = vmatpush1.msra.mxu0 %v2673
    %2701 = vmatprep.subr.mxu0 0.0
    %2702 = vmatpush1.msra.mxu0 %v2674
    %2703 = vmatprep.subr.mxu0 0.0
    %2704 = vmatpush1.msra.mxu0 %v2675
    %2705 = vmatprep.subr.mxu0 0.0
    %2706 = vmatpush1.msra.mxu0 %v2676
    %2707 = vmatprep.subr.mxu0 0.0
    %2708 = vmatpush1.msra.mxu0 %v2677
    %2709 = vmatprep.subr.mxu0 0.0
    %2710 = vmatpush1.msra.mxu0 %v2678
    %2711 = vmatprep.subr.mxu0 0.0
    %2712 = vmatpush1.msra.mxu0 0.0
    %2713 = vmatprep.subr.mxu0 0.0
    %2714 = vmatpush1.msra.mxu0 0.0
    %2715 = vmatprep.subr.mxu0 0.0
    %2716 = vmatpush1.msra.mxu0 0.0
    %2717 = vmatprep.subr.mxu0 0.0
    %2718 = vmatpush1.msra.mxu0 0.0
    %2719 = vmatprep.subr.mxu0 0.0
    %2720 = vmatpush1.msra.mxu0 0.0
    %2721 = vmatprep.subr.mxu0 0.0
    %2722 = vmatpush1.msra.mxu0 0.0
    %2723 = vmatprep.subr.mxu0 0.0
    %2724 = vmatpush1.msra.mxu0 0.0
    %2725 = vmatprep.subr.mxu0 0.0
    %2726 = vmatpush1.msra.mxu0 0.0
    %2727 = vmatprep.subr.mxu0 0.0
    %2728 = vmatpush1.msra.mxu0 0.0
    %2729 = vmatprep.subr.mxu0 0.0
    %2730 = vmatpush1.msra.mxu0 0.0
    %2731 = vmatprep.subr.mxu0 0.0
    %2732 = vmatpush1.msra.mxu0 0.0
    %2733 = vmatprep.subr.mxu0 0.0
    %2734 = vmatpush1.msra.mxu0 0.0
    %2735 = vmatprep.subr.mxu0 0.0
    %2736 = vmatpush1.msra.mxu0 0.0
    %2737 = vmatprep.subr.mxu0 0.0
    %2738 = vmatpush1.msra.mxu0 0.0
    %2739 = vmatprep.subr.mxu0 0.0
    %2740 = vmatpush1.msra.mxu0 0.0
    %2741 = vmatprep.subr.mxu0 0.0
    %2742 = vmatpush1.msra.mxu0 0.0
    %2743 = vmatprep.mubr.f32.mxu0 0.0
    %2744 = vmatmul.mubr.f32.gmra.mrb[0].mxu0 %v2543
    %v2745 = vpop.f32.mrb[0].mxu0
    %v2746 = vadd.f32 0.0, %v2745
    %v2747 = vpop.f32.mrb[0].mxu0
    %2748 = vdwg.mxu0
    %v2749 = vadd.f32 %v2662, %v2746
    %v2750 = vtanh.pop %v2749
    %v2751 = vmul.f32 %v40, %v2750
    %v2752 = vadd.f32 %v2751, %v41
    %2753 = vrot.lane.b32.xlu0 %v2752, 96
    %v2754 = vpop.permute.xlu0 %2753
    %2755 = vrot.lane.b32.xlu0 %v2752, 64
    %v2756 = vpop.permute.xlu0 %2755
    %2757 = vrot.lane.b32.xlu0 %v2752, 32
    %v2758 = vpop.permute.xlu0 %2757
    %v2759 = vmul.f32 %v2754, %v2541
    %v2760 = vmul.f32 %v2752, %v2756
    %v2761 = vadd.f32 %v2759, %v2760
    %v2762 = vtanh.pop %v2761
    %v2763 = vmul.f32 %v2758, %v2762
    %v2764 = vld [vmem:[%s342] sm:$0xff]
    %v2765 = vld [vmem:[%s342 + $0x8] sm:$0xff]
    %v2766 = vld [vmem:[%s342 + $0x10] sm:$0xff]
    %v2767 = vld [vmem:[%s342 + $0x18] sm:$0xff]
    %v2768 = vld [vmem:[%s342 + $0x20] sm:$0xff]
    %v2769 = vld [vmem:[%s342 + $0x28] sm:$0xff]
    %v2770 = vld [vmem:[%s342 + $0x30] sm:$0xff]
    %v2771 = vld [vmem:[%s342 + $0x38] sm:$0xff]
    %v2772 = vld [vmem:[%s342 + $0x40] sm:$0xff]
    %v2773 = vld [vmem:[%s342 + $0x48] sm:$0xff]
    %v2774 = vld [vmem:[%s342 + $0x50] sm:$0xff]
    %v2775 = vld [vmem:[%s342 + $0x58] sm:$0xff]
    %v2776 = vld [vmem:[%s342 + $0x60] sm:$0xff]
    %v2777 = vld [vmem:[%s342 + $0x68] sm:$0xff]
    %v2778 = vld [vmem:[%s342 + $0x70] sm:$0xff]
    %v2779 = vld [vmem:[%s342 + $0x78] sm:$0xff]
    %v2780 = vld [vmem:[%s342 + $0x80] sm:$0xff]
    %v2781 = vld [vmem:[%s342 + $0x88] sm:$0xff]
    %v2782 = vld [vmem:[%s342 + $0x90] sm:$0xff]
    %v2783 = vld [vmem:[%s342 + $0x98] sm:$0xff]
    %v2784 = vld [vmem:[%s342 + $0xa0] sm:$0xff]
    %v2785 = vld [vmem:[%s342 + $0xa8] sm:$0xff]
    %v2786 = vld [vmem:[%s342 + $0xb0] sm:$0xff]
    %v2787 = vld [vmem:[%s342 + $0xb8] sm:$0xff]
    %v2788 = vld [vmem:[%s342 + $0xc0] sm:$0xff]
    %v2789 = vld [vmem:[%s342 + $0xc8] sm:$0xff]
    %v2790 = vld [vmem:[%s342 + $0xd0] sm:$0xff]
    %v2791 = vld [vmem:[%s342 + $0xd8] sm:$0xff]
    %v2792 = vld [vmem:[%s342 + $0xe0] sm:$0xff]
    %v2793 = vld [vmem:[%s342 + $0xe8] sm:$0xff]
    %v2794 = vld [vmem:[%s342 + $0xf0] sm:$0xff]
    %v2795 = vld [vmem:[%s342 + $0xf8] sm:$0xff]
    %v2796 = vld [vmem:[%s375] sm:$0x1]
    %2797 = vmatprep.subr.mxu0 0.0
    %2798 = vmatpush1.msra.mxu0 %v2764
    %2799 = vmatprep.subr.mxu0 0.0
    %2800 = vmatpush1.msra.mxu0 %v2765
    %2801 = vmatprep.subr.mxu0 0.0
    %2802 = vmatpush1.msra.mxu0 %v2766
    %2803 = vmatprep.subr.mxu0 0.0
    %2804 = vmatpush1.msra.mxu0 %v2767
    %2805 = vmatprep.subr.mxu0 0.0
    %2806 = vmatpush1.msra.mxu0 %v2768
    %2807 = vmatprep.subr.mxu0 0.0
    %2808 = vmatpush1.msra.mxu0 %v2769
    %2809 = vmatprep.subr.mxu0 0.0
    %2810 = vmatpush1.msra.mxu0 %v2770
    %2811 = vmatprep.subr.mxu0 0.0
    %2812 = vmatpush1.msra.mxu0 %v2771
    %2813 = vmatprep.subr.mxu0 0.0
    %2814 = vmatpush1.msra.mxu0 %v2772
    %2815 = vmatprep.subr.mxu0 0.0
    %2816 = vmatpush1.msra.mxu0 %v2773
    %2817 = vmatprep.subr.mxu0 0.0
    %2818 = vmatpush1.msra.mxu0 %v2774
    %2819 = vmatprep.subr.mxu0 0.0
    %2820 = vmatpush1.msra.mxu0 %v2775
    %2821 = vmatprep.subr.mxu0 0.0
    %2822 = vmatpush1.msra.mxu0 %v2776
    %2823 = vmatprep.subr.mxu0 0.0
    %2824 = vmatpush1.msra.mxu0 %v2777
    %2825 = vmatprep.subr.mxu0 0.0
    %2826 = vmatpush1.msra.mxu0 %v2778
    %2827 = vmatprep.subr.mxu0 0.0
    %2828 = vmatpush1.msra.mxu0 %v2779
    %2829 = vmatprep.subr.mxu0 0.0
    %2830 = vmatpush1.msra.mxu0 %v2780
    %2831 = vmatprep.subr.mxu0 0.0
    %2832 = vmatpush1.msra.mxu0 %v2781
    %2833 = vmatprep.subr.mxu0 0.0
    %2834 = vmatpush1.msra.mxu0 %v2782
    %2835 = vmatprep.subr.mxu0 0.0
    %2836 = vmatpush1.msra.mxu0 %v2783
    %2837 = vmatprep.subr.mxu0 0.0
    %2838 = vmatpush1.msra.mxu0 %v2784
    %2839 = vmatprep.subr.mxu0 0.0
    %2840 = vmatpush1.msra.mxu0 %v2785
    %2841 = vmatprep.subr.mxu0 0.0
    %2842 = vmatpush1.msra.mxu0 %v2786
    %2843 = vmatprep.subr.mxu0 0.0
    %2844 = vmatpush1.msra.mxu0 %v2787
    %2845 = vmatprep.subr.mxu0 0.0
    %2846 = vmatpush1.msra.mxu0 %v2788
    %2847 = vmatprep.subr.mxu0 0.0
    %2848 = vmatpush1.msra.mxu0 %v2789
    %2849 = vmatprep.subr.mxu0 0.0
    %2850 = vmatpush1.msra.mxu0 %v2790
    %2851 = vmatprep.subr.mxu0 0.0
    %2852 = vmatpush1.msra.mxu0 %v2791
    %2853 = vmatprep.subr.mxu0 0.0
    %2854 = vmatpush1.msra.mxu0 %v2792
    %2855 = vmatprep.subr.mxu0 0.0
    %2856 = vmatpush1.msra.mxu0 %v2793
    %2857 = vmatprep.subr.mxu0 0.0
    %2858 = vmatpush1.msra.mxu0 %v2794
    %2859 = vmatprep.subr.mxu0 0.0
    %2860 = vmatpush1.msra.mxu0 %v2795
    %2861 = vmatprep.mubr.f32.mxu0 %v2660
    %2862 = vmatmul.mubr.f32.gmra.mrb[0].mxu0 %v2543
    %v2863 = vpop.f32.mrb[0].mxu0
    %v2864 = vadd.f32 %v2796, %v2863
    %v2865 = vpop.f32.mrb[0].mxu0
    %2866 = vdwg.mxu0
    %v2867 = vtanh.pop %v2864
    %v2868 = vmul.f32 %v40, %v2867
    %v2869 = vadd.f32 %v2868, %v41
    %2870 = vrot.lane.b32.xlu0 %v2869, 96
    %v2871 = vpop.permute.xlu0 %2870
    %2872 = vrot.lane.b32.xlu0 %v2869, 64
    %v2873 = vpop.permute.xlu0 %2872
    %2874 = vrot.lane.b32.xlu0 %v2869, 32
    %v2875 = vpop.permute.xlu0 %2874
    %v2876 = vmul.f32 %v2871, %v2658
    %v2877 = vmul.f32 %v2869, %v2873
    %v2878 = vadd.f32 %v2876, %v2877
    %v2879 = vtanh.pop %v2878
    %v2880 = vmul.f32 %v2875, %v2879
    %2881 = vst [vmem:[#allocation2 + $0xb] sm:$0x1] %v2880
    %v2882 = vld [vmem:[#allocation3 + $0xd] sm:$0x1]
    %v2883 = vld [vmem:[#allocation4 + $0x80] sm:$0xff]
    %v2884 = vld [vmem:[#allocation4 + $0x88] sm:$0xff]
    %v2885 = vld [vmem:[#allocation4 + $0x90] sm:$0xff]
    %v2886 = vld [vmem:[#allocation4 + $0x98] sm:$0xff]
    %v2887 = vld [vmem:[#allocation4 + $0xa0] sm:$0xff]
    %v2888 = vld [vmem:[#allocation4 + $0xa8] sm:$0xff]
    %v2889 = vld [vmem:[#allocation4 + $0xb0] sm:$0xff]
    %v2890 = vld [vmem:[#allocation4 + $0xb8] sm:$0xff]
    %v2891 = vld [vmem:[#allocation4 + $0xc0] sm:$0xff]
    %v2892 = vld [vmem:[#allocation4 + $0xc8] sm:$0xff]
    %v2893 = vld [vmem:[#allocation4 + $0xd0] sm:$0xff]
    %v2894 = vld [vmem:[#allocation4 + $0xd8] sm:$0xff]
    %v2895 = vld [vmem:[#allocation4 + $0xe0] sm:$0xff]
    %v2896 = vld [vmem:[#allocation4 + $0xe8] sm:$0xff]
    %v2897 = vld [vmem:[#allocation4 + $0xf0] sm:$0xff]
    %v2898 = vld [vmem:[#allocation4 + $0xf8] sm:$0xff]
    %2899 = vmatprep.subr.mxu0 0.0
    %2900 = vmatpush1.msra.mxu0 %v2883
    %2901 = vmatprep.subr.mxu0 0.0
    %2902 = vmatpush1.msra.mxu0 %v2884
    %2903 = vmatprep.subr.mxu0 0.0
    %2904 = vmatpush1.msra.mxu0 %v2885
    %2905 = vmatprep.subr.mxu0 0.0
    %2906 = vmatpush1.msra.mxu0 %v2886
    %2907 = vmatprep.subr.mxu0 0.0
    %2908 = vmatpush1.msra.mxu0 %v2887
    %2909 = vmatprep.subr.mxu0 0.0
    %2910 = vmatpush1.msra.mxu0 %v2888
    %2911 = vmatprep.subr.mxu0 0.0
    %2912 = vmatpush1.msra.mxu0 %v2889
    %2913 = vmatprep.subr.mxu0 0.0
    %2914 = vmatpush1.msra.mxu0 %v2890
    %2915 = vmatprep.subr.mxu0 0.0
    %2916 = vmatpush1.msra.mxu0 %v2891
    %2917 = vmatprep.subr.mxu0 0.0
    %2918 = vmatpush1.msra.mxu0 %v2892
    %2919 = vmatprep.subr.mxu0 0.0
    %2920 = vmatpush1.msra.mxu0 %v2893
    %2921 = vmatprep.subr.mxu0 0.0
    %2922 = vmatpush1.msra.mxu0 %v2894
    %2923 = vmatprep.subr.mxu0 0.0
    %2924 = vmatpush1.msra.mxu0 %v2895
    %2925 = vmatprep.subr.mxu0 0.0
    %2926 = vmatpush1.msra.mxu0 %v2896
    %2927 = vmatprep.subr.mxu0 0.0
    %2928 = vmatpush1.msra.mxu0 %v2897
    %2929 = vmatprep.subr.mxu0 0.0
    %2930 = vmatpush1.msra.mxu0 %v2898
    %2931 = vmatprep.subr.mxu0 0.0
    %2932 = vmatpush1.msra.mxu0 0.0
    %2933 = vmatprep.subr.mxu0 0.0
    %2934 = vmatpush1.msra.mxu0 0.0
    %2935 = vmatprep.subr.mxu0 0.0
    %2936 = vmatpush1.msra.mxu0 0.0
    %2937 = vmatprep.subr.mxu0 0.0
    %2938 = vmatpush1.msra.mxu0 0.0
    %2939 = vmatprep.subr.mxu0 0.0
    %2940 = vmatpush1.msra.mxu0 0.0
    %2941 = vmatprep.subr.mxu0 0.0
    %2942 = vmatpush1.msra.mxu0 0.0
    %2943 = vmatprep.subr.mxu0 0.0
    %2944 = vmatpush1.msra.mxu0 0.0
    %2945 = vmatprep.subr.mxu0 0.0
    %2946 = vmatpush1.msra.mxu0 0.0
    %2947 = vmatprep.subr.mxu0 0.0
    %2948 = vmatpush1.msra.mxu0 0.0
    %2949 = vmatprep.subr.mxu0 0.0
    %2950 = vmatpush1.msra.mxu0 0.0
    %2951 = vmatprep.subr.mxu0 0.0
    %2952 = vmatpush1.msra.mxu0 0.0
    %2953 = vmatprep.subr.mxu0 0.0
    %2954 = vmatpush1.msra.mxu0 0.0
    %2955 = vmatprep.subr.mxu0 0.0
    %2956 = vmatpush1.msra.mxu0 0.0
    %2957 = vmatprep.subr.mxu0 0.0
    %2958 = vmatpush1.msra.mxu0 0.0
    %2959 = vmatprep.subr.mxu0 0.0
    %2960 = vmatpush1.msra.mxu0 0.0
    %2961 = vmatprep.subr.mxu0 0.0
    %2962 = vmatpush1.msra.mxu0 0.0
    %2963 = vmatprep.mubr.f32.mxu0 0.0
    %2964 = vmatmul.mubr.f32.gmra.mrb[0].mxu0 %v2763
    %v2965 = vpop.f32.mrb[0].mxu0
    %v2966 = vadd.f32 0.0, %v2965
    %v2967 = vpop.f32.mrb[0].mxu0
    %2968 = vdwg.mxu0
    %v2969 = vadd.f32 %v2882, %v2966
    %v2970 = vtanh.pop %v2969
    %v2971 = vmul.f32 %v40, %v2970
    %v2972 = vadd.f32 %v2971, %v41
    %2973 = vrot.lane.b32.xlu0 %v2972, 96
    %v2974 = vpop.permute.xlu0 %2973
    %2975 = vrot.lane.b32.xlu0 %v2972, 64
    %v2976 = vpop.permute.xlu0 %2975
    %2977 = vrot.lane.b32.xlu0 %v2972, 32
    %v2978 = vpop.permute.xlu0 %2977
    %v2979 = vmul.f32 %v2974, %v2761
    %v2980 = vmul.f32 %v2972, %v2976
    %v2981 = vadd.f32 %v2979, %v2980
    %v2982 = vtanh.pop %v2981
    %v2983 = vmul.f32 %v2978, %v2982
    %v2984 = vld [vmem:[%s342] sm:$0xff]
    %v2985 = vld [vmem:[%s342 + $0x8] sm:$0xff]
    %v2986 = vld [vmem:[%s342 + $0x10] sm:$0xff]
    %v2987 = vld [vmem:[%s342 + $0x18] sm:$0xff]
    %v2988 = vld [vmem:[%s342 + $0x20] sm:$0xff]
    %v2989 = vld [vmem:[%s342 + $0x28] sm:$0xff]
    %v2990 = vld [vmem:[%s342 + $0x30] sm:$0xff]
    %v2991 = vld [vmem:[%s342 + $0x38] sm:$0xff]
    %v2992 = vld [vmem:[%s342 + $0x40] sm:$0xff]
    %v2993 = vld [vmem:[%s342 + $0x48] sm:$0xff]
    %v2994 = vld [vmem:[%s342 + $0x50] sm:$0xff]
    %v2995 = vld [vmem:[%s342 + $0x58] sm:$0xff]
    %v2996 = vld [vmem:[%s342 + $0x60] sm:$0xff]
    %v2997 = vld [vmem:[%s342 + $0x68] sm:$0xff]
    %v2998 = vld [vmem:[%s342 + $0x70] sm:$0xff]
    %v2999 = vld [vmem:[%s342 + $0x78] sm:$0xff]
    %v3000 = vld [vmem:[%s342 + $0x80] sm:$0xff]
    %v3001 = vld [vmem:[%s342 + $0x88] sm:$0xff]
    %v3002 = vld [vmem:[%s342 + $0x90] sm:$0xff]
    %v3003 = vld [vmem:[%s342 + $0x98] sm:$0xff]
    %v3004 = vld [vmem:[%s342 + $0xa0] sm:$0xff]
    %v3005 = vld [vmem:[%s342 + $0xa8] sm:$0xff]
    %v3006 = vld [vmem:[%s342 + $0xb0] sm:$0xff]
    %v3007 = vld [vmem:[%s342 + $0xb8] sm:$0xff]
    %v3008 = vld [vmem:[%s342 + $0xc0] sm:$0xff]
    %v3009 = vld [vmem:[%s342 + $0xc8] sm:$0xff]
    %v3010 = vld [vmem:[%s342 + $0xd0] sm:$0xff]
    %v3011 = vld [vmem:[%s342 + $0xd8] sm:$0xff]
    %v3012 = vld [vmem:[%s342 + $0xe0] sm:$0xff]
    %v3013 = vld [vmem:[%s342 + $0xe8] sm:$0xff]
    %v3014 = vld [vmem:[%s342 + $0xf0] sm:$0xff]
    %v3015 = vld [vmem:[%s342 + $0xf8] sm:$0xff]
    %v3016 = vld [vmem:[%s375] sm:$0x1]
    %3017 = vmatprep.subr.mxu0 0.0
    %3018 = vmatpush1.msra.mxu0 %v2984
    %3019 = vmatprep.subr.mxu0 0.0
    %3020 = vmatpush1.msra.mxu0 %v2985
    %3021 = vmatprep.subr.mxu0 0.0
    %3022 = vmatpush1.msra.mxu0 %v2986
    %3023 = vmatprep.subr.mxu0 0.0
    %3024 = vmatpush1.msra.mxu0 %v2987
    %3025 = vmatprep.subr.mxu0 0.0
    %3026 = vmatpush1.msra.mxu0 %v2988
    %3027 = vmatprep.subr.mxu0 0.0
    %3028 = vmatpush1.msra.mxu0 %v2989
    %3029 = vmatprep.subr.mxu0 0.0
    %3030 = vmatpush1.msra.mxu0 %v2990
    %3031 = vmatprep.subr.mxu0 0.0
    %3032 = vmatpush1.msra.mxu0 %v2991
    %3033 = vmatprep.subr.mxu0 0.0
    %3034 = vmatpush1.msra.mxu0 %v2992
    %3035 = vmatprep.subr.mxu0 0.0
    %3036 = vmatpush1.msra.mxu0 %v2993
    %3037 = vmatprep.subr.mxu0 0.0
    %3038 = vmatpush1.msra.mxu0 %v2994
    %3039 = vmatprep.subr.mxu0 0.0
    %3040 = vmatpush1.msra.mxu0 %v2995
    %3041 = vmatprep.subr.mxu0 0.0
    %3042 = vmatpush1.msra.mxu0 %v2996
    %3043 = vmatprep.subr.mxu0 0.0
    %3044 = vmatpush1.msra.mxu0 %v2997
    %3045 = vmatprep.subr.mxu0 0.0
    %3046 = vmatpush1.msra.mxu0 %v2998
    %3047 = vmatprep.subr.mxu0 0.0
    %3048 = vmatpush1.msra.mxu0 %v2999
    %3049 = vmatprep.subr.mxu0 0.0
    %3050 = vmatpush1.msra.mxu0 %v3000
    %3051 = vmatprep.subr.mxu0 0.0
    %3052 = vmatpush1.msra.mxu0 %v3001
    %3053 = vmatprep.subr.mxu0 0.0
    %3054 = vmatpush1.msra.mxu0 %v3002
    %3055 = vmatprep.subr.mxu0 0.0
    %3056 = vmatpush1.msra.mxu0 %v3003
    %3057 = vmatprep.subr.mxu0 0.0
    %3058 = vmatpush1.msra.mxu0 %v3004
    %3059 = vmatprep.subr.mxu0 0.0
    %3060 = vmatpush1.msra.mxu0 %v3005
    %3061 = vmatprep.subr.mxu0 0.0
    %3062 = vmatpush1.msra.mxu0 %v3006
    %3063 = vmatprep.subr.mxu0 0.0
    %3064 = vmatpush1.msra.mxu0 %v3007
    %3065 = vmatprep.subr.mxu0 0.0
    %3066 = vmatpush1.msra.mxu0 %v3008
    %3067 = vmatprep.subr.mxu0 0.0
    %3068 = vmatpush1.msra.mxu0 %v3009
    %3069 = vmatprep.subr.mxu0 0.0
    %3070 = vmatpush1.msra.mxu0 %v3010
    %3071 = vmatprep.subr.mxu0 0.0
    %3072 = vmatpush1.msra.mxu0 %v3011
    %3073 = vmatprep.subr.mxu0 0.0
    %3074 = vmatpush1.msra.mxu0 %v3012
    %3075 = vmatprep.subr.mxu0 0.0
    %3076 = vmatpush1.msra.mxu0 %v3013
    %3077 = vmatprep.subr.mxu0 0.0
    %3078 = vmatpush1.msra.mxu0 %v3014
    %3079 = vmatprep.subr.mxu0 0.0
    %3080 = vmatpush1.msra.mxu0 %v3015
    %3081 = vmatprep.mubr.f32.mxu0 %v2880
    %3082 = vmatmul.mubr.f32.gmra.mrb[0].mxu0 %v2763
    %v3083 = vpop.f32.mrb[0].mxu0
    %v3084 = vadd.f32 %v3016, %v3083
    %v3085 = vpop.f32.mrb[0].mxu0
    %3086 = vdwg.mxu0
    %v3087 = vtanh.pop %v3084
    %v3088 = vmul.f32 %v40, %v3087
    %v3089 = vadd.f32 %v3088, %v41
    %3090 = vrot.lane.b32.xlu0 %v3089, 96
    %v3091 = vpop.permute.xlu0 %3090
    %3092 = vrot.lane.b32.xlu0 %v3089, 64
    %v3093 = vpop.permute.xlu0 %3092
    %3094 = vrot.lane.b32.xlu0 %v3089, 32
    %v3095 = vpop.permute.xlu0 %3094
    %v3096 = vmul.f32 %v3091, %v2878
    %v3097 = vmul.f32 %v3089, %v3093
    %v3098 = vadd.f32 %v3096, %v3097
    %v3099 = vtanh.pop %v3098
    %v3100 = vmul.f32 %v3095, %v3099
    %3101 = vst [vmem:[#allocation2 + $0xc] sm:$0x1] %v3100
    %v3102 = vld [vmem:[#allocation3 + $0xe] sm:$0x1]
    %v3103 = vld [vmem:[#allocation4 + $0x80] sm:$0xff]
    %v3104 = vld [vmem:[#allocation4 + $0x88] sm:$0xff]
    %v3105 = vld [vmem:[#allocation4 + $0x90] sm:$0xff]
    %v3106 = vld [vmem:[#allocation4 + $0x98] sm:$0xff]
    %v3107 = vld [vmem:[#allocation4 + $0xa0] sm:$0xff]
    %v3108 = vld [vmem:[#allocation4 + $0xa8] sm:$0xff]
    %v3109 = vld [vmem:[#allocation4 + $0xb0] sm:$0xff]
    %v3110 = vld [vmem:[#allocation4 + $0xb8] sm:$0xff]
    %v3111 = vld [vmem:[#allocation4 + $0xc0] sm:$0xff]
    %v3112 = vld [vmem:[#allocation4 + $0xc8] sm:$0xff]
    %v3113 = vld [vmem:[#allocation4 + $0xd0] sm:$0xff]
    %v3114 = vld [vmem:[#allocation4 + $0xd8] sm:$0xff]
    %v3115 = vld [vmem:[#allocation4 + $0xe0] sm:$0xff]
    %v3116 = vld [vmem:[#allocation4 + $0xe8] sm:$0xff]
    %v3117 = vld [vmem:[#allocation4 + $0xf0] sm:$0xff]
    %v3118 = vld [vmem:[#allocation4 + $0xf8] sm:$0xff]
    %3119 = vmatprep.subr.mxu0 0.0
    %3120 = vmatpush1.msra.mxu0 %v3103
    %3121 = vmatprep.subr.mxu0 0.0
    %3122 = vmatpush1.msra.mxu0 %v3104
    %3123 = vmatprep.subr.mxu0 0.0
    %3124 = vmatpush1.msra.mxu0 %v3105
    %3125 = vmatprep.subr.mxu0 0.0
    %3126 = vmatpush1.msra.mxu0 %v3106
    %3127 = vmatprep.subr.mxu0 0.0
    %3128 = vmatpush1.msra.mxu0 %v3107
    %3129 = vmatprep.subr.mxu0 0.0
    %3130 = vmatpush1.msra.mxu0 %v3108
    %3131 = vmatprep.subr.mxu0 0.0
    %3132 = vmatpush1.msra.mxu0 %v3109
    %3133 = vmatprep.subr.mxu0 0.0
    %3134 = vmatpush1.msra.mxu0 %v3110
    %3135 = vmatprep.subr.mxu0 0.0
    %3136 = vmatpush1.msra.mxu0 %v3111
    %3137 = vmatprep.subr.mxu0 0.0
    %3138 = vmatpush1.msra.mxu0 %v3112
    %3139 = vmatprep.subr.mxu0 0.0
    %3140 = vmatpush1.msra.mxu0 %v3113
    %3141 = vmatprep.subr.mxu0 0.0
    %3142 = vmatpush1.msra.mxu0 %v3114
    %3143 = vmatprep.subr.mxu0 0.0
    %3144 = vmatpush1.msra.mxu0 %v3115
    %3145 = vmatprep.subr.mxu0 0.0
    %3146 = vmatpush1.msra.mxu0 %v3116
    %3147 = vmatprep.subr.mxu0 0.0
    %3148 = vmatpush1.msra.mxu0 %v3117
    %3149 = vmatprep.subr.mxu0 0.0
    %3150 = vmatpush1.msra.mxu0 %v3118
    %3151 = vmatprep.subr.mxu0 0.0
    %3152 = vmatpush1.msra.mxu0 0.0
    %3153 = vmatprep.subr.mxu0 0.0
    %3154 = vmatpush1.msra.mxu0 0.0
    %3155 = vmatprep.subr.mxu0 0.0
    %3156 = vmatpush1.msra.mxu0 0.0
    %3157 = vmatprep.subr.mxu0 0.0
    %3158 = vmatpush1.msra.mxu0 0.0
    %3159 = vmatprep.subr.mxu0 0.0
    %3160 = vmatpush1.msra.mxu0 0.0
    %3161 = vmatprep.subr.mxu0 0.0
    %3162 = vmatpush1.msra.mxu0 0.0
    %3163 = vmatprep.subr.mxu0 0.0
    %3164 = vmatpush1.msra.mxu0 0.0
    %3165 = vmatprep.subr.mxu0 0.0
    %3166 = vmatpush1.msra.mxu0 0.0
    %3167 = vmatprep.subr.mxu0 0.0
    %3168 = vmatpush1.msra.mxu0 0.0
    %3169 = vmatprep.subr.mxu0 0.0
    %3170 = vmatpush1.msra.mxu0 0.0
    %3171 = vmatprep.subr.mxu0 0.0
    %3172 = vmatpush1.msra.mxu0 0.0
    %3173 = vmatprep.subr.mxu0 0.0
    %3174 = vmatpush1.msra.mxu0 0.0
    %3175 = vmatprep.subr.mxu0 0.0
    %3176 = vmatpush1.msra.mxu0 0.0
    %3177 = vmatprep.subr.mxu0 0.0
    %3178 = vmatpush1.msra.mxu0 0.0
    %3179 = vmatprep.subr.mxu0 0.0
    %3180 = vmatpush1.msra.mxu0 0.0
    %3181 = vmatprep.subr.mxu0 0.0
    %3182 = vmatpush1.msra.mxu0 0.0
    %3183 = vmatprep.mubr.f32.mxu0 0.0
    %3184 = vmatmul.mubr.f32.gmra.mrb[0].mxu0 %v2983
    %v3185 = vpop.f32.mrb[0].mxu0
    %v3186 = vadd.f32 0.0, %v3185
    %v3187 = vpop.f32.mrb[0].mxu0
    %3188 = vdwg.mxu0
    %v3189 = vadd.f32 %v3102, %v3186
    %v3190 = vtanh.pop %v3189
    %v3191 = vmul.f32 %v40, %v3190
    %v3192 = vadd.f32 %v3191, %v41
    %3193 = vrot.lane.b32.xlu0 %v3192, 96
    %v3194 = vpop.permute.xlu0 %3193
    %3195 = vrot.lane.b32.xlu0 %v3192, 64
    %v3196 = vpop.permute.xlu0 %3195
    %3197 = vrot.lane.b32.xlu0 %v3192, 32
    %v3198 = vpop.permute.xlu0 %3197
    %v3199 = vmul.f32 %v3194, %v2981
    %v3200 = vmul.f32 %v3192, %v3196
    %v3201 = vadd.f32 %v3199, %v3200
    %v3202 = vtanh.pop %v3201
    %v3203 = vmul.f32 %v3198, %v3202
    %v3204 = vld [vmem:[%s342] sm:$0xff]
    %v3205 = vld [vmem:[%s342 + $0x8] sm:$0xff]
    %v3206 = vld [vmem:[%s342 + $0x10] sm:$0xff]
    %v3207 = vld [vmem:[%s342 + $0x18] sm:$0xff]
    %v3208 = vld [vmem:[%s342 + $0x20] sm:$0xff]
    %v3209 = vld [vmem:[%s342 + $0x28] sm:$0xff]
    %v3210 = vld [vmem:[%s342 + $0x30] sm:$0xff]
    %v3211 = vld [vmem:[%s342 + $0x38] sm:$0xff]
    %v3212 = vld [vmem:[%s342 + $0x40] sm:$0xff]
    %v3213 = vld [vmem:[%s342 + $0x48] sm:$0xff]
    %v3214 = vld [vmem:[%s342 + $0x50] sm:$0xff]
    %v3215 = vld [vmem:[%s342 + $0x58] sm:$0xff]
    %v3216 = vld [vmem:[%s342 + $0x60] sm:$0xff]
    %v3217 = vld [vmem:[%s342 + $0x68] sm:$0xff]
    %v3218 = vld [vmem:[%s342 + $0x70] sm:$0xff]
    %v3219 = vld [vmem:[%s342 + $0x78] sm:$0xff]
    %v3220 = vld [vmem:[%s342 + $0x80] sm:$0xff]
    %v3221 = vld [vmem:[%s342 + $0x88] sm:$0xff]
    %v3222 = vld [vmem:[%s342 + $0x90] sm:$0xff]
    %v3223 = vld [vmem:[%s342 + $0x98] sm:$0xff]
    %v3224 = vld [vmem:[%s342 + $0xa0] sm:$0xff]
    %v3225 = vld [vmem:[%s342 + $0xa8] sm:$0xff]
    %v3226 = vld [vmem:[%s342 + $0xb0] sm:$0xff]
    %v3227 = vld [vmem:[%s342 + $0xb8] sm:$0xff]
    %v3228 = vld [vmem:[%s342 + $0xc0] sm:$0xff]
    %v3229 = vld [vmem:[%s342 + $0xc8] sm:$0xff]
    %v3230 = vld [vmem:[%s342 + $0xd0] sm:$0xff]
    %v3231 = vld [vmem:[%s342 + $0xd8] sm:$0xff]
    %v3232 = vld [vmem:[%s342 + $0xe0] sm:$0xff]
    %v3233 = vld [vmem:[%s342 + $0xe8] sm:$0xff]
    %v3234 = vld [vmem:[%s342 + $0xf0] sm:$0xff]
    %v3235 = vld [vmem:[%s342 + $0xf8] sm:$0xff]
    %v3236 = vld [vmem:[%s375] sm:$0x1]
    %3237 = vmatprep.subr.mxu0 0.0
    %3238 = vmatpush1.msra.mxu0 %v3204
    %3239 = vmatprep.subr.mxu0 0.0
    %3240 = vmatpush1.msra.mxu0 %v3205
    %3241 = vmatprep.subr.mxu0 0.0
    %3242 = vmatpush1.msra.mxu0 %v3206
    %3243 = vmatprep.subr.mxu0 0.0
    %3244 = vmatpush1.msra.mxu0 %v3207
    %3245 = vmatprep.subr.mxu0 0.0
    %3246 = vmatpush1.msra.mxu0 %v3208
    %3247 = vmatprep.subr.mxu0 0.0
    %3248 = vmatpush1.msra.mxu0 %v3209
    %3249 = vmatprep.subr.mxu0 0.0
    %3250 = vmatpush1.msra.mxu0 %v3210
    %3251 = vmatprep.subr.mxu0 0.0
    %3252 = vmatpush1.msra.mxu0 %v3211
    %3253 = vmatprep.subr.mxu0 0.0
    %3254 = vmatpush1.msra.mxu0 %v3212
    %3255 = vmatprep.subr.mxu0 0.0
    %3256 = vmatpush1.msra.mxu0 %v3213
    %3257 = vmatprep.subr.mxu0 0.0
    %3258 = vmatpush1.msra.mxu0 %v3214
    %3259 = vmatprep.subr.mxu0 0.0
    %3260 = vmatpush1.msra.mxu0 %v3215
    %3261 = vmatprep.subr.mxu0 0.0
    %3262 = vmatpush1.msra.mxu0 %v3216
    %3263 = vmatprep.subr.mxu0 0.0
    %3264 = vmatpush1.msra.mxu0 %v3217
    %3265 = vmatprep.subr.mxu0 0.0
    %3266 = vmatpush1.msra.mxu0 %v3218
    %3267 = vmatprep.subr.mxu0 0.0
    %3268 = vmatpush1.msra.mxu0 %v3219
    %3269 = vmatprep.subr.mxu0 0.0
    %3270 = vmatpush1.msra.mxu0 %v3220
    %3271 = vmatprep.subr.mxu0 0.0
    %3272 = vmatpush1.msra.mxu0 %v3221
    %3273 = vmatprep.subr.mxu0 0.0
    %3274 = vmatpush1.msra.mxu0 %v3222
    %3275 = vmatprep.subr.mxu0 0.0
    %3276 = vmatpush1.msra.mxu0 %v3223
    %3277 = vmatprep.subr.mxu0 0.0
    %3278 = vmatpush1.msra.mxu0 %v3224
    %3279 = vmatprep.subr.mxu0 0.0
    %3280 = vmatpush1.msra.mxu0 %v3225
    %3281 = vmatprep.subr.mxu0 0.0
    %3282 = vmatpush1.msra.mxu0 %v3226
    %3283 = vmatprep.subr.mxu0 0.0
    %3284 = vmatpush1.msra.mxu0 %v3227
    %3285 = vmatprep.subr.mxu0 0.0
    %3286 = vmatpush1.msra.mxu0 %v3228
    %3287 = vmatprep.subr.mxu0 0.0
    %3288 = vmatpush1.msra.mxu0 %v3229
    %3289 = vmatprep.subr.mxu0 0.0
    %3290 = vmatpush1.msra.mxu0 %v3230
    %3291 = vmatprep.subr.mxu0 0.0
    %3292 = vmatpush1.msra.mxu0 %v3231
    %3293 = vmatprep.subr.mxu0 0.0
    %3294 = vmatpush1.msra.mxu0 %v3232
    %3295 = vmatprep.subr.mxu0 0.0
    %3296 = vmatpush1.msra.mxu0 %v3233
    %3297 = vmatprep.subr.mxu0 0.0
    %3298 = vmatpush1.msra.mxu0 %v3234
    %3299 = vmatprep.subr.mxu0 0.0
    %3300 = vmatpush1.msra.mxu0 %v3235
    %3301 = vmatprep.mubr.f32.mxu0 %v3100
    %3302 = vmatmul.mubr.f32.gmra.mrb[0].mxu0 %v2983
    %v3303 = vpop.f32.mrb[0].mxu0
    %v3304 = vadd.f32 %v3236, %v3303
    %v3305 = vpop.f32.mrb[0].mxu0
    %3306 = vdwg.mxu0
    %v3307 = vtanh.pop %v3304
    %v3308 = vmul.f32 %v40, %v3307
    %v3309 = vadd.f32 %v3308, %v41
    %3310 = vrot.lane.b32.xlu0 %v3309, 96
    %v3311 = vpop.permute.xlu0 %3310
    %3312 = vrot.lane.b32.xlu0 %v3309, 64
    %v3313 = vpop.permute.xlu0 %3312
    %3314 = vrot.lane.b32.xlu0 %v3309, 32
    %v3315 = vpop.permute.xlu0 %3314
    %v3316 = vmul.f32 %v3311, %v3098
    %v3317 = vmul.f32 %v3309, %v3313
    %v3318 = vadd.f32 %v3316, %v3317
    %v3319 = vtanh.pop %v3318
    %v3320 = vmul.f32 %v3315, %v3319
    %3321 = vst [vmem:[#allocation2 + $0xd] sm:$0x1] %v3320
    %v3322 = vld [vmem:[#allocation3 + $0xf] sm:$0x1]
    %v3323 = vld [vmem:[#allocation4 + $0x80] sm:$0xff]
    %v3324 = vld [vmem:[#allocation4 + $0x88] sm:$0xff]
    %v3325 = vld [vmem:[#allocation4 + $0x90] sm:$0xff]
    %v3326 = vld [vmem:[#allocation4 + $0x98] sm:$0xff]
    %v3327 = vld [vmem:[#allocation4 + $0xa0] sm:$0xff]
    %v3328 = vld [vmem:[#allocation4 + $0xa8] sm:$0xff]
    %v3329 = vld [vmem:[#allocation4 + $0xb0] sm:$0xff]
    %v3330 = vld [vmem:[#allocation4 + $0xb8] sm:$0xff]
    %v3331 = vld [vmem:[#allocation4 + $0xc0] sm:$0xff]
    %v3332 = vld [vmem:[#allocation4 + $0xc8] sm:$0xff]
    %v3333 = vld [vmem:[#allocation4 + $0xd0] sm:$0xff]
    %v3334 = vld [vmem:[#allocation4 + $0xd8] sm:$0xff]
    %v3335 = vld [vmem:[#allocation4 + $0xe0] sm:$0xff]
    %v3336 = vld [vmem:[#allocation4 + $0xe8] sm:$0xff]
    %v3337 = vld [vmem:[#allocation4 + $0xf0] sm:$0xff]
    %v3338 = vld [vmem:[#allocation4 + $0xf8] sm:$0xff]
    %3339 = vmatprep.subr.mxu0 0.0
    %3340 = vmatpush1.msra.mxu0 %v3323
    %3341 = vmatprep.subr.mxu0 0.0
    %3342 = vmatpush1.msra.mxu0 %v3324
    %3343 = vmatprep.subr.mxu0 0.0
    %3344 = vmatpush1.msra.mxu0 %v3325
    %3345 = vmatprep.subr.mxu0 0.0
    %3346 = vmatpush1.msra.mxu0 %v3326
    %3347 = vmatprep.subr.mxu0 0.0
    %3348 = vmatpush1.msra.mxu0 %v3327
    %3349 = vmatprep.subr.mxu0 0.0
    %3350 = vmatpush1.msra.mxu0 %v3328
    %3351 = vmatprep.subr.mxu0 0.0
    %3352 = vmatpush1.msra.mxu0 %v3329
    %3353 = vmatprep.subr.mxu0 0.0
    %3354 = vmatpush1.msra.mxu0 %v3330
    %3355 = vmatprep.subr.mxu0 0.0
    %3356 = vmatpush1.msra.mxu0 %v3331
    %3357 = vmatprep.subr.mxu0 0.0
    %3358 = vmatpush1.msra.mxu0 %v3332
    %3359 = vmatprep.subr.mxu0 0.0
    %3360 = vmatpush1.msra.mxu0 %v3333
    %3361 = vmatprep.subr.mxu0 0.0
    %3362 = vmatpush1.msra.mxu0 %v3334
    %3363 = vmatprep.subr.mxu0 0.0
    %3364 = vmatpush1.msra.mxu0 %v3335
    %3365 = vmatprep.subr.mxu0 0.0
    %3366 = vmatpush1.msra.mxu0 %v3336
    %3367 = vmatprep.subr.mxu0 0.0
    %3368 = vmatpush1.msra.mxu0 %v3337
    %3369 = vmatprep.subr.mxu0 0.0
    %3370 = vmatpush1.msra.mxu0 %v3338
    %3371 = vmatprep.subr.mxu0 0.0
    %3372 = vmatpush1.msra.mxu0 0.0
    %3373 = vmatprep.subr.mxu0 0.0
    %3374 = vmatpush1.msra.mxu0 0.0
    %3375 = vmatprep.subr.mxu0 0.0
    %3376 = vmatpush1.msra.mxu0 0.0
    %3377 = vmatprep.subr.mxu0 0.0
    %3378 = vmatpush1.msra.mxu0 0.0
    %3379 = vmatprep.subr.mxu0 0.0
    %3380 = vmatpush1.msra.mxu0 0.0
    %3381 = vmatprep.subr.mxu0 0.0
    %3382 = vmatpush1.msra.mxu0 0.0
    %3383 = vmatprep.subr.mxu0 0.0
    %3384 = vmatpush1.msra.mxu0 0.0
    %3385 = vmatprep.subr.mxu0 0.0
    %3386 = vmatpush1.msra.mxu0 0.0
    %3387 = vmatprep.subr.mxu0 0.0
    %3388 = vmatpush1.msra.mxu0 0.0
    %3389 = vmatprep.subr.mxu0 0.0
    %3390 = vmatpush1.msra.mxu0 0.0
    %3391 = vmatprep.subr.mxu0 0.0
    %3392 = vmatpush1.msra.mxu0 0.0
    %3393 = vmatprep.subr.mxu0 0.0
    %3394 = vmatpush1.msra.mxu0 0.0
    %3395 = vmatprep.subr.mxu0 0.0
    %3396 = vmatpush1.msra.mxu0 0.0
    %3397 = vmatprep.subr.mxu0 0.0
    %3398 = vmatpush1.msra.mxu0 0.0
    %3399 = vmatprep.subr.mxu0 0.0
    %3400 = vmatpush1.msra.mxu0 0.0
    %3401 = vmatprep.subr.mxu0 0.0
    %3402 = vmatpush1.msra.mxu0 0.0
    %3403 = vmatprep.mubr.f32.mxu0 0.0
    %3404 = vmatmul.mubr.f32.gmra.mrb[0].mxu0 %v3203
    %v3405 = vpop.f32.mrb[0].mxu0
    %v3406 = vadd.f32 0.0, %v3405
    %v3407 = vpop.f32.mrb[0].mxu0
    %3408 = vdwg.mxu0
    %v3409 = vadd.f32 %v3322, %v3406
    %v3410 = vtanh.pop %v3409
    %v3411 = vmul.f32 %v40, %v3410
    %v3412 = vadd.f32 %v3411, %v41
    %3413 = vrot.lane.b32.xlu0 %v3412, 96
    %v3414 = vpop.permute.xlu0 %3413
    %3415 = vrot.lane.b32.xlu0 %v3412, 64
    %v3416 = vpop.permute.xlu0 %3415
    %3417 = vrot.lane.b32.xlu0 %v3412, 32
    %v3418 = vpop.permute.xlu0 %3417
    %v3419 = vmul.f32 %v3414, %v3201
    %v3420 = vmul.f32 %v3412, %v3416
    %v3421 = vadd.f32 %v3419, %v3420
    %v3422 = vtanh.pop %v3421
    %v3423 = vmul.f32 %v3418, %v3422
    %v3424 = vld [vmem:[%s342] sm:$0xff]
    %v3425 = vld [vmem:[%s342 + $0x8] sm:$0xff]
    %v3426 = vld [vmem:[%s342 + $0x10] sm:$0xff]
    %v3427 = vld [vmem:[%s342 + $0x18] sm:$0xff]
    %v3428 = vld [vmem:[%s342 + $0x20] sm:$0xff]
    %v3429 = vld [vmem:[%s342 + $0x28] sm:$0xff]
    %v3430 = vld [vmem:[%s342 + $0x30] sm:$0xff]
    %v3431 = vld [vmem:[%s342 + $0x38] sm:$0xff]
    %v3432 = vld [vmem:[%s342 + $0x40] sm:$0xff]
    %v3433 = vld [vmem:[%s342 + $0x48] sm:$0xff]
    %v3434 = vld [vmem:[%s342 + $0x50] sm:$0xff]
    %v3435 = vld [vmem:[%s342 + $0x58] sm:$0xff]
    %v3436 = vld [vmem:[%s342 + $0x60] sm:$0xff]
    %v3437 = vld [vmem:[%s342 + $0x68] sm:$0xff]
    %v3438 = vld [vmem:[%s342 + $0x70] sm:$0xff]
    %v3439 = vld [vmem:[%s342 + $0x78] sm:$0xff]
    %v3440 = vld [vmem:[%s342 + $0x80] sm:$0xff]
    %v3441 = vld [vmem:[%s342 + $0x88] sm:$0xff]
    %v3442 = vld [vmem:[%s342 + $0x90] sm:$0xff]
    %v3443 = vld [vmem:[%s342 + $0x98] sm:$0xff]
    %v3444 = vld [vmem:[%s342 + $0xa0] sm:$0xff]
    %v3445 = vld [vmem:[%s342 + $0xa8] sm:$0xff]
    %v3446 = vld [vmem:[%s342 + $0xb0] sm:$0xff]
    %v3447 = vld [vmem:[%s342 + $0xb8] sm:$0xff]
    %v3448 = vld [vmem:[%s342 + $0xc0] sm:$0xff]
    %v3449 = vld [vmem:[%s342 + $0xc8] sm:$0xff]
    %v3450 = vld [vmem:[%s342 + $0xd0] sm:$0xff]
    %v3451 = vld [vmem:[%s342 + $0xd8] sm:$0xff]
    %v3452 = vld [vmem:[%s342 + $0xe0] sm:$0xff]
    %v3453 = vld [vmem:[%s342 + $0xe8] sm:$0xff]
    %v3454 = vld [vmem:[%s342 + $0xf0] sm:$0xff]
    %v3455 = vld [vmem:[%s342 + $0xf8] sm:$0xff]
    %v3456 = vld [vmem:[%s375] sm:$0x1]
    %3457 = vmatprep.subr.mxu0 0.0
    %3458 = vmatpush1.msra.mxu0 %v3424
    %3459 = vmatprep.subr.mxu0 0.0
    %3460 = vmatpush1.msra.mxu0 %v3425
    %3461 = vmatprep.subr.mxu0 0.0
    %3462 = vmatpush1.msra.mxu0 %v3426
    %3463 = vmatprep.subr.mxu0 0.0
    %3464 = vmatpush1.msra.mxu0 %v3427
    %3465 = vmatprep.subr.mxu0 0.0
    %3466 = vmatpush1.msra.mxu0 %v3428
    %3467 = vmatprep.subr.mxu0 0.0
    %3468 = vmatpush1.msra.mxu0 %v3429
    %3469 = vmatprep.subr.mxu0 0.0
    %3470 = vmatpush1.msra.mxu0 %v3430
    %3471 = vmatprep.subr.mxu0 0.0
    %3472 = vmatpush1.msra.mxu0 %v3431
    %3473 = vmatprep.subr.mxu0 0.0
    %3474 = vmatpush1.msra.mxu0 %v3432
    %3475 = vmatprep.subr.mxu0 0.0
    %3476 = vmatpush1.msra.mxu0 %v3433
    %3477 = vmatprep.subr.mxu0 0.0
    %3478 = vmatpush1.msra.mxu0 %v3434
    %3479 = vmatprep.subr.mxu0 0.0
    %3480 = vmatpush1.msra.mxu0 %v3435
    %3481 = vmatprep.subr.mxu0 0.0
    %3482 = vmatpush1.msra.mxu0 %v3436
    %3483 = vmatprep.subr.mxu0 0.0
    %3484 = vmatpush1.msra.mxu0 %v3437
    %3485 = vmatprep.subr.mxu0 0.0
    %3486 = vmatpush1.msra.mxu0 %v3438
    %3487 = vmatprep.subr.mxu0 0.0
    %3488 = vmatpush1.msra.mxu0 %v3439
    %3489 = vmatprep.subr.mxu0 0.0
    %3490 = vmatpush1.msra.mxu0 %v3440
    %3491 = vmatprep.subr.mxu0 0.0
    %3492 = vmatpush1.msra.mxu0 %v3441
    %3493 = vmatprep.subr.mxu0 0.0
    %3494 = vmatpush1.msra.mxu0 %v3442
    %3495 = vmatprep.subr.mxu0 0.0
    %3496 = vmatpush1.msra.mxu0 %v3443
    %3497 = vmatprep.subr.mxu0 0.0
    %3498 = vmatpush1.msra.mxu0 %v3444
    %3499 = vmatprep.subr.mxu0 0.0
    %3500 = vmatpush1.msra.mxu0 %v3445
    %3501 = vmatprep.subr.mxu0 0.0
    %3502 = vmatpush1.msra.mxu0 %v3446
    %3503 = vmatprep.subr.mxu0 0.0
    %3504 = vmatpush1.msra.mxu0 %v3447
    %3505 = vmatprep.subr.mxu0 0.0
    %3506 = vmatpush1.msra.mxu0 %v3448
    %3507 = vmatprep.subr.mxu0 0.0
    %3508 = vmatpush1.msra.mxu0 %v3449
    %3509 = vmatprep.subr.mxu0 0.0
    %3510 = vmatpush1.msra.mxu0 %v3450
    %3511 = vmatprep.subr.mxu0 0.0
    %3512 = vmatpush1.msra.mxu0 %v3451
    %3513 = vmatprep.subr.mxu0 0.0
    %3514 = vmatpush1.msra.mxu0 %v3452
    %3515 = vmatprep.subr.mxu0 0.0
    %3516 = vmatpush1.msra.mxu0 %v3453
    %3517 = vmatprep.subr.mxu0 0.0
    %3518 = vmatpush1.msra.mxu0 %v3454
    %3519 = vmatprep.subr.mxu0 0.0
    %3520 = vmatpush1.msra.mxu0 %v3455
    %3521 = vmatprep.mubr.f32.mxu0 %v3320
    %3522 = vmatmul.mubr.f32.gmra.mrb[0].mxu0 %v3203
    %v3523 = vpop.f32.mrb[0].mxu0
    %v3524 = vadd.f32 %v3456, %v3523
    %v3525 = vpop.f32.mrb[0].mxu0
    %3526 = vdwg.mxu0
    %v3527 = vtanh.pop %v3524
    %v3528 = vmul.f32 %v40, %v3527
    %v3529 = vadd.f32 %v3528, %v41
    %3530 = vrot.lane.b32.xlu0 %v3529, 96
    %v3531 = vpop.permute.xlu0 %3530
    %3532 = vrot.lane.b32.xlu0 %v3529, 64
    %v3533 = vpop.permute.xlu0 %3532
    %3534 = vrot.lane.b32.xlu0 %v3529, 32
    %v3535 = vpop.permute.xlu0 %3534
    %v3536 = vmul.f32 %v3531, %v3318
    %v3537 = vmul.f32 %v3529, %v3533
    %v3538 = vadd.f32 %v3536, %v3537
    %v3539 = vtanh.pop %v3538
    %v3540 = vmul.f32 %v3535, %v3539
    %3541 = vst [vmem:[#allocation2 + $0xe] sm:$0x1] %v3540
    %v3542 = vld [vmem:[#allocation3 + $0x10] sm:$0x1]
    %v3543 = vld [vmem:[#allocation4 + $0x80] sm:$0xff]
    %v3544 = vld [vmem:[#allocation4 + $0x88] sm:$0xff]
    %v3545 = vld [vmem:[#allocation4 + $0x90] sm:$0xff]
    %v3546 = vld [vmem:[#allocation4 + $0x98] sm:$0xff]
    %v3547 = vld [vmem:[#allocation4 + $0xa0] sm:$0xff]
    %v3548 = vld [vmem:[#allocation4 + $0xa8] sm:$0xff]
    %v3549 = vld [vmem:[#allocation4 + $0xb0] sm:$0xff]
    %v3550 = vld [vmem:[#allocation4 + $0xb8] sm:$0xff]
    %v3551 = vld [vmem:[#allocation4 + $0xc0] sm:$0xff]
    %v3552 = vld [vmem:[#allocation4 + $0xc8] sm:$0xff]
    %v3553 = vld [vmem:[#allocation4 + $0xd0] sm:$0xff]
    %v3554 = vld [vmem:[#allocation4 + $0xd8] sm:$0xff]
    %v3555 = vld [vmem:[#allocation4 + $0xe0] sm:$0xff]
    %v3556 = vld [vmem:[#allocation4 + $0xe8] sm:$0xff]
    %v3557 = vld [vmem:[#allocation4 + $0xf0] sm:$0xff]
    %v3558 = vld [vmem:[#allocation4 + $0xf8] sm:$0xff]
    %3559 = vmatprep.subr.mxu0 0.0
    %3560 = vmatpush1.msra.mxu0 %v3543
    %3561 = vmatprep.subr.mxu0 0.0
    %3562 = vmatpush1.msra.mxu0 %v3544
    %3563 = vmatprep.subr.mxu0 0.0
    %3564 = vmatpush1.msra.mxu0 %v3545
    %3565 = vmatprep.subr.mxu0 0.0
    %3566 = vmatpush1.msra.mxu0 %v3546
    %3567 = vmatprep.subr.mxu0 0.0
    %3568 = vmatpush1.msra.mxu0 %v3547
    %3569 = vmatprep.subr.mxu0 0.0
    %3570 = vmatpush1.msra.mxu0 %v3548
    %3571 = vmatprep.subr.mxu0 0.0
    %3572 = vmatpush1.msra.mxu0 %v3549
    %3573 = vmatprep.subr.mxu0 0.0
    %3574 = vmatpush1.msra.mxu0 %v3550
    %3575 = vmatprep.subr.mxu0 0.0
    %3576 = vmatpush1.msra.mxu0 %v3551
    %3577 = vmatprep.subr.mxu0 0.0
    %3578 = vmatpush1.msra.mxu0 %v3552
    %3579 = vmatprep.subr.mxu0 0.0
    %3580 = vmatpush1.msra.mxu0 %v3553
    %3581 = vmatprep.subr.mxu0 0.0
    %3582 = vmatpush1.msra.mxu0 %v3554
    %3583 = vmatprep.subr.mxu0 0.0
    %3584 = vmatpush1.msra.mxu0 %v3555
    %3585 = vmatprep.subr.mxu0 0.0
    %3586 = vmatpush1.msra.mxu0 %v3556
    %3587 = vmatprep.subr.mxu0 0.0
    %3588 = vmatpush1.msra.mxu0 %v3557
    %3589 = vmatprep.subr.mxu0 0.0
    %3590 = vmatpush1.msra.mxu0 %v3558
    %3591 = vmatprep.subr.mxu0 0.0
    %3592 = vmatpush1.msra.mxu0 0.0
    %3593 = vmatprep.subr.mxu0 0.0
    %3594 = vmatpush1.msra.mxu0 0.0
    %3595 = vmatprep.subr.mxu0 0.0
    %3596 = vmatpush1.msra.mxu0 0.0
    %3597 = vmatprep.subr.mxu0 0.0
    %3598 = vmatpush1.msra.mxu0 0.0
    %3599 = vmatprep.subr.mxu0 0.0
    %3600 = vmatpush1.msra.mxu0 0.0
    %3601 = vmatprep.subr.mxu0 0.0
    %3602 = vmatpush1.msra.mxu0 0.0
    %3603 = vmatprep.subr.mxu0 0.0
    %3604 = vmatpush1.msra.mxu0 0.0
    %3605 = vmatprep.subr.mxu0 0.0
    %3606 = vmatpush1.msra.mxu0 0.0
    %3607 = vmatprep.subr.mxu0 0.0
    %3608 = vmatpush1.msra.mxu0 0.0
    %3609 = vmatprep.subr.mxu0 0.0
    %3610 = vmatpush1.msra.mxu0 0.0
    %3611 = vmatprep.subr.mxu0 0.0
    %3612 = vmatpush1.msra.mxu0 0.0
    %3613 = vmatprep.subr.mxu0 0.0
    %3614 = vmatpush1.msra.mxu0 0.0
    %3615 = vmatprep.subr.mxu0 0.0
    %3616 = vmatpush1.msra.mxu0 0.0
    %3617 = vmatprep.subr.mxu0 0.0
    %3618 = vmatpush1.msra.mxu0 0.0
    %3619 = vmatprep.subr.mxu0 0.0
    %3620 = vmatpush1.msra.mxu0 0.0
    %3621 = vmatprep.subr.mxu0 0.0
    %3622 = vmatpush1.msra.mxu0 0.0
    %3623 = vmatprep.mubr.f32.mxu0 0.0
    %3624 = vmatmul.mubr.f32.gmra.mrb[0].mxu0 %v3423
    %v3625 = vpop.f32.mrb[0].mxu0
    %v3626 = vadd.f32 0.0, %v3625
    %v3627 = vpop.f32.mrb[0].mxu0
    %3628 = vdwg.mxu0
    %v3629 = vadd.f32 %v3542, %v3626
    %v3630 = vtanh.pop %v3629
    %v3631 = vmul.f32 %v40, %v3630
    %v3632 = vadd.f32 %v3631, %v41
    %3633 = vrot.lane.b32.xlu0 %v3632, 96
    %v3634 = vpop.permute.xlu0 %3633
    %3635 = vrot.lane.b32.xlu0 %v3632, 64
    %v3636 = vpop.permute.xlu0 %3635
    %3637 = vrot.lane.b32.xlu0 %v3632, 32
    %v3638 = vpop.permute.xlu0 %3637
    %v3639 = vmul.f32 %v3634, %v3421
    %v3640 = vmul.f32 %v3632, %v3636
    %v3641 = vadd.f32 %v3639, %v3640
    %v3642 = vtanh.pop %v3641
    %v3643 = vmul.f32 %v3638, %v3642
    %v3644 = vld [vmem:[%s342] sm:$0xff]
    %v3645 = vld [vmem:[%s342 + $0x8] sm:$0xff]
    %v3646 = vld [vmem:[%s342 + $0x10] sm:$0xff]
    %v3647 = vld [vmem:[%s342 + $0x18] sm:$0xff]
    %v3648 = vld [vmem:[%s342 + $0x20] sm:$0xff]
    %v3649 = vld [vmem:[%s342 + $0x28] sm:$0xff]
    %v3650 = vld [vmem:[%s342 + $0x30] sm:$0xff]
    %v3651 = vld [vmem:[%s342 + $0x38] sm:$0xff]
    %v3652 = vld [vmem:[%s342 + $0x40] sm:$0xff]
    %v3653 = vld [vmem:[%s342 + $0x48] sm:$0xff]
    %v3654 = vld [vmem:[%s342 + $0x50] sm:$0xff]
    %v3655 = vld [vmem:[%s342 + $0x58] sm:$0xff]
    %v3656 = vld [vmem:[%s342 + $0x60] sm:$0xff]
    %v3657 = vld [vmem:[%s342 + $0x68] sm:$0xff]
    %v3658 = vld [vmem:[%s342 + $0x70] sm:$0xff]
    %v3659 = vld [vmem:[%s342 + $0x78] sm:$0xff]
    %v3660 = vld [vmem:[%s342 + $0x80] sm:$0xff]
    %v3661 = vld [vmem:[%s342 + $0x88] sm:$0xff]
    %v3662 = vld [vmem:[%s342 + $0x90] sm:$0xff]
    %v3663 = vld [vmem:[%s342 + $0x98] sm:$0xff]
    %v3664 = vld [vmem:[%s342 + $0xa0] sm:$0xff]
    %v3665 = vld [vmem:[%s342 + $0xa8] sm:$0xff]
    %v3666 = vld [vmem:[%s342 + $0xb0] sm:$0xff]
    %v3667 = vld [vmem:[%s342 + $0xb8] sm:$0xff]
    %v3668 = vld [vmem:[%s342 + $0xc0] sm:$0xff]
    %v3669 = vld [vmem:[%s342 + $0xc8] sm:$0xff]
    %v3670 = vld [vmem:[%s342 + $0xd0] sm:$0xff]
    %v3671 = vld [vmem:[%s342 + $0xd8] sm:$0xff]
    %v3672 = vld [vmem:[%s342 + $0xe0] sm:$0xff]
    %v3673 = vld [vmem:[%s342 + $0xe8] sm:$0xff]
    %v3674 = vld [vmem:[%s342 + $0xf0] sm:$0xff]
    %v3675 = vld [vmem:[%s342 + $0xf8] sm:$0xff]
    %v3676 = vld [vmem:[%s375] sm:$0x1]
    %3677 = vmatprep.subr.mxu0 0.0
    %3678 = vmatpush1.msra.mxu0 %v3644
    %3679 = vmatprep.subr.mxu0 0.0
    %3680 = vmatpush1.msra.mxu0 %v3645
    %3681 = vmatprep.subr.mxu0 0.0
    %3682 = vmatpush1.msra.mxu0 %v3646
    %3683 = vmatprep.subr.mxu0 0.0
    %3684 = vmatpush1.msra.mxu0 %v3647
    %3685 = vmatprep.subr.mxu0 0.0
    %3686 = vmatpush1.msra.mxu0 %v3648
    %3687 = vmatprep.subr.mxu0 0.0
    %3688 = vmatpush1.msra.mxu0 %v3649
    %3689 = vmatprep.subr.mxu0 0.0
    %3690 = vmatpush1.msra.mxu0 %v3650
    %3691 = vmatprep.subr.mxu0 0.0
    %3692 = vmatpush1.msra.mxu0 %v3651
    %3693 = vmatprep.subr.mxu0 0.0
    %3694 = vmatpush1.msra.mxu0 %v3652
    %3695 = vmatprep.subr.mxu0 0.0
    %3696 = vmatpush1.msra.mxu0 %v3653
    %3697 = vmatprep.subr.mxu0 0.0
    %3698 = vmatpush1.msra.mxu0 %v3654
    %3699 = vmatprep.subr.mxu0 0.0
    %3700 = vmatpush1.msra.mxu0 %v3655
    %3701 = vmatprep.subr.mxu0 0.0
    %3702 = vmatpush1.msra.mxu0 %v3656
    %3703 = vmatprep.subr.mxu0 0.0
    %3704 = vmatpush1.msra.mxu0 %v3657
    %3705 = vmatprep.subr.mxu0 0.0
    %3706 = vmatpush1.msra.mxu0 %v3658
    %3707 = vmatprep.subr.mxu0 0.0
    %3708 = vmatpush1.msra.mxu0 %v3659
    %3709 = vmatprep.subr.mxu0 0.0
    %3710 = vmatpush1.msra.mxu0 %v3660
    %3711 = vmatprep.subr.mxu0 0.0
    %3712 = vmatpush1.msra.mxu0 %v3661
    %3713 = vmatprep.subr.mxu0 0.0
    %3714 = vmatpush1.msra.mxu0 %v3662
    %3715 = vmatprep.subr.mxu0 0.0
    %3716 = vmatpush1.msra.mxu0 %v3663
    %3717 = vmatprep.subr.mxu0 0.0
    %3718 = vmatpush1.msra.mxu0 %v3664
    %3719 = vmatprep.subr.mxu0 0.0
    %3720 = vmatpush1.msra.mxu0 %v3665
    %3721 = vmatprep.subr.mxu0 0.0
    %3722 = vmatpush1.msra.mxu0 %v3666
    %3723 = vmatprep.subr.mxu0 0.0
    %3724 = vmatpush1.msra.mxu0 %v3667
    %3725 = vmatprep.subr.mxu0 0.0
    %3726 = vmatpush1.msra.mxu0 %v3668
    %3727 = vmatprep.subr.mxu0 0.0
    %3728 = vmatpush1.msra.mxu0 %v3669
    %3729 = vmatprep.subr.mxu0 0.0
    %3730 = vmatpush1.msra.mxu0 %v3670
    %3731 = vmatprep.subr.mxu0 0.0
    %3732 = vmatpush1.msra.mxu0 %v3671
    %3733 = vmatprep.subr.mxu0 0.0
    %3734 = vmatpush1.msra.mxu0 %v3672
    %3735 = vmatprep.subr.mxu0 0.0
    %3736 = vmatpush1.msra.mxu0 %v3673
    %3737 = vmatprep.subr.mxu0 0.0
    %3738 = vmatpush1.msra.mxu0 %v3674
    %3739 = vmatprep.subr.mxu0 0.0
    %3740 = vmatpush1.msra.mxu0 %v3675
    %3741 = vmatprep.mubr.f32.mxu0 %v3540
    %3742 = vmatmul.mubr.f32.gmra.mrb[0].mxu0 %v3423
    %v3743 = vpop.f32.mrb[0].mxu0
    %v3744 = vadd.f32 %v3676, %v3743
    %v3745 = vpop.f32.mrb[0].mxu0
    %3746 = vdwg.mxu0
    %v3747 = vtanh.pop %v3744
    %v3748 = vmul.f32 %v40, %v3747
    %v3749 = vadd.f32 %v3748, %v41
    %3750 = vrot.lane.b32.xlu0 %v3749, 96
    %v3751 = vpop.permute.xlu0 %3750
    %3752 = vrot.lane.b32.xlu0 %v3749, 64
    %v3753 = vpop.permute.xlu0 %3752
    %3754 = vrot.lane.b32.xlu0 %v3749, 32
    %v3755 = vpop.permute.xlu0 %3754
    %v3756 = vmul.f32 %v3751, %v3538
    %v3757 = vmul.f32 %v3749, %v3753
    %v3758 = vadd.f32 %v3756, %v3757
    %v3759 = vtanh.pop %v3758
    %v3760 = vmul.f32 %v3755, %v3759
    %3761 = vst [vmem:[#allocation2 + $0xf] sm:$0x1] %v3760
    %v3762 = vld [vmem:[%s342] sm:$0xff]
    %v3763 = vld [vmem:[%s342 + $0x8] sm:$0xff]
    %v3764 = vld [vmem:[%s342 + $0x10] sm:$0xff]
    %v3765 = vld [vmem:[%s342 + $0x18] sm:$0xff]
    %v3766 = vld [vmem:[%s342 + $0x20] sm:$0xff]
    %v3767 = vld [vmem:[%s342 + $0x28] sm:$0xff]
    %v3768 = vld [vmem:[%s342 + $0x30] sm:$0xff]
    %v3769 = vld [vmem:[%s342 + $0x38] sm:$0xff]
    %v3770 = vld [vmem:[%s342 + $0x40] sm:$0xff]
    %v3771 = vld [vmem:[%s342 + $0x48] sm:$0xff]
    %v3772 = vld [vmem:[%s342 + $0x50] sm:$0xff]
    %v3773 = vld [vmem:[%s342 + $0x58] sm:$0xff]
    %v3774 = vld [vmem:[%s342 + $0x60] sm:$0xff]
    %v3775 = vld [vmem:[%s342 + $0x68] sm:$0xff]
    %v3776 = vld [vmem:[%s342 + $0x70] sm:$0xff]
    %v3777 = vld [vmem:[%s342 + $0x78] sm:$0xff]
    %v3778 = vld [vmem:[%s342 + $0x80] sm:$0xff]
    %v3779 = vld [vmem:[%s342 + $0x88] sm:$0xff]
    %v3780 = vld [vmem:[%s342 + $0x90] sm:$0xff]
    %v3781 = vld [vmem:[%s342 + $0x98] sm:$0xff]
    %v3782 = vld [vmem:[%s342 + $0xa0] sm:$0xff]
    %v3783 = vld [vmem:[%s342 + $0xa8] sm:$0xff]
    %v3784 = vld [vmem:[%s342 + $0xb0] sm:$0xff]
    %v3785 = vld [vmem:[%s342 + $0xb8] sm:$0xff]
    %v3786 = vld [vmem:[%s342 + $0xc0] sm:$0xff]
    %v3787 = vld [vmem:[%s342 + $0xc8] sm:$0xff]
    %v3788 = vld [vmem:[%s342 + $0xd0] sm:$0xff]
    %v3789 = vld [vmem:[%s342 + $0xd8] sm:$0xff]
    %v3790 = vld [vmem:[%s342 + $0xe0] sm:$0xff]
    %v3791 = vld [vmem:[%s342 + $0xe8] sm:$0xff]
    %v3792 = vld [vmem:[%s342 + $0xf0] sm:$0xff]
    %v3793 = vld [vmem:[%s342 + $0xf8] sm:$0xff]
    %v3794 = vld [vmem:[%s375] sm:$0x1]
    %3795 = vmatprep.subr.mxu0 0.0
    %3796 = vmatpush1.msra.mxu0 %v3762
    %3797 = vmatprep.subr.mxu0 0.0
    %3798 = vmatpush1.msra.mxu0 %v3763
    %3799 = vmatprep.subr.mxu0 0.0
    %3800 = vmatpush1.msra.mxu0 %v3764
    %3801 = vmatprep.subr.mxu0 0.0
    %3802 = vmatpush1.msra.mxu0 %v3765
    %3803 = vmatprep.subr.mxu0 0.0
    %3804 = vmatpush1.msra.mxu0 %v3766
    %3805 = vmatprep.subr.mxu0 0.0
    %3806 = vmatpush1.msra.mxu0 %v3767
    %3807 = vmatprep.subr.mxu0 0.0
    %3808 = vmatpush1.msra.mxu0 %v3768
    %3809 = vmatprep.subr.mxu0 0.0
    %3810 = vmatpush1.msra.mxu0 %v3769
    %3811 = vmatprep.subr.mxu0 0.0
    %3812 = vmatpush1.msra.mxu0 %v3770
    %3813 = vmatprep.subr.mxu0 0.0
    %3814 = vmatpush1.msra.mxu0 %v3771
    %3815 = vmatprep.subr.mxu0 0.0
    %3816 = vmatpush1.msra.mxu0 %v3772
    %3817 = vmatprep.subr.mxu0 0.0
    %3818 = vmatpush1.msra.mxu0 %v3773
    %3819 = vmatprep.subr.mxu0 0.0
    %3820 = vmatpush1.msra.mxu0 %v3774
    %3821 = vmatprep.subr.mxu0 0.0
    %3822 = vmatpush1.msra.mxu0 %v3775
    %3823 = vmatprep.subr.mxu0 0.0
    %3824 = vmatpush1.msra.mxu0 %v3776
    %3825 = vmatprep.subr.mxu0 0.0
    %3826 = vmatpush1.msra.mxu0 %v3777
    %3827 = vmatprep.subr.mxu0 0.0
    %3828 = vmatpush1.msra.mxu0 %v3778
    %3829 = vmatprep.subr.mxu0 0.0
    %3830 = vmatpush1.msra.mxu0 %v3779
    %3831 = vmatprep.subr.mxu0 0.0
    %3832 = vmatpush1.msra.mxu0 %v3780
    %3833 = vmatprep.subr.mxu0 0.0
    %3834 = vmatpush1.msra.mxu0 %v3781
    %3835 = vmatprep.subr.mxu0 0.0
    %3836 = vmatpush1.msra.mxu0 %v3782
    %3837 = vmatprep.subr.mxu0 0.0
    %3838 = vmatpush1.msra.mxu0 %v3783
    %3839 = vmatprep.subr.mxu0 0.0
    %3840 = vmatpush1.msra.mxu0 %v3784
    %3841 = vmatprep.subr.mxu0 0.0
    %3842 = vmatpush1.msra.mxu0 %v3785
    %3843 = vmatprep.subr.mxu0 0.0
    %3844 = vmatpush1.msra.mxu0 %v3786
    %3845 = vmatprep.subr.mxu0 0.0
    %3846 = vmatpush1.msra.mxu0 %v3787
    %3847 = vmatprep.subr.mxu0 0.0
    %3848 = vmatpush1.msra.mxu0 %v3788
    %3849 = vmatprep.subr.mxu0 0.0
    %3850 = vmatpush1.msra.mxu0 %v3789
    %3851 = vmatprep.subr.mxu0 0.0
    %3852 = vmatpush1.msra.mxu0 %v3790
    %3853 = vmatprep.subr.mxu0 0.0
    %3854 = vmatpush1.msra.mxu0 %v3791
    %3855 = vmatprep.subr.mxu0 0.0
    %3856 = vmatpush1.msra.mxu0 %v3792
    %3857 = vmatprep.subr.mxu0 0.0
    %3858 = vmatpush1.msra.mxu0 %v3793
    %3859 = vmatprep.mubr.f32.mxu0 %v3760
    %3860 = vmatmul.mubr.f32.gmra.mrb[0].mxu0 %v3643
    %v3861 = vpop.f32.mrb[0].mxu0
    %v3862 = vadd.f32 %v3794, %v3861
    %v3863 = vpop.f32.mrb[0].mxu0
    %3864 = vdwg.mxu0
    %v3865 = vtanh.pop %v3862
    %v3866 = vmul.f32 %v40, %v3865
    %v3867 = vadd.f32 %v3866, %v41
    %3868 = vrot.lane.b32.xlu0 %v3867, 96
    %v3869 = vpop.permute.xlu0 %3868
    %3870 = vrot.lane.b32.xlu0 %v3867, 64
    %v3871 = vpop.permute.xlu0 %3870
    %3872 = vrot.lane.b32.xlu0 %v3867, 32
    %v3873 = vpop.permute.xlu0 %3872
    %v3874 = vmul.f32 %v3869, %v3758
    %v3875 = vmul.f32 %v3867, %v3871
    %v3876 = vadd.f32 %v3874, %v3875
    %v3877 = vtanh.pop %v3876
    %v3878 = vmul.f32 %v3873, %v3877
    %3879 = vst [vmem:[#allocation2 + $0x10] sm:$0x1] %v3878
    %v3880 = vld [vmem:[#allocation2] sm:$0xff]
    %v3881 = vld [vmem:[#allocation2 + $0x8] sm:$0xff]
    %v3882 = vld [vmem:[#allocation2 + $0x10] sm:$0xff]
    %v3883 = vld [vmem:[%s3] sm:$0xff]
    %v3884 = vld [vmem:[%s3 + $0x8] sm:$0xff]
    %v3885 = vld [vmem:[%s3 + $0x10] sm:$0xff]
    %v3886 = vld [vmem:[%s3 + $0x18] sm:$0xff]
    %v3887 = vld [vmem:[%s3 + $0x20] sm:$0xff]
    %v3888 = vld [vmem:[%s3 + $0x28] sm:$0xff]
    %v3889 = vld [vmem:[%s3 + $0x30] sm:$0xff]
    %v3890 = vld [vmem:[%s3 + $0x38] sm:$0xff]
    %v3891 = vld [vmem:[%s3 + $0x40] sm:$0xff]
    %v3892 = vld [vmem:[%s3 + $0x48] sm:$0xff]
    %v3893 = vld [vmem:[%s3 + $0x50] sm:$0xff]
    %v3894 = vld [vmem:[%s3 + $0x58] sm:$0xff]
    %v3895 = vld [vmem:[%s3 + $0x60] sm:$0xff]
    %v3896 = vld [vmem:[%s3 + $0x68] sm:$0xff]
    %v3897 = vld [vmem:[%s3 + $0x70] sm:$0xff]
    %v3898 = vld [vmem:[%s3 + $0x78] sm:$0xff]
    %v3899 = vld [vmem:[%s4] sm:$0x1]
    %v3901 = vlaneseq
    %v3902 = vshrl.u32 %v3901, 7
    %v3903 = vsub.s32 0, %v3902
    %v3904 = vrot.slane %v3899, %v3903
    %3906 = vmatprep.subr.mxu0 0.0
    %3907 = vmatpush1.msra.mxu0 %v3883
    %3908 = vmatprep.subr.mxu0 0.0
    %3909 = vmatpush1.msra.mxu0 %v3884
    %3910 = vmatprep.subr.mxu0 0.0
    %3911 = vmatpush1.msra.mxu0 %v3885
    %3912 = vmatprep.subr.mxu0 0.0
    %3913 = vmatpush1.msra.mxu0 %v3886
    %3914 = vmatprep.subr.mxu0 0.0
    %3915 = vmatpush1.msra.mxu0 %v3887
    %3916 = vmatprep.subr.mxu0 0.0
    %3917 = vmatpush1.msra.mxu0 %v3888
    %3918 = vmatprep.subr.mxu0 0.0
    %3919 = vmatpush1.msra.mxu0 %v3889
    %3920 = vmatprep.subr.mxu0 0.0
    %3921 = vmatpush1.msra.mxu0 %v3890
    %3922 = vmatprep.subr.mxu0 0.0
    %3923 = vmatpush1.msra.mxu0 %v3891
    %3924 = vmatprep.subr.mxu0 0.0
    %3925 = vmatpush1.msra.mxu0 %v3892
    %3926 = vmatprep.subr.mxu0 0.0
    %3927 = vmatpush1.msra.mxu0 %v3893
    %3928 = vmatprep.subr.mxu0 0.0
    %3929 = vmatpush1.msra.mxu0 %v3894
    %3930 = vmatprep.subr.mxu0 0.0
    %3931 = vmatpush1.msra.mxu0 %v3895
    %3932 = vmatprep.subr.mxu0 0.0
    %3933 = vmatpush1.msra.mxu0 %v3896
    %3934 = vmatprep.subr.mxu0 0.0
    %3935 = vmatpush1.msra.mxu0 %v3897
    %3936 = vmatprep.subr.mxu0 0.0
    %3937 = vmatpush1.msra.mxu0 %v3898
    %3938 = vmatprep.subr.mxu0 0.0
    %3939 = vmatpush1.msra.mxu0 0.0
    %3940 = vmatprep.subr.mxu0 0.0
    %3941 = vmatpush1.msra.mxu0 0.0
    %3942 = vmatprep.subr.mxu0 0.0
    %3943 = vmatpush1.msra.mxu0 0.0
    %3944 = vmatprep.subr.mxu0 0.0
    %3945 = vmatpush1.msra.mxu0 0.0
    %3946 = vmatprep.subr.mxu0 0.0
    %3947 = vmatpush1.msra.mxu0 0.0
    %3948 = vmatprep.subr.mxu0 0.0
    %3949 = vmatpush1.msra.mxu0 0.0
    %3950 = vmatprep.subr.mxu0 0.0
    %3951 = vmatpush1.msra.mxu0 0.0
    %3952 = vmatprep.subr.mxu0 0.0
    %3953 = vmatpush1.msra.mxu0 0.0
    %3954 = vmatprep.subr.mxu0 0.0
    %3955 = vmatpush1.msra.mxu0 0.0
    %3956 = vmatprep.subr.mxu0 0.0
    %3957 = vmatpush1.msra.mxu0 0.0
    %3958 = vmatprep.subr.mxu0 0.0
    %3959 = vmatpush1.msra.mxu0 0.0
    %3960 = vmatprep.subr.mxu0 0.0
    %3961 = vmatpush1.msra.mxu0 0.0
    %3962 = vmatprep.subr.mxu0 0.0
    %3963 = vmatpush1.msra.mxu0 0.0
    %3964 = vmatprep.subr.mxu0 0.0
    %3965 = vmatpush1.msra.mxu0 0.0
    %3966 = vmatprep.subr.mxu0 0.0
    %3967 = vmatpush1.msra.mxu0 0.0
    %3968 = vmatprep.subr.mxu0 0.0
    %3969 = vmatpush1.msra.mxu0 0.0
    %3970 = vmatprep.mubr.f32.mxu0 0.0
    %3971 = vmatmul.mubr.f32.gmra.mrb[0].mxu0 %v3880
    %v3972 = vpop.f32.mrb[0].mxu0
    %v3973 = vadd.f32 %v3904, %v3972
    %v3974 = vpop.f32.mrb[0].mxu0
    %3975 = vmatprep.mubr.f32.mxu0 0.0
    %3976 = vmatmul.mubr.f32.gmra.mrb[0].mxu0 %v3881
    %v3977 = vpop.f32.mrb[0].mxu0
    %v3978 = vadd.f32 %v3904, %v3977
    %v3979 = vpop.f32.mrb[0].mxu0
    %3980 = vmatprep.mubr.f32.mxu0 0.0
    %3981 = vmatmul.mubr.f32.gmra.mrb[0].mxu0 %v3882
    %v3982 = vpop.f32.mrb[0].mxu0
    %v3983 = vadd.f32 %v3904, %v3982
    %v3984 = vpop.f32.mrb[0].mxu0
    %3985 = vdwg.mxu0
    %3986 = vst [vmem:[#allocation7] sm:$0xff] %v3973
    %3987 = vst [vmem:[#allocation7 + $0x8] sm:$0xff] %v3978
    %3988 = vst [vmem:[#allocation7 + $0x10] sm:$0xff] %v3983
    // Predicated region
    $region26: #{rnn_forward.1} parent=1 // pred_check
      _
    $region27: #{rnn_forward.1} parent=1 // pred_check_branch
      %3990 = sbr.rel (0) target = $region29
    $region28: #{rnn_forward.1} parent=1 // pred_region
      %s3992 = ssub.s32 384, 384
      %3993 = vsyncadd [#allocation6], %s3992
      %s3994 = sshll.u32 [#allocation7], 4
      %s3995 = int_to_ptr.vmem [resolvable:$true] %s3994
      %4000 = dma.vmem_to_hbm [thread:$0]  %s3995, 384, %s5, [#allocation6], 128, 128, 8
    $region29: #{rnn_forward.1} parent=1 // pred_fallthru
      _
    // Predicated region
    $region30: #{rnn_forward.1} parent=1 // pred_check
      _
    $region31: #{rnn_forward.1} parent=1 // pred_check_branch
      %4002 = sbr.rel (0) target = $region33
    $region32: #{rnn_forward.1} parent=1 // pred_region
      %4003 = dma.done [#allocation6], 384
    $region33: #{rnn_forward.1} parent=1 // pred_fallthru
      _
    %4004 = vsyncpa [#allocation5], 1
    %4005 = vsyncpa [#allocation6], 1

</llo_original>
